<compile_context>
chip_gen: v7x
topology: tpu7x:2x2x1
jax: 0.10.0
libtpu: 0.0.40
codegen_flags: <defaults>
</compile_context>

<pallas_src>
import functools

import jax
import jax.numpy as jnp
from jax import lax
from jax.experimental import pallas as pl
from jax.experimental.pallas import tpu as pltpu


# ----------------------------- Pallas kernel -------------------------------


def _lstm_fc_kernel(x_ref, h0_ref, c0_ref, wi_ref, wh_ref, b_ref, wf_ref, bf_ref,
                    out_ref, hn_ref, cn_ref,
                    xp_scr, seq_scr):
    """Full multi-layer LSTM + final FC in one grid step.

    All "hidden" dims below are the lane-padded Hp (multiple of 128); the real
    hidden values live in the first H lanes of each gate/state block and the
    padded lanes stay identically zero.

    x_ref  : (T*Bp, Hp)    embedded input, time-major, batch/feature padded
    h0/c0  : (L, Bp, Hp)   initial hidden / cell state
    wi     : (L, Hp, 4Hp)  input->gates weights (transposed, gates 128-aligned)
    wh     : (L, Hp, 4Hp)  hidden->gates weights (transposed, gates 128-aligned)
    b      : (L, 1, 4Hp)   b_ih + b_hh (gates 128-aligned)
    wf     : (Hp, Op)      fc weight (transposed, output padded to 128 lanes)
    bf     : (1, Op)       fc bias (padded)
    out    : (Bp, Op)      logits at the last time step (== output[:, -1] in torch)
    hn/cn  : (L, Bp, Hp)   final hidden / cell state
    xp_scr : (T*Bp, 4Hp)   per-layer batched input projection (all time steps)
    seq_scr: (T*Bp, Hp)    per-layer output hidden sequence (input to next layer)
    """
    L, Bp, H = h0_ref.shape      # H here is the lane-padded hidden dim (mult of 128)
    TB = x_ref.shape[0]
    T = TB // Bp

    h_last = None
    for l in range(L):  # static python loop; L is tiny
        # ---- time-batched input projection: one well-shaped MXU matmul ----
        layer_in = x_ref[...] if l == 0 else seq_scr[...]           # (T*Bp, Hp)
        xp_scr[...] = (jnp.dot(layer_in, wi_ref[l],
                               preferred_element_type=jnp.float32)
                       + b_ref[l])                                   # (T*Bp, 4Hp)

        wh_l = wh_ref[l]  # hoisted: (Hp, 4Hp) stays resident across the time loop
        # TODO(synk): drive the MXU explicitly (pltpu.matmul_push_rhs once per
        # layer + matmul_acc_lhs/matmul_pop per step) so W_hh is not re-staged
        # into the systolic array on every serial iteration.

        # ---- serial recurrence; h/c carried in registers ----
        def step(t, carry, l=l, wh_l=wh_l):
            h, c = carry
            row = pl.multiple_of(t * Bp, Bp)                         # 8-aligned
            gates = (xp_scr[pl.ds(row, Bp), :]
                     + jnp.dot(h, wh_l, preferred_element_type=jnp.float32))
            # PyTorch gate order: i, f, g, o.  Each slice is a 128-lane-aligned
            # full vreg because H is padded to a multiple of 128.
            i_g = jax.nn.sigmoid(gates[:, 0 * H:1 * H])
            f_g = jax.nn.sigmoid(gates[:, 1 * H:2 * H])
            g_g = jnp.tanh(gates[:, 2 * H:3 * H])
            o_g = jax.nn.sigmoid(gates[:, 3 * H:4 * H])
            c_new = f_g * c + i_g * g_g
            h_new = o_g * jnp.tanh(c_new)
            if l < L - 1:  # next layer needs the whole hidden sequence
                seq_scr[pl.ds(row, Bp), :] = h_new                   # lane-dense vst
            return (h_new, c_new)

        # Small fixed partial unroll: overlap across iterations without blowing
        # up vreg live ranges when T is large.
        h_f, c_f = lax.fori_loop(0, T, step, (h0_ref[l], c0_ref[l]),
                                 unroll=min(T, 8))
        hn_ref[l] = h_f
        cn_ref[l] = c_f
        h_last = h_f
        # TODO(synk): inter-layer dropout omitted (inference semantics).

    # TODO(synk): for L>=2, a layer-diagonal wavefront (compute layer l at time
    # s-l each wavefront step, stacking the L hiddens into one (L*Bp, Hp) LHS)
    # would shorten the dependent-matmul chain from L*T to T+L-1.

    # ---- final FC on the last layer's last-step hidden state ----
    out_ref[...] = (jnp.dot(h_last, wf_ref[...],
                            preferred_element_type=jnp.float32) + bf_ref[...])


def lstm_fc_forward(x2d, h0, c0, wi, wh, b, wf, bf):
    """Run the full LSTM stack over time + final FC inside one pallas_call."""
    TB, E = x2d.shape
    L, Bp, H = h0.shape
    G = wi.shape[2]          # 4 * Hp
    Op = wf.shape[1]         # padded output dim (multiple of 128)

    # TODO(synk): with grid=(1,) the default double-buffering of every input is
    # pure VMEM overhead; switch the x/weight BlockSpecs to
    # pipeline_mode=pl.Buffered(1) (or memory_space=pl.ANY + one explicit copy)
    # once weights/sequence approach the scoped VMEM limit.
    # TODO(synk): for production-scale T/H, time-chunk the per-layer input
    # projection (compute Tc*Bp rows at a time, overlapped with the recurrence)
    # so xp_scr is O(Tc) and fits v7x's 64 MiB VMEM; on v7x also shard the
    # padded batch (or pipeline layers) across the second TensorCore.
    grid_spec = pltpu.PrefetchScalarGridSpec(
        num_scalar_prefetch=0,
        grid=(1,),                                              # single step
        in_specs=[
            pl.BlockSpec((TB, E), lambda i: (0, 0)),            # x (whole seq)
            pl.BlockSpec((L, Bp, H), lambda i: (0, 0, 0)),      # h0
            pl.BlockSpec((L, Bp, H), lambda i: (0, 0, 0)),      # c0
            pl.BlockSpec((L, E, G), lambda i: (0, 0, 0)),       # wi
            pl.BlockSpec((L, H, G), lambda i: (0, 0, 0)),       # wh
            pl.BlockSpec((L, 1, G), lambda i: (0, 0, 0)),       # b
            pl.BlockSpec((H, Op), lambda i: (0, 0)),            # wf
            pl.BlockSpec((1, Op), lambda i: (0, 0)),            # bf
        ],
        out_specs=[
            pl.BlockSpec((Bp, Op), lambda i: (0, 0)),           # last-step logits
            pl.BlockSpec((L, Bp, H), lambda i: (0, 0, 0)),      # h_n
            pl.BlockSpec((L, Bp, H), lambda i: (0, 0, 0)),      # c_n
        ],
        scratch_shapes=[
            pltpu.VMEM((TB, G), jnp.float32),   # batched input projection
            pltpu.VMEM((TB, H), jnp.float32),   # per-layer hidden sequence
        ],
    )

    return pl.pallas_call(
        _lstm_fc_kernel,
        out_shape=(
            jax.ShapeDtypeStruct((Bp, Op), jnp.float32),
            jax.ShapeDtypeStruct((L, Bp, H), jnp.float32),
            jax.ShapeDtypeStruct((L, Bp, H), jnp.float32),
        ),
        grid_spec=grid_spec,
        compiler_params=pltpu.CompilerParams(
            dimension_semantics=("arbitrary",),
        ),
    )(x2d, h0, c0, wi, wh, b, wf, bf)


# ------------------------- parameter packing helpers -------------------------


def _pad_gate_cols(w, H, Hp):
    """(R, 4H) -> (R, 4Hp): place each H-wide gate block at a 128-lane boundary."""
    R = w.shape[0]
    out = jnp.zeros((R, 4 * Hp), w.dtype)
    for g in range(4):
        out = out.at[:, g * Hp:g * Hp + H].set(w[:, g * H:(g + 1) * H])
    return out


# ------------------------------ RNN wrapper ---------------------------------


class RNNPallas:
    def __init__(self, vocab_size, output_size, embedding_dim, hidden_dim,
                 n_layers, dropout=0.5, key=jax.random.PRNGKey(0)):
        assert embedding_dim == hidden_dim, \
            "weights are stacked per layer; demo uses embedding_dim == hidden_dim"
        self.vocab_size = vocab_size
        self.output_size = output_size
        self.embedding_dim = embedding_dim
        self.hidden_dim = hidden_dim
        self.n_layers = n_layers

        H = hidden_dim
        Hp = ((H + 127) // 128) * 128                 # lane-padded hidden dim
        Op = ((output_size + 127) // 128) * 128       # lane-padded FC output
        self._Hp, self._Op = Hp, Op

        ks = jax.random.split(key, 3 + 4 * n_layers)
        scale = 1.0 / jnp.sqrt(hidden_dim)

        # nn.Embedding(vocab_size, embedding_dim): weight ~ N(0, 1)
        self.embed_w = jax.random.normal(ks[0], (vocab_size, embedding_dim),
                                         jnp.float32)

        # nn.LSTM params per layer: w_ih (4H, in), w_hh (4H, H), b_ih, b_hh (4H,)
        # Unpadded copies kept for the pure-JAX reference; padded (lane-aligned
        # gate blocks, Hp rows) copies packed for the kernel.
        wi, wh, bb = [], [], []
        wi_p, wh_p, b_p = [], [], []
        for l in range(n_layers):
            k_wi, k_wh, k_bi, k_bh = ks[3 + 4 * l: 3 + 4 * (l + 1)]
            in_dim = embedding_dim if l == 0 else hidden_dim
            w_ih = jax.random.uniform(k_wi, (4 * hidden_dim, in_dim),
                                      jnp.float32, -scale, scale)
            w_hh = jax.random.uniform(k_wh, (4 * hidden_dim, hidden_dim),
                                      jnp.float32, -scale, scale)
            b_ih = jax.random.uniform(k_bi, (4 * hidden_dim,), jnp.float32,
                                      -scale, scale)
            b_hh = jax.random.uniform(k_bh, (4 * hidden_dim,), jnp.float32,
                                      -scale, scale)
            wi.append(w_ih.T)                     # (in, 4H)
            wh.append(w_hh.T)                     # (H, 4H)
            bb.append((b_ih + b_hh)[None, :])     # (1, 4H)
            wi_p.append(jnp.pad(_pad_gate_cols(w_ih.T, H, Hp),
                                ((0, Hp - in_dim), (0, 0))))     # (Hp, 4Hp)
            wh_p.append(jnp.pad(_pad_gate_cols(w_hh.T, H, Hp),
                                ((0, Hp - H), (0, 0))))          # (Hp, 4Hp)
            b_p.append(_pad_gate_cols((b_ih + b_hh)[None, :], H, Hp))  # (1, 4Hp)
        self.wi = jnp.stack(wi)                   # (L, E, 4H)   -- reference
        self.wh = jnp.stack(wh)                   # (L, H, 4H)
        self.b = jnp.stack(bb)                    # (L, 1, 4H)
        self.wi_p = jnp.stack(wi_p)               # (L, Hp, 4Hp) -- kernel
        self.wh_p = jnp.stack(wh_p)               # (L, Hp, 4Hp)
        self.b_p = jnp.stack(b_p)                 # (L, 1, 4Hp)
        # TODO(synk): cast wi_p/wh_p/wf_p (and the embedded x) to bfloat16 for the
        # MXU matmuls in production (keep preferred_element_type=f32 and gate math
        # in f32); kept f32 here so the 1e-3 self-check against the f32 reference
        # holds, and v5e has no bf16 VPU/EUP for the gate math anyway.

        # nn.Linear(hidden_dim, output_size), output dim padded to 128 lanes
        fscale = 1.0 / jnp.sqrt(hidden_dim)
        fc_w = jax.random.uniform(ks[1], (output_size, hidden_dim),
                                  jnp.float32, -fscale, fscale)
        fc_b = jax.random.uniform(ks[2], (output_size,), jnp.float32,
                                  -fscale, fscale)
        self.wf = fc_w.T                          # (H, out)   -- reference
        self.bf = fc_b[None, :]                   # (1, out)
        self.wf_p = jnp.pad(fc_w.T, ((0, Hp - H), (0, Op - output_size)))  # (Hp, Op)
        self.bf_p = jnp.pad(fc_b, (0, Op - output_size))[None, :]          # (1, Op)

    def init_hidden(self, batch_size):
        z = jnp.zeros((self.n_layers, batch_size, self.hidden_dim), jnp.float32)
        return (z, z)

    @functools.partial(jax.jit, static_argnums=0)
    def forward(self, nn_input, hidden):
        """nn_input: (B, T) int32 token ids; hidden: (h0, c0) each (L, B, H)."""
        h0, c0 = hidden
        B, T = nn_input.shape
        H, Hp = self.hidden_dim, self._Hp
        Bp = ((B + 7) // 8) * 8                              # pad batch sublanes

        emb = jnp.take(self.embed_w, nn_input, axis=0)       # (B, T, E) glue gather
        x_tbe = jnp.transpose(emb, (1, 0, 2))                # (T, B, E) time-major
        x_tbe = jnp.pad(x_tbe, ((0, 0), (0, Bp - B),
                                (0, Hp - self.embedding_dim)))
        x2d = x_tbe.reshape(T * Bp, Hp)                      # (T*Bp, Hp)

        h0p = jnp.pad(h0, ((0, 0), (0, Bp - B), (0, Hp - H)))
        c0p = jnp.pad(c0, ((0, 0), (0, Bp - B), (0, Hp - H)))

        logits_p, h_n, c_n = lstm_fc_forward(
            x2d, h0p, c0p, self.wi_p, self.wh_p, self.b_p, self.wf_p, self.bf_p)

        logits = logits_p[:B, :self.output_size]
        return logits, (h_n[:, :B, :H], c_n[:, :B, :H])      # == (output[:, -1], hidden)


# --------------------------- pure-JAX reference ------------------------------


def reference_forward(model, nn_input, hidden):
    h0, c0 = hidden
    B, T = nn_input.shape
    L, H = model.n_layers, model.hidden_dim
    emb = jnp.take(model.embed_w, nn_input, axis=0)  # (B, T, E)
    h = [h0[l] for l in range(L)]
    c = [c0[l] for l in range(L)]
    inp = None
    for t in range(T):
        inp = emb[:, t]
        for l in range(L):
            gates = inp @ model.wi[l] + h[l] @ model.wh[l] + model.b[l]
            i_g = jax.nn.sigmoid(gates[:, :H])
            f_g = jax.nn.sigmoid(gates[:, H:2 * H])
            g_g = jnp.tanh(gates[:, 2 * H:3 * H])
            o_g = jax.nn.sigmoid(gates[:, 3 * H:])
            c[l] = f_g * c[l] + i_g * g_g
            h[l] = o_g * jnp.tanh(c[l])
            inp = h[l]
    out = inp @ model.wf + model.bf
    return out, (jnp.stack(h), jnp.stack(c))


# ----------------------------------- main ------------------------------------


if __name__ == "__main__":
    vocab_size, output_size = 50, 10
    embedding_dim = hidden_dim = 32
    n_layers = 2
    B, T = 2, 8

    key = jax.random.PRNGKey(0)
    model = RNNPallas(vocab_size, output_size, embedding_dim, hidden_dim,
                      n_layers, dropout=0.5, key=key)

    nn_input = jax.random.randint(jax.random.PRNGKey(1), (B, T), 0, vocab_size,
                                  dtype=jnp.int32)
    hidden = model.init_hidden(B)

    logits, (h_n, c_n) = model.forward(nn_input, hidden)
    jax.block_until_ready((logits, h_n, c_n))

    ref_logits, (ref_h, ref_c) = reference_forward(model, nn_input, hidden)
    assert logits.shape == (B, output_size)
    assert h_n.shape == (n_layers, B, hidden_dim)
    assert c_n.shape == (n_layers, B, hidden_dim)
    assert jnp.allclose(logits, ref_logits, atol=1e-3, rtol=1e-3)
    assert jnp.allclose(h_n, ref_h, atol=1e-3, rtol=1e-3)
    assert jnp.allclose(c_n, ref_c, atol=1e-3, rtol=1e-3)

    print("KERNEL_OK")
</pallas_src>

<mosaic_0001>
module attributes {stable_mosaic.version = 11 : i64} {
  func.func @_lstm_fc_kernel(%arg0: i32, %arg1: memref<64x128xf32, #tpu.memory_space<vmem>>, %arg2: memref<2x8x128xf32, #tpu.memory_space<vmem>>, %arg3: memref<2x8x128xf32, #tpu.memory_space<vmem>>, %arg4: memref<2x128x512xf32, #tpu.memory_space<vmem>>, %arg5: memref<2x128x512xf32, #tpu.memory_space<vmem>>, %arg6: memref<2x1x512xf32, #tpu.memory_space<vmem>>, %arg7: memref<128x128xf32, #tpu.memory_space<vmem>>, %arg8: memref<1x128xf32, #tpu.memory_space<vmem>>, %arg9: memref<8x128xf32, #tpu.memory_space<vmem>>, %arg10: memref<2x8x128xf32, #tpu.memory_space<vmem>>, %arg11: memref<2x8x128xf32, #tpu.memory_space<vmem>>, %arg12: memref<64x512xf32, #tpu.memory_space<vmem>>, %arg13: memref<64x128xf32, #tpu.memory_space<vmem>>) attributes {dimension_semantics = [#tpu.dimension_semantics<arbitrary>], iteration_bounds = array<i64: 1>, scalar_prefetch = 0 : i64, scratch_operands = 2 : i64, tpu.core_type = #tpu.core_type<tc>, window_params = [{pipeline_mode = #tpu.pipeline_mode<synchronous>, transform_indices = @transform_0, window_bounds = array<i64: 64, 128>}, {pipeline_mode = #tpu.pipeline_mode<synchronous>, transform_indices = @transform_1, window_bounds = array<i64: 2, 8, 128>}, {pipeline_mode = #tpu.pipeline_mode<synchronous>, transform_indices = @transform_2, window_bounds = array<i64: 2, 8, 128>}, {pipeline_mode = #tpu.pipeline_mode<synchronous>, transform_indices = @transform_3, window_bounds = array<i64: 2, 128, 512>}, {pipeline_mode = #tpu.pipeline_mode<synchronous>, transform_indices = @transform_4, window_bounds = array<i64: 2, 128, 512>}, {pipeline_mode = #tpu.pipeline_mode<synchronous>, transform_indices = @transform_5, window_bounds = array<i64: 2, 1, 512>}, {pipeline_mode = #tpu.pipeline_mode<synchronous>, transform_indices = @transform_6, window_bounds = array<i64: 128, 128>}, {pipeline_mode = #tpu.pipeline_mode<synchronous>, transform_indices = @transform_7, window_bounds = array<i64: 1, 128>}, {pipeline_mode = #tpu.pipeline_mode<synchronous>, transform_indices = @transform_8, window_bounds = array<i64: 8, 128>}, {pipeline_mode = #tpu.pipeline_mode<synchronous>, transform_indices = @transform_9, window_bounds = array<i64: 2, 8, 128>}, {pipeline_mode = #tpu.pipeline_mode<synchronous>, transform_indices = @transform_10, window_bounds = array<i64: 2, 8, 128>}]} {
    %c0 = arith.constant 0 : index
    %c0_0 = arith.constant 0 : index
    %0 = vector.load %arg1[%c0, %c0_0] : memref<64x128xf32, #tpu.memory_space<vmem>>, vector<64x128xf32>
    %c0_1 = arith.constant 0 : index
    %c0_2 = arith.constant 0 : index
    %c0_3 = arith.constant 0 : index
    %1 = vector.load %arg4[%c0_1, %c0_2, %c0_3] : memref<2x128x512xf32, #tpu.memory_space<vmem>>, vector<1x128x512xf32>
    %2 = vector.shape_cast %1 : vector<1x128x512xf32> to vector<128x512xf32>
    %cst = arith.constant dense<0.000000e+00> : vector<64x512xf32>
    %3 = tpu.matmul %0, %2, %cst {dimension_numbers = #tpu.dot_dimension_numbers<[1], [0], [0], [1], [0, 0, 1, 1], [], []>} : vector<64x128xf32>, vector<128x512xf32>, vector<64x512xf32> -> vector<64x512xf32>
    %c0_4 = arith.constant 0 : index
    %c0_5 = arith.constant 0 : index
    %c0_6 = arith.constant 0 : index
    %4 = vector.load %arg6[%c0_4, %c0_5, %c0_6] : memref<2x1x512xf32, #tpu.memory_space<vmem>>, vector<1x1x512xf32>
    %5 = vector.shape_cast %4 : vector<1x1x512xf32> to vector<1x512xf32>
    %6 = vector.broadcast %5 : vector<1x512xf32> to vector<64x512xf32>
    %7 = arith.addf %3, %6 : vector<64x512xf32>
    %c0_7 = arith.constant 0 : index
    %c0_8 = arith.constant 0 : index
    %8 = vector.load %arg12[%c0_7, %c0_8] : memref<64x512xf32, #tpu.memory_space<vmem>>, vector<64x512xf32>
    tpu.vector_store %arg12[%c0_7, %c0_8], %7 {strides = array<i32>} : memref<64x512xf32, #tpu.memory_space<vmem>>, vector<64x512xf32>,
    %c0_9 = arith.constant 0 : index
    %c0_10 = arith.constant 0 : index
    %c0_11 = arith.constant 0 : index
    %9 = vector.load %arg5[%c0_9, %c0_10, %c0_11] : memref<2x128x512xf32, #tpu.memory_space<vmem>>, vector<1x128x512xf32>
    %10 = vector.shape_cast %9 : vector<1x128x512xf32> to vector<128x512xf32>
    %c0_12 = arith.constant 0 : index
    %c0_13 = arith.constant 0 : index
    %c0_14 = arith.constant 0 : index
    %11 = vector.load %arg2[%c0_12, %c0_13, %c0_14] : memref<2x8x128xf32, #tpu.memory_space<vmem>>, vector<1x8x128xf32>
    %12 = vector.shape_cast %11 : vector<1x8x128xf32> to vector<8x128xf32>
    %c0_15 = arith.constant 0 : index
    %c0_16 = arith.constant 0 : index
    %c0_17 = arith.constant 0 : index
    %13 = vector.load %arg3[%c0_15, %c0_16, %c0_17] : memref<2x8x128xf32, #tpu.memory_space<vmem>>, vector<1x8x128xf32>
    %14 = vector.shape_cast %13 : vector<1x8x128xf32> to vector<8x128xf32>
    %c0_i32 = arith.constant 0 : i32
    %c8_i32 = arith.constant 8 : i32
    %15 = arith.muli %c0_i32, %c8_i32 : i32
    %16 = tpu.assume_multiple %15, 8 : i32
    %17 = arith.index_cast %16 : i32 to index
    %c0_18 = arith.constant 0 : index
    %18 = vector.load %arg12[%17, %c0_18] : memref<64x512xf32, #tpu.memory_space<vmem>>, vector<8x512xf32>
    %cst_19 = arith.constant dense<0.000000e+00> : vector<8x512xf32>
    %19 = tpu.matmul %12, %10, %cst_19 {dimension_numbers = #tpu.dot_dimension_numbers<[1], [0], [0], [1], [0, 0, 1, 1], [], []>} : vector<8x128xf32>, vector<128x512xf32>, vector<8x512xf32> -> vector<8x512xf32>
    %20 = arith.addf %18, %19 : vector<8x512xf32>
    %21 = vector.extract_strided_slice %20 {offsets = [0, 0], sizes = [8, 128], strides = [1, 1]} : vector<8x512xf32> to vector<8x128xf32>
    %22 = arith.negf %21 : vector<8x128xf32>
    %23 = math.exp %22 : vector<8x128xf32>
    %cst_20 = arith.constant 1.000000e+00 : f32
    %24 = vector.broadcast %cst_20 : f32 to vector<8x128xf32>
    %25 = arith.addf %24, %23 : vector<8x128xf32>
    %26 = arith.divf %24, %25 : vector<8x128xf32>
    %27 = vector.extract_strided_slice %20 {offsets = [0, 128], sizes = [8, 128], strides = [1, 1]} : vector<8x512xf32> to vector<8x128xf32>
    %28 = arith.negf %27 : vector<8x128xf32>
    %29 = math.exp %28 : vector<8x128xf32>
    %cst_21 = arith.constant 1.000000e+00 : f32
    %30 = vector.broadcast %cst_21 : f32 to vector<8x128xf32>
    %31 = arith.addf %30, %29 : vector<8x128xf32>
    %32 = arith.divf %30, %31 : vector<8x128xf32>
    %33 = vector.extract_strided_slice %20 {offsets = [0, 256], sizes = [8, 128], strides = [1, 1]} : vector<8x512xf32> to vector<8x128xf32>
    %34 = math.tanh %33 : vector<8x128xf32>
    %35 = vector.extract_strided_slice %20 {offsets = [0, 384], sizes = [8, 128], strides = [1, 1]} : vector<8x512xf32> to vector<8x128xf32>
    %36 = arith.negf %35 : vector<8x128xf32>
    %37 = math.exp %36 : vector<8x128xf32>
    %cst_22 = arith.constant 1.000000e+00 : f32
    %38 = vector.broadcast %cst_22 : f32 to vector<8x128xf32>
    %39 = arith.addf %38, %37 : vector<8x128xf32>
    %40 = arith.divf %38, %39 : vector<8x128xf32>
    %41 = arith.mulf %32, %14 : vector<8x128xf32>
    %42 = arith.mulf %26, %34 : vector<8x128xf32>
    %43 = arith.addf %41, %42 : vector<8x128xf32>
    %44 = math.tanh %43 : vector<8x128xf32>
    %45 = arith.mulf %40, %44 : vector<8x128xf32>
    %46 = arith.index_cast %16 : i32 to index
    %c0_23 = arith.constant 0 : index
    %47 = vector.load %arg13[%46, %c0_23] : memref<64x128xf32, #tpu.memory_space<vmem>>, vector<8x128xf32>
    tpu.vector_store %arg13[%46, %c0_23], %45 {strides = array<i32>} : memref<64x128xf32, #tpu.memory_space<vmem>>, vector<8x128xf32>,
    %c1_i32 = arith.constant 1 : i32
    %c8_i32_24 = arith.constant 8 : i32
    %48 = arith.muli %c1_i32, %c8_i32_24 : i32
    %49 = tpu.assume_multiple %48, 8 : i32
    %50 = arith.index_cast %49 : i32 to index
    %c0_25 = arith.constant 0 : index
    %51 = vector.load %arg12[%50, %c0_25] : memref<64x512xf32, #tpu.memory_space<vmem>>, vector<8x512xf32>
    %cst_26 = arith.constant dense<0.000000e+00> : vector<8x512xf32>
    %52 = tpu.matmul %45, %10, %cst_26 {dimension_numbers = #tpu.dot_dimension_numbers<[1], [0], [0], [1], [0, 0, 1, 1], [], []>} : vector<8x128xf32>, vector<128x512xf32>, vector<8x512xf32> -> vector<8x512xf32>
    %53 = arith.addf %51, %52 : vector<8x512xf32>
    %54 = vector.extract_strided_slice %53 {offsets = [0, 0], sizes = [8, 128], strides = [1, 1]} : vector<8x512xf32> to vector<8x128xf32>
    %55 = arith.negf %54 : vector<8x128xf32>
    %56 = math.exp %55 : vector<8x128xf32>
    %cst_27 = arith.constant 1.000000e+00 : f32
    %57 = vector.broadcast %cst_27 : f32 to vector<8x128xf32>
    %58 = arith.addf %57, %56 : vector<8x128xf32>
    %59 = arith.divf %57, %58 : vector<8x128xf32>
    %60 = vector.extract_strided_slice %53 {offsets = [0, 128], sizes = [8, 128], strides = [1, 1]} : vector<8x512xf32> to vector<8x128xf32>
    %61 = arith.negf %60 : vector<8x128xf32>
    %62 = math.exp %61 : vector<8x128xf32>
    %cst_28 = arith.constant 1.000000e+00 : f32
    %63 = vector.broadcast %cst_28 : f32 to vector<8x128xf32>
    %64 = arith.addf %63, %62 : vector<8x128xf32>
    %65 = arith.divf %63, %64 : vector<8x128xf32>
    %66 = vector.extract_strided_slice %53 {offsets = [0, 256], sizes = [8, 128], strides = [1, 1]} : vector<8x512xf32> to vector<8x128xf32>
    %67 = math.tanh %66 : vector<8x128xf32>
    %68 = vector.extract_strided_slice %53 {offsets = [0, 384], sizes = [8, 128], strides = [1, 1]} : vector<8x512xf32> to vector<8x128xf32>
    %69 = arith.negf %68 : vector<8x128xf32>
    %70 = math.exp %69 : vector<8x128xf32>
    %cst_29 = arith.constant 1.000000e+00 : f32
    %71 = vector.broadcast %cst_29 : f32 to vector<8x128xf32>
    %72 = arith.addf %71, %70 : vector<8x128xf32>
    %73 = arith.divf %71, %72 : vector<8x128xf32>
    %74 = arith.mulf %65, %43 : vector<8x128xf32>
    %75 = arith.mulf %59, %67 : vector<8x128xf32>
    %76 = arith.addf %74, %75 : vector<8x128xf32>
    %77 = math.tanh %76 : vector<8x128xf32>
    %78 = arith.mulf %73, %77 : vector<8x128xf32>
    %79 = arith.index_cast %49 : i32 to index
    %c0_30 = arith.constant 0 : index
    %80 = vector.load %arg13[%79, %c0_30] : memref<64x128xf32, #tpu.memory_space<vmem>>, vector<8x128xf32>
    tpu.vector_store %arg13[%79, %c0_30], %78 {strides = array<i32>} : memref<64x128xf32, #tpu.memory_space<vmem>>, vector<8x128xf32>,
    %c2_i32 = arith.constant 2 : i32
    %c8_i32_31 = arith.constant 8 : i32
    %81 = arith.muli %c2_i32, %c8_i32_31 : i32
    %82 = tpu.assume_multiple %81, 8 : i32
    %83 = arith.index_cast %82 : i32 to index
    %c0_32 = arith.constant 0 : index
    %84 = vector.load %arg12[%83, %c0_32] : memref<64x512xf32, #tpu.memory_space<vmem>>, vector<8x512xf32>
    %cst_33 = arith.constant dense<0.000000e+00> : vector<8x512xf32>
    %85 = tpu.matmul %78, %10, %cst_33 {dimension_numbers = #tpu.dot_dimension_numbers<[1], [0], [0], [1], [0, 0, 1, 1], [], []>} : vector<8x128xf32>, vector<128x512xf32>, vector<8x512xf32> -> vector<8x512xf32>
    %86 = arith.addf %84, %85 : vector<8x512xf32>
    %87 = vector.extract_strided_slice %86 {offsets = [0, 0], sizes = [8, 128], strides = [1, 1]} : vector<8x512xf32> to vector<8x128xf32>
    %88 = arith.negf %87 : vector<8x128xf32>
    %89 = math.exp %88 : vector<8x128xf32>
    %cst_34 = arith.constant 1.000000e+00 : f32
    %90 = vector.broadcast %cst_34 : f32 to vector<8x128xf32>
    %91 = arith.addf %90, %89 : vector<8x128xf32>
    %92 = arith.divf %90, %91 : vector<8x128xf32>
    %93 = vector.extract_strided_slice %86 {offsets = [0, 128], sizes = [8, 128], strides = [1, 1]} : vector<8x512xf32> to vector<8x128xf32>
    %94 = arith.negf %93 : vector<8x128xf32>
    %95 = math.exp %94 : vector<8x128xf32>
    %cst_35 = arith.constant 1.000000e+00 : f32
    %96 = vector.broadcast %cst_35 : f32 to vector<8x128xf32>
    %97 = arith.addf %96, %95 : vector<8x128xf32>
    %98 = arith.divf %96, %97 : vector<8x128xf32>
    %99 = vector.extract_strided_slice %86 {offsets = [0, 256], sizes = [8, 128], strides = [1, 1]} : vector<8x512xf32> to vector<8x128xf32>
    %100 = math.tanh %99 : vector<8x128xf32>
    %101 = vector.extract_strided_slice %86 {offsets = [0, 384], sizes = [8, 128], strides = [1, 1]} : vector<8x512xf32> to vector<8x128xf32>
    %102 = arith.negf %101 : vector<8x128xf32>
    %103 = math.exp %102 : vector<8x128xf32>
    %cst_36 = arith.constant 1.000000e+00 : f32
    %104 = vector.broadcast %cst_36 : f32 to vector<8x128xf32>
    %105 = arith.addf %104, %103 : vector<8x128xf32>
    %106 = arith.divf %104, %105 : vector<8x128xf32>
    %107 = arith.mulf %98, %76 : vector<8x128xf32>
    %108 = arith.mulf %92, %100 : vector<8x128xf32>
    %109 = arith.addf %107, %108 : vector<8x128xf32>
    %110 = math.tanh %109 : vector<8x128xf32>
    %111 = arith.mulf %106, %110 : vector<8x128xf32>
    %112 = arith.index_cast %82 : i32 to index
    %c0_37 = arith.constant 0 : index
    %113 = vector.load %arg13[%112, %c0_37] : memref<64x128xf32, #tpu.memory_space<vmem>>, vector<8x128xf32>
    tpu.vector_store %arg13[%112, %c0_37], %111 {strides = array<i32>} : memref<64x128xf32, #tpu.memory_space<vmem>>, vector<8x128xf32>,
    %c3_i32 = arith.constant 3 : i32
    %c8_i32_38 = arith.constant 8 : i32
    %114 = arith.muli %c3_i32, %c8_i32_38 : i32
    %115 = tpu.assume_multiple %114, 8 : i32
    %116 = arith.index_cast %115 : i32 to index
    %c0_39 = arith.constant 0 : index
    %117 = vector.load %arg12[%116, %c0_39] : memref<64x512xf32, #tpu.memory_space<vmem>>, vector<8x512xf32>
    %cst_40 = arith.constant dense<0.000000e+00> : vector<8x512xf32>
    %118 = tpu.matmul %111, %10, %cst_40 {dimension_numbers = #tpu.dot_dimension_numbers<[1], [0], [0], [1], [0, 0, 1, 1], [], []>} : vector<8x128xf32>, vector<128x512xf32>, vector<8x512xf32> -> vector<8x512xf32>
    %119 = arith.addf %117, %118 : vector<8x512xf32>
    %120 = vector.extract_strided_slice %119 {offsets = [0, 0], sizes = [8, 128], strides = [1, 1]} : vector<8x512xf32> to vector<8x128xf32>
    %121 = arith.negf %120 : vector<8x128xf32>
    %122 = math.exp %121 : vector<8x128xf32>
    %cst_41 = arith.constant 1.000000e+00 : f32
    %123 = vector.broadcast %cst_41 : f32 to vector<8x128xf32>
    %124 = arith.addf %123, %122 : vector<8x128xf32>
    %125 = arith.divf %123, %124 : vector<8x128xf32>
    %126 = vector.extract_strided_slice %119 {offsets = [0, 128], sizes = [8, 128], strides = [1, 1]} : vector<8x512xf32> to vector<8x128xf32>
    %127 = arith.negf %126 : vector<8x128xf32>
    %128 = math.exp %127 : vector<8x128xf32>
    %cst_42 = arith.constant 1.000000e+00 : f32
    %129 = vector.broadcast %cst_42 : f32 to vector<8x128xf32>
    %130 = arith.addf %129, %128 : vector<8x128xf32>
    %131 = arith.divf %129, %130 : vector<8x128xf32>
    %132 = vector.extract_strided_slice %119 {offsets = [0, 256], sizes = [8, 128], strides = [1, 1]} : vector<8x512xf32> to vector<8x128xf32>
    %133 = math.tanh %132 : vector<8x128xf32>
    %134 = vector.extract_strided_slice %119 {offsets = [0, 384], sizes = [8, 128], strides = [1, 1]} : vector<8x512xf32> to vector<8x128xf32>
    %135 = arith.negf %134 : vector<8x128xf32>
    %136 = math.exp %135 : vector<8x128xf32>
    %cst_43 = arith.constant 1.000000e+00 : f32
    %137 = vector.broadcast %cst_43 : f32 to vector<8x128xf32>
    %138 = arith.addf %137, %136 : vector<8x128xf32>
    %139 = arith.divf %137, %138 : vector<8x128xf32>
    %140 = arith.mulf %131, %109 : vector<8x128xf32>
    %141 = arith.mulf %125, %133 : vector<8x128xf32>
    %142 = arith.addf %140, %141 : vector<8x128xf32>
    %143 = math.tanh %142 : vector<8x128xf32>
    %144 = arith.mulf %139, %143 : vector<8x128xf32>
    %145 = arith.index_cast %115 : i32 to index
    %c0_44 = arith.constant 0 : index
    %146 = vector.load %arg13[%145, %c0_44] : memref<64x128xf32, #tpu.memory_space<vmem>>, vector<8x128xf32>
    tpu.vector_store %arg13[%145, %c0_44], %144 {strides = array<i32>} : memref<64x128xf32, #tpu.memory_space<vmem>>, vector<8x128xf32>,
    %c4_i32 = arith.constant 4 : i32
    %c8_i32_45 = arith.constant 8 : i32
    %147 = arith.muli %c4_i32, %c8_i32_45 : i32
    %148 = tpu.assume_multiple %147, 8 : i32
    %149 = arith.index_cast %148 : i32 to index
    %c0_46 = arith.constant 0 : index
    %150 = vector.load %arg12[%149, %c0_46] : memref<64x512xf32, #tpu.memory_space<vmem>>, vector<8x512xf32>
    %cst_47 = arith.constant dense<0.000000e+00> : vector<8x512xf32>
    %151 = tpu.matmul %144, %10, %cst_47 {dimension_numbers = #tpu.dot_dimension_numbers<[1], [0], [0], [1], [0, 0, 1, 1], [], []>} : vector<8x128xf32>, vector<128x512xf32>, vector<8x512xf32> -> vector<8x512xf32>
    %152 = arith.addf %150, %151 : vector<8x512xf32>
    %153 = vector.extract_strided_slice %152 {offsets = [0, 0], sizes = [8, 128], strides = [1, 1]} : vector<8x512xf32> to vector<8x128xf32>
    %154 = arith.negf %153 : vector<8x128xf32>
    %155 = math.exp %154 : vector<8x128xf32>
    %cst_48 = arith.constant 1.000000e+00 : f32
    %156 = vector.broadcast %cst_48 : f32 to vector<8x128xf32>
    %157 = arith.addf %156, %155 : vector<8x128xf32>
    %158 = arith.divf %156, %157 : vector<8x128xf32>
    %159 = vector.extract_strided_slice %152 {offsets = [0, 128], sizes = [8, 128], strides = [1, 1]} : vector<8x512xf32> to vector<8x128xf32>
    %160 = arith.negf %159 : vector<8x128xf32>
    %161 = math.exp %160 : vector<8x128xf32>
    %cst_49 = arith.constant 1.000000e+00 : f32
    %162 = vector.broadcast %cst_49 : f32 to vector<8x128xf32>
    %163 = arith.addf %162, %161 : vector<8x128xf32>
    %164 = arith.divf %162, %163 : vector<8x128xf32>
    %165 = vector.extract_strided_slice %152 {offsets = [0, 256], sizes = [8, 128], strides = [1, 1]} : vector<8x512xf32> to vector<8x128xf32>
    %166 = math.tanh %165 : vector<8x128xf32>
    %167 = vector.extract_strided_slice %152 {offsets = [0, 384], sizes = [8, 128], strides = [1, 1]} : vector<8x512xf32> to vector<8x128xf32>
    %168 = arith.negf %167 : vector<8x128xf32>
    %169 = math.exp %168 : vector<8x128xf32>
    %cst_50 = arith.constant 1.000000e+00 : f32
    %170 = vector.broadcast %cst_50 : f32 to vector<8x128xf32>
    %171 = arith.addf %170, %169 : vector<8x128xf32>
    %172 = arith.divf %170, %171 : vector<8x128xf32>
    %173 = arith.mulf %164, %142 : vector<8x128xf32>
    %174 = arith.mulf %158, %166 : vector<8x128xf32>
    %175 = arith.addf %173, %174 : vector<8x128xf32>
    %176 = math.tanh %175 : vector<8x128xf32>
    %177 = arith.mulf %172, %176 : vector<8x128xf32>
    %178 = arith.index_cast %148 : i32 to index
    %c0_51 = arith.constant 0 : index
    %179 = vector.load %arg13[%178, %c0_51] : memref<64x128xf32, #tpu.memory_space<vmem>>, vector<8x128xf32>
    tpu.vector_store %arg13[%178, %c0_51], %177 {strides = array<i32>} : memref<64x128xf32, #tpu.memory_space<vmem>>, vector<8x128xf32>,
    %c5_i32 = arith.constant 5 : i32
    %c8_i32_52 = arith.constant 8 : i32
    %180 = arith.muli %c5_i32, %c8_i32_52 : i32
    %181 = tpu.assume_multiple %180, 8 : i32
    %182 = arith.index_cast %181 : i32 to index
    %c0_53 = arith.constant 0 : index
    %183 = vector.load %arg12[%182, %c0_53] : memref<64x512xf32, #tpu.memory_space<vmem>>, vector<8x512xf32>
    %cst_54 = arith.constant dense<0.000000e+00> : vector<8x512xf32>
    %184 = tpu.matmul %177, %10, %cst_54 {dimension_numbers = #tpu.dot_dimension_numbers<[1], [0], [0], [1], [0, 0, 1, 1], [], []>} : vector<8x128xf32>, vector<128x512xf32>, vector<8x512xf32> -> vector<8x512xf32>
    %185 = arith.addf %183, %184 : vector<8x512xf32>
    %186 = vector.extract_strided_slice %185 {offsets = [0, 0], sizes = [8, 128], strides = [1, 1]} : vector<8x512xf32> to vector<8x128xf32>
    %187 = arith.negf %186 : vector<8x128xf32>
    %188 = math.exp %187 : vector<8x128xf32>
    %cst_55 = arith.constant 1.000000e+00 : f32
    %189 = vector.broadcast %cst_55 : f32 to vector<8x128xf32>
    %190 = arith.addf %189, %188 : vector<8x128xf32>
    %191 = arith.divf %189, %190 : vector<8x128xf32>
    %192 = vector.extract_strided_slice %185 {offsets = [0, 128], sizes = [8, 128], strides = [1, 1]} : vector<8x512xf32> to vector<8x128xf32>
    %193 = arith.negf %192 : vector<8x128xf32>
    %194 = math.exp %193 : vector<8x128xf32>
    %cst_56 = arith.constant 1.000000e+00 : f32
    %195 = vector.broadcast %cst_56 : f32 to vector<8x128xf32>
    %196 = arith.addf %195, %194 : vector<8x128xf32>
    %197 = arith.divf %195, %196 : vector<8x128xf32>
    %198 = vector.extract_strided_slice %185 {offsets = [0, 256], sizes = [8, 128], strides = [1, 1]} : vector<8x512xf32> to vector<8x128xf32>
    %199 = math.tanh %198 : vector<8x128xf32>
    %200 = vector.extract_strided_slice %185 {offsets = [0, 384], sizes = [8, 128], strides = [1, 1]} : vector<8x512xf32> to vector<8x128xf32>
    %201 = arith.negf %200 : vector<8x128xf32>
    %202 = math.exp %201 : vector<8x128xf32>
    %cst_57 = arith.constant 1.000000e+00 : f32
    %203 = vector.broadcast %cst_57 : f32 to vector<8x128xf32>
    %204 = arith.addf %203, %202 : vector<8x128xf32>
    %205 = arith.divf %203, %204 : vector<8x128xf32>
    %206 = arith.mulf %197, %175 : vector<8x128xf32>
    %207 = arith.mulf %191, %199 : vector<8x128xf32>
    %208 = arith.addf %206, %207 : vector<8x128xf32>
    %209 = math.tanh %208 : vector<8x128xf32>
    %210 = arith.mulf %205, %209 : vector<8x128xf32>
    %211 = arith.index_cast %181 : i32 to index
    %c0_58 = arith.constant 0 : index
    %212 = vector.load %arg13[%211, %c0_58] : memref<64x128xf32, #tpu.memory_space<vmem>>, vector<8x128xf32>
    tpu.vector_store %arg13[%211, %c0_58], %210 {strides = array<i32>} : memref<64x128xf32, #tpu.memory_space<vmem>>, vector<8x128xf32>,
    %c6_i32 = arith.constant 6 : i32
    %c8_i32_59 = arith.constant 8 : i32
    %213 = arith.muli %c6_i32, %c8_i32_59 : i32
    %214 = tpu.assume_multiple %213, 8 : i32
    %215 = arith.index_cast %214 : i32 to index
    %c0_60 = arith.constant 0 : index
    %216 = vector.load %arg12[%215, %c0_60] : memref<64x512xf32, #tpu.memory_space<vmem>>, vector<8x512xf32>
    %cst_61 = arith.constant dense<0.000000e+00> : vector<8x512xf32>
    %217 = tpu.matmul %210, %10, %cst_61 {dimension_numbers = #tpu.dot_dimension_numbers<[1], [0], [0], [1], [0, 0, 1, 1], [], []>} : vector<8x128xf32>, vector<128x512xf32>, vector<8x512xf32> -> vector<8x512xf32>
    %218 = arith.addf %216, %217 : vector<8x512xf32>
    %219 = vector.extract_strided_slice %218 {offsets = [0, 0], sizes = [8, 128], strides = [1, 1]} : vector<8x512xf32> to vector<8x128xf32>
    %220 = arith.negf %219 : vector<8x128xf32>
    %221 = math.exp %220 : vector<8x128xf32>
    %cst_62 = arith.constant 1.000000e+00 : f32
    %222 = vector.broadcast %cst_62 : f32 to vector<8x128xf32>
    %223 = arith.addf %222, %221 : vector<8x128xf32>
    %224 = arith.divf %222, %223 : vector<8x128xf32>
    %225 = vector.extract_strided_slice %218 {offsets = [0, 128], sizes = [8, 128], strides = [1, 1]} : vector<8x512xf32> to vector<8x128xf32>
    %226 = arith.negf %225 : vector<8x128xf32>
    %227 = math.exp %226 : vector<8x128xf32>
    %cst_63 = arith.constant 1.000000e+00 : f32
    %228 = vector.broadcast %cst_63 : f32 to vector<8x128xf32>
    %229 = arith.addf %228, %227 : vector<8x128xf32>
    %230 = arith.divf %228, %229 : vector<8x128xf32>
    %231 = vector.extract_strided_slice %218 {offsets = [0, 256], sizes = [8, 128], strides = [1, 1]} : vector<8x512xf32> to vector<8x128xf32>
    %232 = math.tanh %231 : vector<8x128xf32>
    %233 = vector.extract_strided_slice %218 {offsets = [0, 384], sizes = [8, 128], strides = [1, 1]} : vector<8x512xf32> to vector<8x128xf32>
    %234 = arith.negf %233 : vector<8x128xf32>
    %235 = math.exp %234 : vector<8x128xf32>
    %cst_64 = arith.constant 1.000000e+00 : f32
    %236 = vector.broadcast %cst_64 : f32 to vector<8x128xf32>
    %237 = arith.addf %236, %235 : vector<8x128xf32>
    %238 = arith.divf %236, %237 : vector<8x128xf32>
    %239 = arith.mulf %230, %208 : vector<8x128xf32>
    %240 = arith.mulf %224, %232 : vector<8x128xf32>
    %241 = arith.addf %239, %240 : vector<8x128xf32>
    %242 = math.tanh %241 : vector<8x128xf32>
    %243 = arith.mulf %238, %242 : vector<8x128xf32>
    %244 = arith.index_cast %214 : i32 to index
    %c0_65 = arith.constant 0 : index
    %245 = vector.load %arg13[%244, %c0_65] : memref<64x128xf32, #tpu.memory_space<vmem>>, vector<8x128xf32>
    tpu.vector_store %arg13[%244, %c0_65], %243 {strides = array<i32>} : memref<64x128xf32, #tpu.memory_space<vmem>>, vector<8x128xf32>,
    %c7_i32 = arith.constant 7 : i32
    %c8_i32_66 = arith.constant 8 : i32
    %246 = arith.muli %c7_i32, %c8_i32_66 : i32
    %247 = tpu.assume_multiple %246, 8 : i32
    %248 = arith.index_cast %247 : i32 to index
    %c0_67 = arith.constant 0 : index
    %249 = vector.load %arg12[%248, %c0_67] : memref<64x512xf32, #tpu.memory_space<vmem>>, vector<8x512xf32>
    %cst_68 = arith.constant dense<0.000000e+00> : vector<8x512xf32>
    %250 = tpu.matmul %243, %10, %cst_68 {dimension_numbers = #tpu.dot_dimension_numbers<[1], [0], [0], [1], [0, 0, 1, 1], [], []>} : vector<8x128xf32>, vector<128x512xf32>, vector<8x512xf32> -> vector<8x512xf32>
    %251 = arith.addf %249, %250 : vector<8x512xf32>
    %252 = vector.extract_strided_slice %251 {offsets = [0, 0], sizes = [8, 128], strides = [1, 1]} : vector<8x512xf32> to vector<8x128xf32>
    %253 = arith.negf %252 : vector<8x128xf32>
    %254 = math.exp %253 : vector<8x128xf32>
    %cst_69 = arith.constant 1.000000e+00 : f32
    %255 = vector.broadcast %cst_69 : f32 to vector<8x128xf32>
    %256 = arith.addf %255, %254 : vector<8x128xf32>
    %257 = arith.divf %255, %256 : vector<8x128xf32>
    %258 = vector.extract_strided_slice %251 {offsets = [0, 128], sizes = [8, 128], strides = [1, 1]} : vector<8x512xf32> to vector<8x128xf32>
    %259 = arith.negf %258 : vector<8x128xf32>
    %260 = math.exp %259 : vector<8x128xf32>
    %cst_70 = arith.constant 1.000000e+00 : f32
    %261 = vector.broadcast %cst_70 : f32 to vector<8x128xf32>
    %262 = arith.addf %261, %260 : vector<8x128xf32>
    %263 = arith.divf %261, %262 : vector<8x128xf32>
    %264 = vector.extract_strided_slice %251 {offsets = [0, 256], sizes = [8, 128], strides = [1, 1]} : vector<8x512xf32> to vector<8x128xf32>
    %265 = math.tanh %264 : vector<8x128xf32>
    %266 = vector.extract_strided_slice %251 {offsets = [0, 384], sizes = [8, 128], strides = [1, 1]} : vector<8x512xf32> to vector<8x128xf32>
    %267 = arith.negf %266 : vector<8x128xf32>
    %268 = math.exp %267 : vector<8x128xf32>
    %cst_71 = arith.constant 1.000000e+00 : f32
    %269 = vector.broadcast %cst_71 : f32 to vector<8x128xf32>
    %270 = arith.addf %269, %268 : vector<8x128xf32>
    %271 = arith.divf %269, %270 : vector<8x128xf32>
    %272 = arith.mulf %263, %241 : vector<8x128xf32>
    %273 = arith.mulf %257, %265 : vector<8x128xf32>
    %274 = arith.addf %272, %273 : vector<8x128xf32>
    %275 = math.tanh %274 : vector<8x128xf32>
    %276 = arith.mulf %271, %275 : vector<8x128xf32>
    %277 = arith.index_cast %247 : i32 to index
    %c0_72 = arith.constant 0 : index
    %278 = vector.load %arg13[%277, %c0_72] : memref<64x128xf32, #tpu.memory_space<vmem>>, vector<8x128xf32>
    tpu.vector_store %arg13[%277, %c0_72], %276 {strides = array<i32>} : memref<64x128xf32, #tpu.memory_space<vmem>>, vector<8x128xf32>,
    %c8_i32_73 = arith.constant 8 : i32
    %c0_74 = arith.constant 0 : index
    %c0_75 = arith.constant 0 : index
    %c0_76 = arith.constant 0 : index
    %279 = vector.load %arg10[%c0_74, %c0_75, %c0_76] : memref<2x8x128xf32, #tpu.memory_space<vmem>>, vector<1x8x128xf32>
    %280 = vector.shape_cast %279 : vector<1x8x128xf32> to vector<8x128xf32>
    %281 = vector.shape_cast %276 : vector<8x128xf32> to vector<1x8x128xf32>
    tpu.vector_store %arg10[%c0_74, %c0_75, %c0_76], %281 {strides = array<i32>} : memref<2x8x128xf32, #tpu.memory_space<vmem>>, vector<1x8x128xf32>,
    %c0_77 = arith.constant 0 : index
    %c0_78 = arith.constant 0 : index
    %c0_79 = arith.constant 0 : index
    %282 = vector.load %arg11[%c0_77, %c0_78, %c0_79] : memref<2x8x128xf32, #tpu.memory_space<vmem>>, vector<1x8x128xf32>
    %283 = vector.shape_cast %282 : vector<1x8x128xf32> to vector<8x128xf32>
    %284 = vector.shape_cast %274 : vector<8x128xf32> to vector<1x8x128xf32>
    tpu.vector_store %arg11[%c0_77, %c0_78, %c0_79], %284 {strides = array<i32>} : memref<2x8x128xf32, #tpu.memory_space<vmem>>, vector<1x8x128xf32>,
    %c0_80 = arith.constant 0 : index
    %c0_81 = arith.constant 0 : index
    %285 = vector.load %arg13[%c0_80, %c0_81] : memref<64x128xf32, #tpu.memory_space<vmem>>, vector<64x128xf32>
    %c1 = arith.constant 1 : index
    %c0_82 = arith.constant 0 : index
    %c0_83 = arith.constant 0 : index
    %286 = vector.load %arg4[%c1, %c0_82, %c0_83] : memref<2x128x512xf32, #tpu.memory_space<vmem>>, vector<1x128x512xf32>
    %287 = vector.shape_cast %286 : vector<1x128x512xf32> to vector<128x512xf32>
    %cst_84 = arith.constant dense<0.000000e+00> : vector<64x512xf32>
    %288 = tpu.matmul %285, %287, %cst_84 {dimension_numbers = #tpu.dot_dimension_numbers<[1], [0], [0], [1], [0, 0, 1, 1], [], []>} : vector<64x128xf32>, vector<128x512xf32>, vector<64x512xf32> -> vector<64x512xf32>
    %c1_85 = arith.constant 1 : index
    %c0_86 = arith.constant 0 : index
    %c0_87 = arith.constant 0 : index
    %289 = vector.load %arg6[%c1_85, %c0_86, %c0_87] : memref<2x1x512xf32, #tpu.memory_space<vmem>>, vector<1x1x512xf32>
    %290 = vector.shape_cast %289 : vector<1x1x512xf32> to vector<1x512xf32>
    %291 = vector.broadcast %290 : vector<1x512xf32> to vector<64x512xf32>
    %292 = arith.addf %288, %291 : vector<64x512xf32>
    %c0_88 = arith.constant 0 : index
    %c0_89 = arith.constant 0 : index
    %293 = vector.load %arg12[%c0_88, %c0_89] : memref<64x512xf32, #tpu.memory_space<vmem>>, vector<64x512xf32>
    tpu.vector_store %arg12[%c0_88, %c0_89], %292 {strides = array<i32>} : memref<64x512xf32, #tpu.memory_space<vmem>>, vector<64x512xf32>,
    %c1_90 = arith.constant 1 : index
    %c0_91 = arith.constant 0 : index
    %c0_92 = arith.constant 0 : index
    %294 = vector.load %arg5[%c1_90, %c0_91, %c0_92] : memref<2x128x512xf32, #tpu.memory_space<vmem>>, vector<1x128x512xf32>
    %295 = vector.shape_cast %294 : vector<1x128x512xf32> to vector<128x512xf32>
    %c1_93 = arith.constant 1 : index
    %c0_94 = arith.constant 0 : index
    %c0_95 = arith.constant 0 : index
    %296 = vector.load %arg2[%c1_93, %c0_94, %c0_95] : memref<2x8x128xf32, #tpu.memory_space<vmem>>, vector<1x8x128xf32>
    %297 = vector.shape_cast %296 : vector<1x8x128xf32> to vector<8x128xf32>
    %c1_96 = arith.constant 1 : index
    %c0_97 = arith.constant 0 : index
    %c0_98 = arith.constant 0 : index
    %298 = vector.load %arg3[%c1_96, %c0_97, %c0_98] : memref<2x8x128xf32, #tpu.memory_space<vmem>>, vector<1x8x128xf32>
    %299 = vector.shape_cast %298 : vector<1x8x128xf32> to vector<8x128xf32>
    %c0_i32_99 = arith.constant 0 : i32
    %c8_i32_100 = arith.constant 8 : i32
    %300 = arith.muli %c0_i32_99, %c8_i32_100 : i32
    %301 = tpu.assume_multiple %300, 8 : i32
    %302 = arith.index_cast %301 : i32 to index
    %c0_101 = arith.constant 0 : index
    %303 = vector.load %arg12[%302, %c0_101] : memref<64x512xf32, #tpu.memory_space<vmem>>, vector<8x512xf32>
    %cst_102 = arith.constant dense<0.000000e+00> : vector<8x512xf32>
    %304 = tpu.matmul %297, %295, %cst_102 {dimension_numbers = #tpu.dot_dimension_numbers<[1], [0], [0], [1], [0, 0, 1, 1], [], []>} : vector<8x128xf32>, vector<128x512xf32>, vector<8x512xf32> -> vector<8x512xf32>
    %305 = arith.addf %303, %304 : vector<8x512xf32>
    %306 = vector.extract_strided_slice %305 {offsets = [0, 0], sizes = [8, 128], strides = [1, 1]} : vector<8x512xf32> to vector<8x128xf32>
    %307 = arith.negf %306 : vector<8x128xf32>
    %308 = math.exp %307 : vector<8x128xf32>
    %cst_103 = arith.constant 1.000000e+00 : f32
    %309 = vector.broadcast %cst_103 : f32 to vector<8x128xf32>
    %310 = arith.addf %309, %308 : vector<8x128xf32>
    %311 = arith.divf %309, %310 : vector<8x128xf32>
    %312 = vector.extract_strided_slice %305 {offsets = [0, 128], sizes = [8, 128], strides = [1, 1]} : vector<8x512xf32> to vector<8x128xf32>
    %313 = arith.negf %312 : vector<8x128xf32>
    %314 = math.exp %313 : vector<8x128xf32>
    %cst_104 = arith.constant 1.000000e+00 : f32
    %315 = vector.broadcast %cst_104 : f32 to vector<8x128xf32>
    %316 = arith.addf %315, %314 : vector<8x128xf32>
    %317 = arith.divf %315, %316 : vector<8x128xf32>
    %318 = vector.extract_strided_slice %305 {offsets = [0, 256], sizes = [8, 128], strides = [1, 1]} : vector<8x512xf32> to vector<8x128xf32>
    %319 = math.tanh %318 : vector<8x128xf32>
    %320 = vector.extract_strided_slice %305 {offsets = [0, 384], sizes = [8, 128], strides = [1, 1]} : vector<8x512xf32> to vector<8x128xf32>
    %321 = arith.negf %320 : vector<8x128xf32>
    %322 = math.exp %321 : vector<8x128xf32>
    %cst_105 = arith.constant 1.000000e+00 : f32
    %323 = vector.broadcast %cst_105 : f32 to vector<8x128xf32>
    %324 = arith.addf %323, %322 : vector<8x128xf32>
    %325 = arith.divf %323, %324 : vector<8x128xf32>
    %326 = arith.mulf %317, %299 : vector<8x128xf32>
    %327 = arith.mulf %311, %319 : vector<8x128xf32>
    %328 = arith.addf %326, %327 : vector<8x128xf32>
    %329 = math.tanh %328 : vector<8x128xf32>
    %330 = arith.mulf %325, %329 : vector<8x128xf32>
    %c1_i32_106 = arith.constant 1 : i32
    %c8_i32_107 = arith.constant 8 : i32
    %331 = arith.muli %c1_i32_106, %c8_i32_107 : i32
    %332 = tpu.assume_multiple %331, 8 : i32
    %333 = arith.index_cast %332 : i32 to index
    %c0_108 = arith.constant 0 : index
    %334 = vector.load %arg12[%333, %c0_108] : memref<64x512xf32, #tpu.memory_space<vmem>>, vector<8x512xf32>
    %cst_109 = arith.constant dense<0.000000e+00> : vector<8x512xf32>
    %335 = tpu.matmul %330, %295, %cst_109 {dimension_numbers = #tpu.dot_dimension_numbers<[1], [0], [0], [1], [0, 0, 1, 1], [], []>} : vector<8x128xf32>, vector<128x512xf32>, vector<8x512xf32> -> vector<8x512xf32>
    %336 = arith.addf %334, %335 : vector<8x512xf32>
    %337 = vector.extract_strided_slice %336 {offsets = [0, 0], sizes = [8, 128], strides = [1, 1]} : vector<8x512xf32> to vector<8x128xf32>
    %338 = arith.negf %337 : vector<8x128xf32>
    %339 = math.exp %338 : vector<8x128xf32>
    %cst_110 = arith.constant 1.000000e+00 : f32
    %340 = vector.broadcast %cst_110 : f32 to vector<8x128xf32>
    %341 = arith.addf %340, %339 : vector<8x128xf32>
    %342 = arith.divf %340, %341 : vector<8x128xf32>
    %343 = vector.extract_strided_slice %336 {offsets = [0, 128], sizes = [8, 128], strides = [1, 1]} : vector<8x512xf32> to vector<8x128xf32>
    %344 = arith.negf %343 : vector<8x128xf32>
    %345 = math.exp %344 : vector<8x128xf32>
    %cst_111 = arith.constant 1.000000e+00 : f32
    %346 = vector.broadcast %cst_111 : f32 to vector<8x128xf32>
    %347 = arith.addf %346, %345 : vector<8x128xf32>
    %348 = arith.divf %346, %347 : vector<8x128xf32>
    %349 = vector.extract_strided_slice %336 {offsets = [0, 256], sizes = [8, 128], strides = [1, 1]} : vector<8x512xf32> to vector<8x128xf32>
    %350 = math.tanh %349 : vector<8x128xf32>
    %351 = vector.extract_strided_slice %336 {offsets = [0, 384], sizes = [8, 128], strides = [1, 1]} : vector<8x512xf32> to vector<8x128xf32>
    %352 = arith.negf %351 : vector<8x128xf32>
    %353 = math.exp %352 : vector<8x128xf32>
    %cst_112 = arith.constant 1.000000e+00 : f32
    %354 = vector.broadcast %cst_112 : f32 to vector<8x128xf32>
    %355 = arith.addf %354, %353 : vector<8x128xf32>
    %356 = arith.divf %354, %355 : vector<8x128xf32>
    %357 = arith.mulf %348, %328 : vector<8x128xf32>
    %358 = arith.mulf %342, %350 : vector<8x128xf32>
    %359 = arith.addf %357, %358 : vector<8x128xf32>
    %360 = math.tanh %359 : vector<8x128xf32>
    %361 = arith.mulf %356, %360 : vector<8x128xf32>
    %c2_i32_113 = arith.constant 2 : i32
    %c8_i32_114 = arith.constant 8 : i32
    %362 = arith.muli %c2_i32_113, %c8_i32_114 : i32
    %363 = tpu.assume_multiple %362, 8 : i32
    %364 = arith.index_cast %363 : i32 to index
    %c0_115 = arith.constant 0 : index
    %365 = vector.load %arg12[%364, %c0_115] : memref<64x512xf32, #tpu.memory_space<vmem>>, vector<8x512xf32>
    %cst_116 = arith.constant dense<0.000000e+00> : vector<8x512xf32>
    %366 = tpu.matmul %361, %295, %cst_116 {dimension_numbers = #tpu.dot_dimension_numbers<[1], [0], [0], [1], [0, 0, 1, 1], [], []>} : vector<8x128xf32>, vector<128x512xf32>, vector<8x512xf32> -> vector<8x512xf32>
    %367 = arith.addf %365, %366 : vector<8x512xf32>
    %368 = vector.extract_strided_slice %367 {offsets = [0, 0], sizes = [8, 128], strides = [1, 1]} : vector<8x512xf32> to vector<8x128xf32>
    %369 = arith.negf %368 : vector<8x128xf32>
    %370 = math.exp %369 : vector<8x128xf32>
    %cst_117 = arith.constant 1.000000e+00 : f32
    %371 = vector.broadcast %cst_117 : f32 to vector<8x128xf32>
    %372 = arith.addf %371, %370 : vector<8x128xf32>
    %373 = arith.divf %371, %372 : vector<8x128xf32>
    %374 = vector.extract_strided_slice %367 {offsets = [0, 128], sizes = [8, 128], strides = [1, 1]} : vector<8x512xf32> to vector<8x128xf32>
    %375 = arith.negf %374 : vector<8x128xf32>
    %376 = math.exp %375 : vector<8x128xf32>
    %cst_118 = arith.constant 1.000000e+00 : f32
    %377 = vector.broadcast %cst_118 : f32 to vector<8x128xf32>
    %378 = arith.addf %377, %376 : vector<8x128xf32>
    %379 = arith.divf %377, %378 : vector<8x128xf32>
    %380 = vector.extract_strided_slice %367 {offsets = [0, 256], sizes = [8, 128], strides = [1, 1]} : vector<8x512xf32> to vector<8x128xf32>
    %381 = math.tanh %380 : vector<8x128xf32>
    %382 = vector.extract_strided_slice %367 {offsets = [0, 384], sizes = [8, 128], strides = [1, 1]} : vector<8x512xf32> to vector<8x128xf32>
    %383 = arith.negf %382 : vector<8x128xf32>
    %384 = math.exp %383 : vector<8x128xf32>
    %cst_119 = arith.constant 1.000000e+00 : f32
    %385 = vector.broadcast %cst_119 : f32 to vector<8x128xf32>
    %386 = arith.addf %385, %384 : vector<8x128xf32>
    %387 = arith.divf %385, %386 : vector<8x128xf32>
    %388 = arith.mulf %379, %359 : vector<8x128xf32>
    %389 = arith.mulf %373, %381 : vector<8x128xf32>
    %390 = arith.addf %388, %389 : vector<8x128xf32>
    %391 = math.tanh %390 : vector<8x128xf32>
    %392 = arith.mulf %387, %391 : vector<8x128xf32>
    %c3_i32_120 = arith.constant 3 : i32
    %c8_i32_121 = arith.constant 8 : i32
    %393 = arith.muli %c3_i32_120, %c8_i32_121 : i32
    %394 = tpu.assume_multiple %393, 8 : i32
    %395 = arith.index_cast %394 : i32 to index
    %c0_122 = arith.constant 0 : index
    %396 = vector.load %arg12[%395, %c0_122] : memref<64x512xf32, #tpu.memory_space<vmem>>, vector<8x512xf32>
    %cst_123 = arith.constant dense<0.000000e+00> : vector<8x512xf32>
    %397 = tpu.matmul %392, %295, %cst_123 {dimension_numbers = #tpu.dot_dimension_numbers<[1], [0], [0], [1], [0, 0, 1, 1], [], []>} : vector<8x128xf32>, vector<128x512xf32>, vector<8x512xf32> -> vector<8x512xf32>
    %398 = arith.addf %396, %397 : vector<8x512xf32>
    %399 = vector.extract_strided_slice %398 {offsets = [0, 0], sizes = [8, 128], strides = [1, 1]} : vector<8x512xf32> to vector<8x128xf32>
    %400 = arith.negf %399 : vector<8x128xf32>
    %401 = math.exp %400 : vector<8x128xf32>
    %cst_124 = arith.constant 1.000000e+00 : f32
    %402 = vector.broadcast %cst_124 : f32 to vector<8x128xf32>
    %403 = arith.addf %402, %401 : vector<8x128xf32>
    %404 = arith.divf %402, %403 : vector<8x128xf32>
    %405 = vector.extract_strided_slice %398 {offsets = [0, 128], sizes = [8, 128], strides = [1, 1]} : vector<8x512xf32> to vector<8x128xf32>
    %406 = arith.negf %405 : vector<8x128xf32>
    %407 = math.exp %406 : vector<8x128xf32>
    %cst_125 = arith.constant 1.000000e+00 : f32
    %408 = vector.broadcast %cst_125 : f32 to vector<8x128xf32>
    %409 = arith.addf %408, %407 : vector<8x128xf32>
    %410 = arith.divf %408, %409 : vector<8x128xf32>
    %411 = vector.extract_strided_slice %398 {offsets = [0, 256], sizes = [8, 128], strides = [1, 1]} : vector<8x512xf32> to vector<8x128xf32>
    %412 = math.tanh %411 : vector<8x128xf32>
    %413 = vector.extract_strided_slice %398 {offsets = [0, 384], sizes = [8, 128], strides = [1, 1]} : vector<8x512xf32> to vector<8x128xf32>
    %414 = arith.negf %413 : vector<8x128xf32>
    %415 = math.exp %414 : vector<8x128xf32>
    %cst_126 = arith.constant 1.000000e+00 : f32
    %416 = vector.broadcast %cst_126 : f32 to vector<8x128xf32>
    %417 = arith.addf %416, %415 : vector<8x128xf32>
    %418 = arith.divf %416, %417 : vector<8x128xf32>
    %419 = arith.mulf %410, %390 : vector<8x128xf32>
    %420 = arith.mulf %404, %412 : vector<8x128xf32>
    %421 = arith.addf %419, %420 : vector<8x128xf32>
    %422 = math.tanh %421 : vector<8x128xf32>
    %423 = arith.mulf %418, %422 : vector<8x128xf32>
    %c4_i32_127 = arith.constant 4 : i32
    %c8_i32_128 = arith.constant 8 : i32
    %424 = arith.muli %c4_i32_127, %c8_i32_128 : i32
    %425 = tpu.assume_multiple %424, 8 : i32
    %426 = arith.index_cast %425 : i32 to index
    %c0_129 = arith.constant 0 : index
    %427 = vector.load %arg12[%426, %c0_129] : memref<64x512xf32, #tpu.memory_space<vmem>>, vector<8x512xf32>
    %cst_130 = arith.constant dense<0.000000e+00> : vector<8x512xf32>
    %428 = tpu.matmul %423, %295, %cst_130 {dimension_numbers = #tpu.dot_dimension_numbers<[1], [0], [0], [1], [0, 0, 1, 1], [], []>} : vector<8x128xf32>, vector<128x512xf32>, vector<8x512xf32> -> vector<8x512xf32>
    %429 = arith.addf %427, %428 : vector<8x512xf32>
    %430 = vector.extract_strided_slice %429 {offsets = [0, 0], sizes = [8, 128], strides = [1, 1]} : vector<8x512xf32> to vector<8x128xf32>
    %431 = arith.negf %430 : vector<8x128xf32>
    %432 = math.exp %431 : vector<8x128xf32>
    %cst_131 = arith.constant 1.000000e+00 : f32
    %433 = vector.broadcast %cst_131 : f32 to vector<8x128xf32>
    %434 = arith.addf %433, %432 : vector<8x128xf32>
    %435 = arith.divf %433, %434 : vector<8x128xf32>
    %436 = vector.extract_strided_slice %429 {offsets = [0, 128], sizes = [8, 128], strides = [1, 1]} : vector<8x512xf32> to vector<8x128xf32>
    %437 = arith.negf %436 : vector<8x128xf32>
    %438 = math.exp %437 : vector<8x128xf32>
    %cst_132 = arith.constant 1.000000e+00 : f32
    %439 = vector.broadcast %cst_132 : f32 to vector<8x128xf32>
    %440 = arith.addf %439, %438 : vector<8x128xf32>
    %441 = arith.divf %439, %440 : vector<8x128xf32>
    %442 = vector.extract_strided_slice %429 {offsets = [0, 256], sizes = [8, 128], strides = [1, 1]} : vector<8x512xf32> to vector<8x128xf32>
    %443 = math.tanh %442 : vector<8x128xf32>
    %444 = vector.extract_strided_slice %429 {offsets = [0, 384], sizes = [8, 128], strides = [1, 1]} : vector<8x512xf32> to vector<8x128xf32>
    %445 = arith.negf %444 : vector<8x128xf32>
    %446 = math.exp %445 : vector<8x128xf32>
    %cst_133 = arith.constant 1.000000e+00 : f32
    %447 = vector.broadcast %cst_133 : f32 to vector<8x128xf32>
    %448 = arith.addf %447, %446 : vector<8x128xf32>
    %449 = arith.divf %447, %448 : vector<8x128xf32>
    %450 = arith.mulf %441, %421 : vector<8x128xf32>
    %451 = arith.mulf %435, %443 : vector<8x128xf32>
    %452 = arith.addf %450, %451 : vector<8x128xf32>
    %453 = math.tanh %452 : vector<8x128xf32>
    %454 = arith.mulf %449, %453 : vector<8x128xf32>
    %c5_i32_134 = arith.constant 5 : i32
    %c8_i32_135 = arith.constant 8 : i32
    %455 = arith.muli %c5_i32_134, %c8_i32_135 : i32
    %456 = tpu.assume_multiple %455, 8 : i32
    %457 = arith.index_cast %456 : i32 to index
    %c0_136 = arith.constant 0 : index
    %458 = vector.load %arg12[%457, %c0_136] : memref<64x512xf32, #tpu.memory_space<vmem>>, vector<8x512xf32>
    %cst_137 = arith.constant dense<0.000000e+00> : vector<8x512xf32>
    %459 = tpu.matmul %454, %295, %cst_137 {dimension_numbers = #tpu.dot_dimension_numbers<[1], [0], [0], [1], [0, 0, 1, 1], [], []>} : vector<8x128xf32>, vector<128x512xf32>, vector<8x512xf32> -> vector<8x512xf32>
    %460 = arith.addf %458, %459 : vector<8x512xf32>
    %461 = vector.extract_strided_slice %460 {offsets = [0, 0], sizes = [8, 128], strides = [1, 1]} : vector<8x512xf32> to vector<8x128xf32>
    %462 = arith.negf %461 : vector<8x128xf32>
    %463 = math.exp %462 : vector<8x128xf32>
    %cst_138 = arith.constant 1.000000e+00 : f32
    %464 = vector.broadcast %cst_138 : f32 to vector<8x128xf32>
    %465 = arith.addf %464, %463 : vector<8x128xf32>
    %466 = arith.divf %464, %465 : vector<8x128xf32>
    %467 = vector.extract_strided_slice %460 {offsets = [0, 128], sizes = [8, 128], strides = [1, 1]} : vector<8x512xf32> to vector<8x128xf32>
    %468 = arith.negf %467 : vector<8x128xf32>
    %469 = math.exp %468 : vector<8x128xf32>
    %cst_139 = arith.constant 1.000000e+00 : f32
    %470 = vector.broadcast %cst_139 : f32 to vector<8x128xf32>
    %471 = arith.addf %470, %469 : vector<8x128xf32>
    %472 = arith.divf %470, %471 : vector<8x128xf32>
    %473 = vector.extract_strided_slice %460 {offsets = [0, 256], sizes = [8, 128], strides = [1, 1]} : vector<8x512xf32> to vector<8x128xf32>
    %474 = math.tanh %473 : vector<8x128xf32>
    %475 = vector.extract_strided_slice %460 {offsets = [0, 384], sizes = [8, 128], strides = [1, 1]} : vector<8x512xf32> to vector<8x128xf32>
    %476 = arith.negf %475 : vector<8x128xf32>
    %477 = math.exp %476 : vector<8x128xf32>
    %cst_140 = arith.constant 1.000000e+00 : f32
    %478 = vector.broadcast %cst_140 : f32 to vector<8x128xf32>
    %479 = arith.addf %478, %477 : vector<8x128xf32>
    %480 = arith.divf %478, %479 : vector<8x128xf32>
    %481 = arith.mulf %472, %452 : vector<8x128xf32>
    %482 = arith.mulf %466, %474 : vector<8x128xf32>
    %483 = arith.addf %481, %482 : vector<8x128xf32>
    %484 = math.tanh %483 : vector<8x128xf32>
    %485 = arith.mulf %480, %484 : vector<8x128xf32>
    %c6_i32_141 = arith.constant 6 : i32
    %c8_i32_142 = arith.constant 8 : i32
    %486 = arith.muli %c6_i32_141, %c8_i32_142 : i32
    %487 = tpu.assume_multiple %486, 8 : i32
    %488 = arith.index_cast %487 : i32 to index
    %c0_143 = arith.constant 0 : index
    %489 = vector.load %arg12[%488, %c0_143] : memref<64x512xf32, #tpu.memory_space<vmem>>, vector<8x512xf32>
    %cst_144 = arith.constant dense<0.000000e+00> : vector<8x512xf32>
    %490 = tpu.matmul %485, %295, %cst_144 {dimension_numbers = #tpu.dot_dimension_numbers<[1], [0], [0], [1], [0, 0, 1, 1], [], []>} : vector<8x128xf32>, vector<128x512xf32>, vector<8x512xf32> -> vector<8x512xf32>
    %491 = arith.addf %489, %490 : vector<8x512xf32>
    %492 = vector.extract_strided_slice %491 {offsets = [0, 0], sizes = [8, 128], strides = [1, 1]} : vector<8x512xf32> to vector<8x128xf32>
    %493 = arith.negf %492 : vector<8x128xf32>
    %494 = math.exp %493 : vector<8x128xf32>
    %cst_145 = arith.constant 1.000000e+00 : f32
    %495 = vector.broadcast %cst_145 : f32 to vector<8x128xf32>
    %496 = arith.addf %495, %494 : vector<8x128xf32>
    %497 = arith.divf %495, %496 : vector<8x128xf32>
    %498 = vector.extract_strided_slice %491 {offsets = [0, 128], sizes = [8, 128], strides = [1, 1]} : vector<8x512xf32> to vector<8x128xf32>
    %499 = arith.negf %498 : vector<8x128xf32>
    %500 = math.exp %499 : vector<8x128xf32>
    %cst_146 = arith.constant 1.000000e+00 : f32
    %501 = vector.broadcast %cst_146 : f32 to vector<8x128xf32>
    %502 = arith.addf %501, %500 : vector<8x128xf32>
    %503 = arith.divf %501, %502 : vector<8x128xf32>
    %504 = vector.extract_strided_slice %491 {offsets = [0, 256], sizes = [8, 128], strides = [1, 1]} : vector<8x512xf32> to vector<8x128xf32>
    %505 = math.tanh %504 : vector<8x128xf32>
    %506 = vector.extract_strided_slice %491 {offsets = [0, 384], sizes = [8, 128], strides = [1, 1]} : vector<8x512xf32> to vector<8x128xf32>
    %507 = arith.negf %506 : vector<8x128xf32>
    %508 = math.exp %507 : vector<8x128xf32>
    %cst_147 = arith.constant 1.000000e+00 : f32
    %509 = vector.broadcast %cst_147 : f32 to vector<8x128xf32>
    %510 = arith.addf %509, %508 : vector<8x128xf32>
    %511 = arith.divf %509, %510 : vector<8x128xf32>
    %512 = arith.mulf %503, %483 : vector<8x128xf32>
    %513 = arith.mulf %497, %505 : vector<8x128xf32>
    %514 = arith.addf %512, %513 : vector<8x128xf32>
    %515 = math.tanh %514 : vector<8x128xf32>
    %516 = arith.mulf %511, %515 : vector<8x128xf32>
    %c7_i32_148 = arith.constant 7 : i32
    %c8_i32_149 = arith.constant 8 : i32
    %517 = arith.muli %c7_i32_148, %c8_i32_149 : i32
    %518 = tpu.assume_multiple %517, 8 : i32
    %519 = arith.index_cast %518 : i32 to index
    %c0_150 = arith.constant 0 : index
    %520 = vector.load %arg12[%519, %c0_150] : memref<64x512xf32, #tpu.memory_space<vmem>>, vector<8x512xf32>
    %cst_151 = arith.constant dense<0.000000e+00> : vector<8x512xf32>
    %521 = tpu.matmul %516, %295, %cst_151 {dimension_numbers = #tpu.dot_dimension_numbers<[1], [0], [0], [1], [0, 0, 1, 1], [], []>} : vector<8x128xf32>, vector<128x512xf32>, vector<8x512xf32> -> vector<8x512xf32>
    %522 = arith.addf %520, %521 : vector<8x512xf32>
    %523 = vector.extract_strided_slice %522 {offsets = [0, 0], sizes = [8, 128], strides = [1, 1]} : vector<8x512xf32> to vector<8x128xf32>
    %524 = arith.negf %523 : vector<8x128xf32>
    %525 = math.exp %524 : vector<8x128xf32>
    %cst_152 = arith.constant 1.000000e+00 : f32
    %526 = vector.broadcast %cst_152 : f32 to vector<8x128xf32>
    %527 = arith.addf %526, %525 : vector<8x128xf32>
    %528 = arith.divf %526, %527 : vector<8x128xf32>
    %529 = vector.extract_strided_slice %522 {offsets = [0, 128], sizes = [8, 128], strides = [1, 1]} : vector<8x512xf32> to vector<8x128xf32>
    %530 = arith.negf %529 : vector<8x128xf32>
    %531 = math.exp %530 : vector<8x128xf32>
    %cst_153 = arith.constant 1.000000e+00 : f32
    %532 = vector.broadcast %cst_153 : f32 to vector<8x128xf32>
    %533 = arith.addf %532, %531 : vector<8x128xf32>
    %534 = arith.divf %532, %533 : vector<8x128xf32>
    %535 = vector.extract_strided_slice %522 {offsets = [0, 256], sizes = [8, 128], strides = [1, 1]} : vector<8x512xf32> to vector<8x128xf32>
    %536 = math.tanh %535 : vector<8x128xf32>
    %537 = vector.extract_strided_slice %522 {offsets = [0, 384], sizes = [8, 128], strides = [1, 1]} : vector<8x512xf32> to vector<8x128xf32>
    %538 = arith.negf %537 : vector<8x128xf32>
    %539 = math.exp %538 : vector<8x128xf32>
    %cst_154 = arith.constant 1.000000e+00 : f32
    %540 = vector.broadcast %cst_154 : f32 to vector<8x128xf32>
    %541 = arith.addf %540, %539 : vector<8x128xf32>
    %542 = arith.divf %540, %541 : vector<8x128xf32>
    %543 = arith.mulf %534, %514 : vector<8x128xf32>
    %544 = arith.mulf %528, %536 : vector<8x128xf32>
    %545 = arith.addf %543, %544 : vector<8x128xf32>
    %546 = math.tanh %545 : vector<8x128xf32>
    %547 = arith.mulf %542, %546 : vector<8x128xf32>
    %c8_i32_155 = arith.constant 8 : i32
    %c1_156 = arith.constant 1 : index
    %c0_157 = arith.constant 0 : index
    %c0_158 = arith.constant 0 : index
    %548 = vector.load %arg10[%c1_156, %c0_157, %c0_158] : memref<2x8x128xf32, #tpu.memory_space<vmem>>, vector<1x8x128xf32>
    %549 = vector.shape_cast %548 : vector<1x8x128xf32> to vector<8x128xf32>
    %550 = vector.shape_cast %547 : vector<8x128xf32> to vector<1x8x128xf32>
    tpu.vector_store %arg10[%c1_156, %c0_157, %c0_158], %550 {strides = array<i32>} : memref<2x8x128xf32, #tpu.memory_space<vmem>>, vector<1x8x128xf32>,
    %c1_159 = arith.constant 1 : index
    %c0_160 = arith.constant 0 : index
    %c0_161 = arith.constant 0 : index
    %551 = vector.load %arg11[%c1_159, %c0_160, %c0_161] : memref<2x8x128xf32, #tpu.memory_space<vmem>>, vector<1x8x128xf32>
    %552 = vector.shape_cast %551 : vector<1x8x128xf32> to vector<8x128xf32>
    %553 = vector.shape_cast %545 : vector<8x128xf32> to vector<1x8x128xf32>
    tpu.vector_store %arg11[%c1_159, %c0_160, %c0_161], %553 {strides = array<i32>} : memref<2x8x128xf32, #tpu.memory_space<vmem>>, vector<1x8x128xf32>,
    %c0_162 = arith.constant 0 : index
    %c0_163 = arith.constant 0 : index
    %554 = vector.load %arg7[%c0_162, %c0_163] : memref<128x128xf32, #tpu.memory_space<vmem>>, vector<128x128xf32>
    %cst_164 = arith.constant dense<0.000000e+00> : vector<8x128xf32>
    %555 = tpu.matmul %547, %554, %cst_164 {dimension_numbers = #tpu.dot_dimension_numbers<[1], [0], [0], [1], [0, 0, 1, 1], [], []>} : vector<8x128xf32>, vector<128x128xf32>, vector<8x128xf32> -> vector<8x128xf32>
    %c0_165 = arith.constant 0 : index
    %c0_166 = arith.constant 0 : index
    %556 = vector.load %arg8[%c0_165, %c0_166] : memref<1x128xf32, #tpu.memory_space<vmem>>, vector<1x128xf32>
    %557 = vector.broadcast %556 : vector<1x128xf32> to vector<8x128xf32>
    %558 = arith.addf %555, %557 : vector<8x128xf32>
    %c0_167 = arith.constant 0 : index
    %c0_168 = arith.constant 0 : index
    %559 = vector.load %arg9[%c0_167, %c0_168] : memref<8x128xf32, #tpu.memory_space<vmem>>, vector<8x128xf32>
    tpu.vector_store %arg9[%c0_167, %c0_168], %558 {strides = array<i32>} : memref<8x128xf32, #tpu.memory_space<vmem>>, vector<8x128xf32>,
    return
  }
  func.func @transform_0(%arg0: i32) -> (i32, i32) {
    %c0_i32 = arith.constant 0 : i32
    %c0_i32_0 = arith.constant 0 : i32
    %c0_i32_1 = arith.constant 0 : i32
    return %c0_i32, %c0_i32_0 : i32, i32
  }
  func.func @transform_1(%arg0: i32) -> (i32, i32, i32) {
    %c0_i32 = arith.constant 0 : i32
    %c0_i32_0 = arith.constant 0 : i32
    %c0_i32_1 = arith.constant 0 : i32
    %c0_i32_2 = arith.constant 0 : i32
    return %c0_i32, %c0_i32_0, %c0_i32_1 : i32, i32, i32
  }
  func.func @transform_2(%arg0: i32) -> (i32, i32, i32) {
    %c0_i32 = arith.constant 0 : i32
    %c0_i32_0 = arith.constant 0 : i32
    %c0_i32_1 = arith.constant 0 : i32
    %c0_i32_2 = arith.constant 0 : i32
    return %c0_i32, %c0_i32_0, %c0_i32_1 : i32, i32, i32
  }
  func.func @transform_3(%arg0: i32) -> (i32, i32, i32) {
    %c0_i32 = arith.constant 0 : i32
    %c0_i32_0 = arith.constant 0 : i32
    %c0_i32_1 = arith.constant 0 : i32
    %c0_i32_2 = arith.constant 0 : i32
    return %c0_i32, %c0_i32_0, %c0_i32_1 : i32, i32, i32
  }
  func.func @transform_4(%arg0: i32) -> (i32, i32, i32) {
    %c0_i32 = arith.constant 0 : i32
    %c0_i32_0 = arith.constant 0 : i32
    %c0_i32_1 = arith.constant 0 : i32
    %c0_i32_2 = arith.constant 0 : i32
    return %c0_i32, %c0_i32_0, %c0_i32_1 : i32, i32, i32
  }
  func.func @transform_5(%arg0: i32) -> (i32, i32, i32) {
    %c0_i32 = arith.constant 0 : i32
    %c0_i32_0 = arith.constant 0 : i32
    %c0_i32_1 = arith.constant 0 : i32
    %c0_i32_2 = arith.constant 0 : i32
    return %c0_i32, %c0_i32_0, %c0_i32_1 : i32, i32, i32
  }
  func.func @transform_6(%arg0: i32) -> (i32, i32) {
    %c0_i32 = arith.constant 0 : i32
    %c0_i32_0 = arith.constant 0 : i32
    %c0_i32_1 = arith.constant 0 : i32
    return %c0_i32, %c0_i32_0 : i32, i32
  }
  func.func @transform_7(%arg0: i32) -> (i32, i32) {
    %c0_i32 = arith.constant 0 : i32
    %c0_i32_0 = arith.constant 0 : i32
    %c0_i32_1 = arith.constant 0 : i32
    return %c0_i32, %c0_i32_0 : i32, i32
  }
  func.func @transform_8(%arg0: i32) -> (i32, i32) {
    %c0_i32 = arith.constant 0 : i32
    %c0_i32_0 = arith.constant 0 : i32
    %c0_i32_1 = arith.constant 0 : i32
    return %c0_i32, %c0_i32_0 : i32, i32
  }
  func.func @transform_9(%arg0: i32) -> (i32, i32, i32) {
    %c0_i32 = arith.constant 0 : i32
    %c0_i32_0 = arith.constant 0 : i32
    %c0_i32_1 = arith.constant 0 : i32
    %c0_i32_2 = arith.constant 0 : i32
    return %c0_i32, %c0_i32_0, %c0_i32_1 : i32, i32, i32
  }
  func.func @transform_10(%arg0: i32) -> (i32, i32, i32) {
    %c0_i32 = arith.constant 0 : i32
    %c0_i32_0 = arith.constant 0 : i32
    %c0_i32_1 = arith.constant 0 : i32
    %c0_i32_2 = arith.constant 0 : i32
    return %c0_i32, %c0_i32_0, %c0_i32_1 : i32, i32, i32
  }
}

</mosaic_0001>

<llo_original>
// kernel: forward.1
$region0: #{forward.1}
  #allocation0 [shape = 'u32[]', space=smem, size = 0x4, offset = 0x4, fixed_abs, tag = 'smem constant byte address 0x4 - core index']
  #allocation1 [shape = 'u32[144,128]{1,0:T(1,128)}', space=vmem, size = 0x12000, scoped, tag = 'internal scratch']
  #allocation2 [shape = 'f32[64,512]{1,0:T(8,128)}', space=vmem, size = 0x20000, scoped, tag = 'scratch operand']
  #allocation3 [shape = 'f32[64,128]{1,0:T(8,128)}', space=vmem, size = 0x8000, scoped, tag = 'scratch operand']
  %s0 = inlined_call_operand.vmem [shape: f32[64,128], index: 0, kind: input, shape index: {}]
  %s1 = inlined_call_operand.vmem [shape: f32[2,8,128], index: 1, kind: input, shape index: {}]
  %s2 = inlined_call_operand.vmem [shape: f32[2,8,128], index: 2, kind: input, shape index: {}]
  %s3 = inlined_call_operand.hbm [shape: f32[2,128,512], index: 3, kind: input, shape index: {}]
  %s4 = inlined_call_operand.hbm [shape: f32[2,128,512], index: 4, kind: input, shape index: {}]
  %s5 = inlined_call_operand.vmem [shape: f32[2,1,512], index: 5, kind: input, shape index: {}]
  %s6 = inlined_call_operand.vmem [shape: f32[128,128], index: 6, kind: input, shape index: {}]
  %s7 = inlined_call_operand.vmem [shape: f32[1,128], index: 7, kind: input, shape index: {}]
  %s8 = inlined_call_operand.vmem [shape: f32[8,128], index: 8, kind: output, shape index: {0}]
  %s9 = inlined_call_operand.vmem [shape: f32[2,8,128], index: 9, kind: output, shape index: {1}]
  %s10 = inlined_call_operand.vmem [shape: f32[2,8,128], index: 10, kind: output, shape index: {2}]
  %11 = xla_tuple %s8, %s9, %s10
  %s12 = sld [smem:[#allocation0]]
  $region66: #{forward.1} parent=0
    _
  %s14 = ssub.s32 1, %s12
  %s15 = scalar_select 0, %s14, %s12
  $region1: #{forward.1} parent=0
    #allocation4 [shape = 'u8[524288]{0}', space=vmem, size = 0x80000, scoped, tag = 'input window, operand 3, single buffered']
    #allocation5 [shape = 's32[1]{0}', space=sflag, size = 0x4, scoped, tag = 'scoped memory for forward.1']
    #allocation6 [shape = 'u8[524288]{0}', space=vmem, size = 0x80000, scoped, tag = 'input window, operand 4, single buffered']
    #allocation7 [shape = 's32[1]{0}', space=sflag, size = 0x4, scoped, tag = 'scoped memory for forward.1']
    %16 = vsyncpa [#allocation5], 0
    %17 = vsyncpa [#allocation7], 0
    // Predicated region
    $region2: #{forward.1} parent=1 // pred_check
      _
    $region3: #{forward.1} parent=1 // pred_check_branch
      %19 = sbr.rel (0) target = $region5
    $region4: #{forward.1} parent=1 // pred_region
      _
    $region5: #{forward.1} parent=1 // pred_fallthru
      _
    // Predicated region
    $region6: #{forward.1} parent=1 // pred_check
      _
    $region7: #{forward.1} parent=1 // pred_check_branch
      %21 = sbr.rel (0) target = $region9
    $region8: #{forward.1} parent=1 // pred_region
      _
    $region9: #{forward.1} parent=1 // pred_fallthru
      _
    // Predicated region
    $region10: #{forward.1} parent=1 // pred_check
      _
    $region11: #{forward.1} parent=1 // pred_check_branch
      %23 = sbr.rel (0) target = $region13
    $region12: #{forward.1} parent=1 // pred_region
      _
    $region13: #{forward.1} parent=1 // pred_fallthru
      _
    // Predicated region
    $region14: #{forward.1} parent=1 // pred_check
      _
    $region15: #{forward.1} parent=1 // pred_check_branch
      %25 = sbr.rel (0) target = $region17
    $region16: #{forward.1} parent=1 // pred_region
      %s27 = ssub.s32 16384, 16384
      %28 = vsyncadd [#allocation5], %s27
      %s29 = sshll.u32 [#allocation4], 4
      %s30 = int_to_ptr.vmem [resolvable:$true] %s29
      %35 = dma.hbm_to_vmem [thread:$0]  %s3, 16384, %s30, [#allocation5], 512, 512, 32
    $region17: #{forward.1} parent=1 // pred_fallthru
      _
    // Predicated region
    $region18: #{forward.1} parent=1 // pred_check
      _
    $region19: #{forward.1} parent=1 // pred_check_branch
      %37 = sbr.rel (0) target = $region21
    $region20: #{forward.1} parent=1 // pred_region
      %s39 = ssub.s32 16384, 16384
      %40 = vsyncadd [#allocation7], %s39
      %s41 = sshll.u32 [#allocation6], 4
      %s42 = int_to_ptr.vmem [resolvable:$true] %s41
      %47 = dma.hbm_to_vmem [thread:$0]  %s4, 16384, %s42, [#allocation7], 512, 512, 32
    $region21: #{forward.1} parent=1 // pred_fallthru
      _
    // Predicated region
    $region22: #{forward.1} parent=1 // pred_check
      _
    $region23: #{forward.1} parent=1 // pred_check_branch
      %49 = sbr.rel (0) target = $region25
    $region24: #{forward.1} parent=1 // pred_region
      _
    $region25: #{forward.1} parent=1 // pred_fallthru
      _
    // Predicated region
    $region26: #{forward.1} parent=1 // pred_check
      _
    $region27: #{forward.1} parent=1 // pred_check_branch
      %51 = sbr.rel (0) target = $region29
    $region28: #{forward.1} parent=1 // pred_region
      _
    $region29: #{forward.1} parent=1 // pred_fallthru
      _
    // Predicated region
    $region30: #{forward.1} parent=1 // pred_check
      _
    $region31: #{forward.1} parent=1 // pred_check_branch
      %53 = sbr.rel (0) target = $region33
    $region32: #{forward.1} parent=1 // pred_region
      _
    $region33: #{forward.1} parent=1 // pred_fallthru
      _
    // Predicated region
    $region34: #{forward.1} parent=1 // pred_check
      _
    $region35: #{forward.1} parent=1 // pred_check_branch
      %55 = sbr.rel (0) target = $region37
    $region36: #{forward.1} parent=1 // pred_region
      %56 = dma.done [#allocation5], 16384
    $region37: #{forward.1} parent=1 // pred_fallthru
      _
    // Predicated region
    $region38: #{forward.1} parent=1 // pred_check
      _
    $region39: #{forward.1} parent=1 // pred_check_branch
      %58 = sbr.rel (0) target = $region41
    $region40: #{forward.1} parent=1 // pred_region
      %59 = dma.done [#allocation7], 16384
    $region41: #{forward.1} parent=1 // pred_fallthru
      _
    %v60 = vld [vmem:[%s0] sm:$0xff]
    %v61 = vld [vmem:[%s0 + $0x8] sm:$0xff]
    %v62 = vld [vmem:[%s0 + $0x10] sm:$0xff]
    %v63 = vld [vmem:[%s0 + $0x18] sm:$0xff]
    %v64 = vld [vmem:[%s0 + $0x20] sm:$0xff]
    %v65 = vld [vmem:[%s0 + $0x28] sm:$0xff]
    %v66 = vld [vmem:[%s0 + $0x30] sm:$0xff]
    %v67 = vld [vmem:[%s0 + $0x38] sm:$0xff]
    %v68 = vld [vmem:[#allocation4] sm:$0xff]
    %v69 = vld [vmem:[#allocation4 + $0x8] sm:$0xff]
    %v70 = vld [vmem:[#allocation4 + $0x10] sm:$0xff]
    %v71 = vld [vmem:[#allocation4 + $0x18] sm:$0xff]
    %v72 = vld [vmem:[#allocation4 + $0x20] sm:$0xff]
    %v73 = vld [vmem:[#allocation4 + $0x28] sm:$0xff]
    %v74 = vld [vmem:[#allocation4 + $0x30] sm:$0xff]
    %v75 = vld [vmem:[#allocation4 + $0x38] sm:$0xff]
    %v76 = vld [vmem:[#allocation4 + $0x40] sm:$0xff]
    %v77 = vld [vmem:[#allocation4 + $0x48] sm:$0xff]
    %v78 = vld [vmem:[#allocation4 + $0x50] sm:$0xff]
    %v79 = vld [vmem:[#allocation4 + $0x58] sm:$0xff]
    %v80 = vld [vmem:[#allocation4 + $0x60] sm:$0xff]
    %v81 = vld [vmem:[#allocation4 + $0x68] sm:$0xff]
    %v82 = vld [vmem:[#allocation4 + $0x70] sm:$0xff]
    %v83 = vld [vmem:[#allocation4 + $0x78] sm:$0xff]
    %v84 = vld [vmem:[#allocation4 + $0x80] sm:$0xff]
    %v85 = vld [vmem:[#allocation4 + $0x88] sm:$0xff]
    %v86 = vld [vmem:[#allocation4 + $0x90] sm:$0xff]
    %v87 = vld [vmem:[#allocation4 + $0x98] sm:$0xff]
    %v88 = vld [vmem:[#allocation4 + $0xa0] sm:$0xff]
    %v89 = vld [vmem:[#allocation4 + $0xa8] sm:$0xff]
    %v90 = vld [vmem:[#allocation4 + $0xb0] sm:$0xff]
    %v91 = vld [vmem:[#allocation4 + $0xb8] sm:$0xff]
    %v92 = vld [vmem:[#allocation4 + $0xc0] sm:$0xff]
    %v93 = vld [vmem:[#allocation4 + $0xc8] sm:$0xff]
    %v94 = vld [vmem:[#allocation4 + $0xd0] sm:$0xff]
    %v95 = vld [vmem:[#allocation4 + $0xd8] sm:$0xff]
    %v96 = vld [vmem:[#allocation4 + $0xe0] sm:$0xff]
    %v97 = vld [vmem:[#allocation4 + $0xe8] sm:$0xff]
    %v98 = vld [vmem:[#allocation4 + $0xf0] sm:$0xff]
    %v99 = vld [vmem:[#allocation4 + $0xf8] sm:$0xff]
    %v100 = vld [vmem:[#allocation4 + $0x100] sm:$0xff]
    %v101 = vld [vmem:[#allocation4 + $0x108] sm:$0xff]
    %v102 = vld [vmem:[#allocation4 + $0x110] sm:$0xff]
    %v103 = vld [vmem:[#allocation4 + $0x118] sm:$0xff]
    %v104 = vld [vmem:[#allocation4 + $0x120] sm:$0xff]
    %v105 = vld [vmem:[#allocation4 + $0x128] sm:$0xff]
    %v106 = vld [vmem:[#allocation4 + $0x130] sm:$0xff]
    %v107 = vld [vmem:[#allocation4 + $0x138] sm:$0xff]
    %v108 = vld [vmem:[#allocation4 + $0x140] sm:$0xff]
    %v109 = vld [vmem:[#allocation4 + $0x148] sm:$0xff]
    %v110 = vld [vmem:[#allocation4 + $0x150] sm:$0xff]
    %v111 = vld [vmem:[#allocation4 + $0x158] sm:$0xff]
    %v112 = vld [vmem:[#allocation4 + $0x160] sm:$0xff]
    %v113 = vld [vmem:[#allocation4 + $0x168] sm:$0xff]
    %v114 = vld [vmem:[#allocation4 + $0x170] sm:$0xff]
    %v115 = vld [vmem:[#allocation4 + $0x178] sm:$0xff]
    %v116 = vld [vmem:[#allocation4 + $0x180] sm:$0xff]
    %v117 = vld [vmem:[#allocation4 + $0x188] sm:$0xff]
    %v118 = vld [vmem:[#allocation4 + $0x190] sm:$0xff]
    %v119 = vld [vmem:[#allocation4 + $0x198] sm:$0xff]
    %v120 = vld [vmem:[#allocation4 + $0x1a0] sm:$0xff]
    %v121 = vld [vmem:[#allocation4 + $0x1a8] sm:$0xff]
    %v122 = vld [vmem:[#allocation4 + $0x1b0] sm:$0xff]
    %v123 = vld [vmem:[#allocation4 + $0x1b8] sm:$0xff]
    %v124 = vld [vmem:[#allocation4 + $0x1c0] sm:$0xff]
    %v125 = vld [vmem:[#allocation4 + $0x1c8] sm:$0xff]
    %v126 = vld [vmem:[#allocation4 + $0x1d0] sm:$0xff]
    %v127 = vld [vmem:[#allocation4 + $0x1d8] sm:$0xff]
    %v128 = vld [vmem:[#allocation4 + $0x1e0] sm:$0xff]
    %v129 = vld [vmem:[#allocation4 + $0x1e8] sm:$0xff]
    %v130 = vld [vmem:[#allocation4 + $0x1f0] sm:$0xff]
    %v131 = vld [vmem:[#allocation4 + $0x1f8] sm:$0xff]
    %v132 = vld [vmem:[%s5] sm:$0xf]
    %v134 = vlaneseq
    %v135 = vshrl.u32 %v134, 7
    %v136 = vsub.s32 0, %v135
    %v137 = vrot.slane %v132, %v136
    %v138 = vlaneseq
    %v139 = vshrl.u32 %v138, 7
    %v140 = vsub.s32 1, %v139
    %v141 = vrot.slane %v132, %v140
    %v142 = vlaneseq
    %v143 = vshrl.u32 %v142, 7
    %v144 = vsub.s32 2, %v143
    %v145 = vrot.slane %v132, %v144
    %v146 = vlaneseq
    %v147 = vshrl.u32 %v146, 7
    %v148 = vsub.s32 3, %v147
    %v149 = vrot.slane %v132, %v148
    %154 = vmatprep.subr.mxu0 %v69
    %155 = vmatpush1.msra.mxu0 %v68
    %156 = vmatprep.subr.mxu0 %v73
    %157 = vmatpush1.msra.mxu0 %v72
    %158 = vmatprep.subr.mxu0 %v77
    %159 = vmatpush1.msra.mxu0 %v76
    %160 = vmatprep.subr.mxu0 %v81
    %161 = vmatpush1.msra.mxu0 %v80
    %162 = vmatprep.subr.mxu0 %v85
    %163 = vmatpush1.msra.mxu0 %v84
    %164 = vmatprep.subr.mxu0 %v89
    %165 = vmatpush1.msra.mxu0 %v88
    %166 = vmatprep.subr.mxu0 %v93
    %167 = vmatpush1.msra.mxu0 %v92
    %168 = vmatprep.subr.mxu0 %v97
    %169 = vmatpush1.msra.mxu0 %v96
    %170 = vmatprep.subr.mxu0 %v101
    %171 = vmatpush1.msra.mxu0 %v100
    %172 = vmatprep.subr.mxu0 %v105
    %173 = vmatpush1.msra.mxu0 %v104
    %174 = vmatprep.subr.mxu0 %v109
    %175 = vmatpush1.msra.mxu0 %v108
    %176 = vmatprep.subr.mxu0 %v113
    %177 = vmatpush1.msra.mxu0 %v112
    %178 = vmatprep.subr.mxu0 %v117
    %179 = vmatpush1.msra.mxu0 %v116
    %180 = vmatprep.subr.mxu0 %v121
    %181 = vmatpush1.msra.mxu0 %v120
    %182 = vmatprep.subr.mxu0 %v125
    %183 = vmatpush1.msra.mxu0 %v124
    %184 = vmatprep.subr.mxu0 %v129
    %185 = vmatpush1.msra.mxu0 %v128
    %186 = vmatprep.subr.mxu0 0.0
    %187 = vmatpush1.msra.mxu0 0.0
    %188 = vmatprep.subr.mxu0 0.0
    %189 = vmatpush1.msra.mxu0 0.0
    %190 = vmatprep.subr.mxu0 0.0
    %191 = vmatpush1.msra.mxu0 0.0
    %192 = vmatprep.subr.mxu0 0.0
    %193 = vmatpush1.msra.mxu0 0.0
    %194 = vmatprep.subr.mxu0 0.0
    %195 = vmatpush1.msra.mxu0 0.0
    %196 = vmatprep.subr.mxu0 0.0
    %197 = vmatpush1.msra.mxu0 0.0
    %198 = vmatprep.subr.mxu0 0.0
    %199 = vmatpush1.msra.mxu0 0.0
    %200 = vmatprep.subr.mxu0 0.0
    %201 = vmatpush1.msra.mxu0 0.0
    %202 = vmatprep.subr.mxu0 0.0
    %203 = vmatpush1.msra.mxu0 0.0
    %204 = vmatprep.subr.mxu0 0.0
    %205 = vmatpush1.msra.mxu0 0.0
    %206 = vmatprep.subr.mxu0 0.0
    %207 = vmatpush1.msra.mxu0 0.0
    %208 = vmatprep.subr.mxu0 0.0
    %209 = vmatpush1.msra.mxu0 0.0
    %210 = vmatprep.subr.mxu0 0.0
    %211 = vmatpush1.msra.mxu0 0.0
    %212 = vmatprep.subr.mxu0 0.0
    %213 = vmatpush1.msra.mxu0 0.0
    %214 = vmatprep.subr.mxu0 0.0
    %215 = vmatpush1.msra.mxu0 0.0
    %216 = vmatprep.subr.mxu0 0.0
    %217 = vmatpush1.msra.mxu0 0.0
    %218 = vmatprep.mubr.f32.mxu0 0.0
    %219 = vmatmul.mubr.f32.gmra.mrb[0].mxu0 %v60
    %v220 = vpop.f32.mrb[0].mxu0
    %v221 = vadd.f32 %v137, %v220
    %v222 = vpop.f32.mrb[0].mxu0
    %v223 = vadd.f32 %v141, %v222
    %224 = vmatprep.mubr.f32.mxu0 0.0
    %225 = vmatmul.mubr.f32.gmra.mrb[0].mxu0 %v61
    %v226 = vpop.f32.mrb[0].mxu0
    %v227 = vadd.f32 %v137, %v226
    %v228 = vpop.f32.mrb[0].mxu0
    %v229 = vadd.f32 %v141, %v228
    %230 = vmatprep.mubr.f32.mxu0 0.0
    %231 = vmatmul.mubr.f32.gmra.mrb[0].mxu0 %v62
    %v232 = vpop.f32.mrb[0].mxu0
    %v233 = vadd.f32 %v137, %v232
    %v234 = vpop.f32.mrb[0].mxu0
    %v235 = vadd.f32 %v141, %v234
    %236 = vmatprep.mubr.f32.mxu0 0.0
    %237 = vmatmul.mubr.f32.gmra.mrb[0].mxu0 %v63
    %v238 = vpop.f32.mrb[0].mxu0
    %v239 = vadd.f32 %v137, %v238
    %v240 = vpop.f32.mrb[0].mxu0
    %v241 = vadd.f32 %v141, %v240
    %242 = vmatprep.mubr.f32.mxu0 0.0
    %243 = vmatmul.mubr.f32.gmra.mrb[0].mxu0 %v64
    %v244 = vpop.f32.mrb[0].mxu0
    %v245 = vadd.f32 %v137, %v244
    %v246 = vpop.f32.mrb[0].mxu0
    %v247 = vadd.f32 %v141, %v246
    %248 = vmatprep.mubr.f32.mxu0 0.0
    %249 = vmatmul.mubr.f32.gmra.mrb[0].mxu0 %v65
    %v250 = vpop.f32.mrb[0].mxu0
    %v251 = vadd.f32 %v137, %v250
    %v252 = vpop.f32.mrb[0].mxu0
    %v253 = vadd.f32 %v141, %v252
    %254 = vmatprep.mubr.f32.mxu0 0.0
    %255 = vmatmul.mubr.f32.gmra.mrb[0].mxu0 %v66
    %v256 = vpop.f32.mrb[0].mxu0
    %v257 = vadd.f32 %v137, %v256
    %v258 = vpop.f32.mrb[0].mxu0
    %v259 = vadd.f32 %v141, %v258
    %260 = vmatprep.mubr.f32.mxu0 0.0
    %261 = vmatmul.mubr.f32.gmra.mrb[0].mxu0 %v67
    %v262 = vpop.f32.mrb[0].mxu0
    %v263 = vadd.f32 %v137, %v262
    %v264 = vpop.f32.mrb[0].mxu0
    %v265 = vadd.f32 %v141, %v264
    %266 = vdwg.mxu0
    %267 = vmatprep.subr.mxu0 %v71
    %268 = vmatpush1.msra.mxu0 %v70
    %269 = vmatprep.subr.mxu0 %v75
    %270 = vmatpush1.msra.mxu0 %v74
    %271 = vmatprep.subr.mxu0 %v79
    %272 = vmatpush1.msra.mxu0 %v78
    %273 = vmatprep.subr.mxu0 %v83
    %274 = vmatpush1.msra.mxu0 %v82
    %275 = vmatprep.subr.mxu0 %v87
    %276 = vmatpush1.msra.mxu0 %v86
    %277 = vmatprep.subr.mxu0 %v91
    %278 = vmatpush1.msra.mxu0 %v90
    %279 = vmatprep.subr.mxu0 %v95
    %280 = vmatpush1.msra.mxu0 %v94
    %281 = vmatprep.subr.mxu0 %v99
    %282 = vmatpush1.msra.mxu0 %v98
    %283 = vmatprep.subr.mxu0 %v103
    %284 = vmatpush1.msra.mxu0 %v102
    %285 = vmatprep.subr.mxu0 %v107
    %286 = vmatpush1.msra.mxu0 %v106
    %287 = vmatprep.subr.mxu0 %v111
    %288 = vmatpush1.msra.mxu0 %v110
    %289 = vmatprep.subr.mxu0 %v115
    %290 = vmatpush1.msra.mxu0 %v114
    %291 = vmatprep.subr.mxu0 %v119
    %292 = vmatpush1.msra.mxu0 %v118
    %293 = vmatprep.subr.mxu0 %v123
    %294 = vmatpush1.msra.mxu0 %v122
    %295 = vmatprep.subr.mxu0 %v127
    %296 = vmatpush1.msra.mxu0 %v126
    %297 = vmatprep.subr.mxu0 %v131
    %298 = vmatpush1.msra.mxu0 %v130
    %299 = vmatprep.subr.mxu0 0.0
    %300 = vmatpush1.msra.mxu0 0.0
    %301 = vmatprep.subr.mxu0 0.0
    %302 = vmatpush1.msra.mxu0 0.0
    %303 = vmatprep.subr.mxu0 0.0
    %304 = vmatpush1.msra.mxu0 0.0
    %305 = vmatprep.subr.mxu0 0.0
    %306 = vmatpush1.msra.mxu0 0.0
    %307 = vmatprep.subr.mxu0 0.0
    %308 = vmatpush1.msra.mxu0 0.0
    %309 = vmatprep.subr.mxu0 0.0
    %310 = vmatpush1.msra.mxu0 0.0
    %311 = vmatprep.subr.mxu0 0.0
    %312 = vmatpush1.msra.mxu0 0.0
    %313 = vmatprep.subr.mxu0 0.0
    %314 = vmatpush1.msra.mxu0 0.0
    %315 = vmatprep.subr.mxu0 0.0
    %316 = vmatpush1.msra.mxu0 0.0
    %317 = vmatprep.subr.mxu0 0.0
    %318 = vmatpush1.msra.mxu0 0.0
    %319 = vmatprep.subr.mxu0 0.0
    %320 = vmatpush1.msra.mxu0 0.0
    %321 = vmatprep.subr.mxu0 0.0
    %322 = vmatpush1.msra.mxu0 0.0
    %323 = vmatprep.subr.mxu0 0.0
    %324 = vmatpush1.msra.mxu0 0.0
    %325 = vmatprep.subr.mxu0 0.0
    %326 = vmatpush1.msra.mxu0 0.0
    %327 = vmatprep.subr.mxu0 0.0
    %328 = vmatpush1.msra.mxu0 0.0
    %329 = vmatprep.subr.mxu0 0.0
    %330 = vmatpush1.msra.mxu0 0.0
    %331 = vmatprep.mubr.f32.mxu0 0.0
    %332 = vmatmul.mubr.f32.gmra.mrb[0].mxu0 %v60
    %v333 = vpop.f32.mrb[0].mxu0
    %v334 = vadd.f32 %v145, %v333
    %v335 = vpop.f32.mrb[0].mxu0
    %v336 = vadd.f32 %v149, %v335
    %337 = vmatprep.mubr.f32.mxu0 0.0
    %338 = vmatmul.mubr.f32.gmra.mrb[0].mxu0 %v61
    %v339 = vpop.f32.mrb[0].mxu0
    %v340 = vadd.f32 %v145, %v339
    %v341 = vpop.f32.mrb[0].mxu0
    %v342 = vadd.f32 %v149, %v341
    %343 = vmatprep.mubr.f32.mxu0 0.0
    %344 = vmatmul.mubr.f32.gmra.mrb[0].mxu0 %v62
    %v345 = vpop.f32.mrb[0].mxu0
    %v346 = vadd.f32 %v145, %v345
    %v347 = vpop.f32.mrb[0].mxu0
    %v348 = vadd.f32 %v149, %v347
    %349 = vmatprep.mubr.f32.mxu0 0.0
    %350 = vmatmul.mubr.f32.gmra.mrb[0].mxu0 %v63
    %v351 = vpop.f32.mrb[0].mxu0
    %v352 = vadd.f32 %v145, %v351
    %v353 = vpop.f32.mrb[0].mxu0
    %v354 = vadd.f32 %v149, %v353
    %355 = vmatprep.mubr.f32.mxu0 0.0
    %356 = vmatmul.mubr.f32.gmra.mrb[0].mxu0 %v64
    %v357 = vpop.f32.mrb[0].mxu0
    %v358 = vadd.f32 %v145, %v357
    %v359 = vpop.f32.mrb[0].mxu0
    %v360 = vadd.f32 %v149, %v359
    %361 = vmatprep.mubr.f32.mxu0 0.0
    %362 = vmatmul.mubr.f32.gmra.mrb[0].mxu0 %v65
    %v363 = vpop.f32.mrb[0].mxu0
    %v364 = vadd.f32 %v145, %v363
    %v365 = vpop.f32.mrb[0].mxu0
    %v366 = vadd.f32 %v149, %v365
    %367 = vmatprep.mubr.f32.mxu0 0.0
    %368 = vmatmul.mubr.f32.gmra.mrb[0].mxu0 %v66
    %v369 = vpop.f32.mrb[0].mxu0
    %v370 = vadd.f32 %v145, %v369
    %v371 = vpop.f32.mrb[0].mxu0
    %v372 = vadd.f32 %v149, %v371
    %373 = vmatprep.mubr.f32.mxu0 0.0
    %374 = vmatmul.mubr.f32.gmra.mrb[0].mxu0 %v67
    %v375 = vpop.f32.mrb[0].mxu0
    %v376 = vadd.f32 %v145, %v375
    %v377 = vpop.f32.mrb[0].mxu0
    %v378 = vadd.f32 %v149, %v377
    %379 = vdwg.mxu0
    %380 = vst [vmem:[#allocation2] sm:$0xff] %v221
    %381 = vst [vmem:[#allocation2 + $0x8] sm:$0xff] %v223
    %382 = vst [vmem:[#allocation2 + $0x10] sm:$0xff] %v334
    %383 = vst [vmem:[#allocation2 + $0x18] sm:$0xff] %v336
    %384 = vst [vmem:[#allocation2 + $0x20] sm:$0xff] %v227
    %385 = vst [vmem:[#allocation2 + $0x28] sm:$0xff] %v229
    %386 = vst [vmem:[#allocation2 + $0x30] sm:$0xff] %v340
    %387 = vst [vmem:[#allocation2 + $0x38] sm:$0xff] %v342
    %388 = vst [vmem:[#allocation2 + $0x40] sm:$0xff] %v233
    %389 = vst [vmem:[#allocation2 + $0x48] sm:$0xff] %v235
    %390 = vst [vmem:[#allocation2 + $0x50] sm:$0xff] %v346
    %391 = vst [vmem:[#allocation2 + $0x58] sm:$0xff] %v348
    %392 = vst [vmem:[#allocation2 + $0x60] sm:$0xff] %v239
    %393 = vst [vmem:[#allocation2 + $0x68] sm:$0xff] %v241
    %394 = vst [vmem:[#allocation2 + $0x70] sm:$0xff] %v352
    %395 = vst [vmem:[#allocation2 + $0x78] sm:$0xff] %v354
    %396 = vst [vmem:[#allocation2 + $0x80] sm:$0xff] %v245
    %397 = vst [vmem:[#allocation2 + $0x88] sm:$0xff] %v247
    %398 = vst [vmem:[#allocation2 + $0x90] sm:$0xff] %v358
    %399 = vst [vmem:[#allocation2 + $0x98] sm:$0xff] %v360
    %400 = vst [vmem:[#allocation2 + $0xa0] sm:$0xff] %v251
    %401 = vst [vmem:[#allocation2 + $0xa8] sm:$0xff] %v253
    %402 = vst [vmem:[#allocation2 + $0xb0] sm:$0xff] %v364
    %403 = vst [vmem:[#allocation2 + $0xb8] sm:$0xff] %v366
    %404 = vst [vmem:[#allocation2 + $0xc0] sm:$0xff] %v257
    %405 = vst [vmem:[#allocation2 + $0xc8] sm:$0xff] %v259
    %406 = vst [vmem:[#allocation2 + $0xd0] sm:$0xff] %v370
    %407 = vst [vmem:[#allocation2 + $0xd8] sm:$0xff] %v372
    %408 = vst [vmem:[#allocation2 + $0xe0] sm:$0xff] %v263
    %409 = vst [vmem:[#allocation2 + $0xe8] sm:$0xff] %v265
    %410 = vst [vmem:[#allocation2 + $0xf0] sm:$0xff] %v376
    %411 = vst [vmem:[#allocation2 + $0xf8] sm:$0xff] %v378
    %v412 = vld [vmem:[#allocation6] sm:$0xff]
    %v413 = vld [vmem:[#allocation6 + $0x8] sm:$0xff]
    %v414 = vld [vmem:[#allocation6 + $0x10] sm:$0xff]
    %v415 = vld [vmem:[#allocation6 + $0x18] sm:$0xff]
    %v416 = vld [vmem:[#allocation6 + $0x20] sm:$0xff]
    %v417 = vld [vmem:[#allocation6 + $0x28] sm:$0xff]
    %v418 = vld [vmem:[#allocation6 + $0x30] sm:$0xff]
    %v419 = vld [vmem:[#allocation6 + $0x38] sm:$0xff]
    %v420 = vld [vmem:[#allocation6 + $0x40] sm:$0xff]
    %v421 = vld [vmem:[#allocation6 + $0x48] sm:$0xff]
    %v422 = vld [vmem:[#allocation6 + $0x50] sm:$0xff]
    %v423 = vld [vmem:[#allocation6 + $0x58] sm:$0xff]
    %v424 = vld [vmem:[#allocation6 + $0x60] sm:$0xff]
    %v425 = vld [vmem:[#allocation6 + $0x68] sm:$0xff]
    %v426 = vld [vmem:[#allocation6 + $0x70] sm:$0xff]
    %v427 = vld [vmem:[#allocation6 + $0x78] sm:$0xff]
    %v428 = vld [vmem:[#allocation6 + $0x80] sm:$0xff]
    %v429 = vld [vmem:[#allocation6 + $0x88] sm:$0xff]
    %v430 = vld [vmem:[#allocation6 + $0x90] sm:$0xff]
    %v431 = vld [vmem:[#allocation6 + $0x98] sm:$0xff]
    %v432 = vld [vmem:[#allocation6 + $0xa0] sm:$0xff]
    %v433 = vld [vmem:[#allocation6 + $0xa8] sm:$0xff]
    %v434 = vld [vmem:[#allocation6 + $0xb0] sm:$0xff]
    %v435 = vld [vmem:[#allocation6 + $0xb8] sm:$0xff]
    %v436 = vld [vmem:[#allocation6 + $0xc0] sm:$0xff]
    %v437 = vld [vmem:[#allocation6 + $0xc8] sm:$0xff]
    %v438 = vld [vmem:[#allocation6 + $0xd0] sm:$0xff]
    %v439 = vld [vmem:[#allocation6 + $0xd8] sm:$0xff]
    %v440 = vld [vmem:[#allocation6 + $0xe0] sm:$0xff]
    %v441 = vld [vmem:[#allocation6 + $0xe8] sm:$0xff]
    %v442 = vld [vmem:[#allocation6 + $0xf0] sm:$0xff]
    %v443 = vld [vmem:[#allocation6 + $0xf8] sm:$0xff]
    %v444 = vld [vmem:[#allocation6 + $0x100] sm:$0xff]
    %v445 = vld [vmem:[#allocation6 + $0x108] sm:$0xff]
    %v446 = vld [vmem:[#allocation6 + $0x110] sm:$0xff]
    %v447 = vld [vmem:[#allocation6 + $0x118] sm:$0xff]
    %v448 = vld [vmem:[#allocation6 + $0x120] sm:$0xff]
    %v449 = vld [vmem:[#allocation6 + $0x128] sm:$0xff]
    %v450 = vld [vmem:[#allocation6 + $0x130] sm:$0xff]
    %v451 = vld [vmem:[#allocation6 + $0x138] sm:$0xff]
    %v452 = vld [vmem:[#allocation6 + $0x140] sm:$0xff]
    %v453 = vld [vmem:[#allocation6 + $0x148] sm:$0xff]
    %v454 = vld [vmem:[#allocation6 + $0x150] sm:$0xff]
    %v455 = vld [vmem:[#allocation6 + $0x158] sm:$0xff]
    %v456 = vld [vmem:[#allocation6 + $0x160] sm:$0xff]
    %v457 = vld [vmem:[#allocation6 + $0x168] sm:$0xff]
    %v458 = vld [vmem:[#allocation6 + $0x170] sm:$0xff]
    %v459 = vld [vmem:[#allocation6 + $0x178] sm:$0xff]
    %v460 = vld [vmem:[#allocation6 + $0x180] sm:$0xff]
    %v461 = vld [vmem:[#allocation6 + $0x188] sm:$0xff]
    %v462 = vld [vmem:[#allocation6 + $0x190] sm:$0xff]
    %v463 = vld [vmem:[#allocation6 + $0x198] sm:$0xff]
    %v464 = vld [vmem:[#allocation6 + $0x1a0] sm:$0xff]
    %v465 = vld [vmem:[#allocation6 + $0x1a8] sm:$0xff]
    %v466 = vld [vmem:[#allocation6 + $0x1b0] sm:$0xff]
    %v467 = vld [vmem:[#allocation6 + $0x1b8] sm:$0xff]
    %v468 = vld [vmem:[#allocation6 + $0x1c0] sm:$0xff]
    %v469 = vld [vmem:[#allocation6 + $0x1c8] sm:$0xff]
    %v470 = vld [vmem:[#allocation6 + $0x1d0] sm:$0xff]
    %v471 = vld [vmem:[#allocation6 + $0x1d8] sm:$0xff]
    %v472 = vld [vmem:[#allocation6 + $0x1e0] sm:$0xff]
    %v473 = vld [vmem:[#allocation6 + $0x1e8] sm:$0xff]
    %v474 = vld [vmem:[#allocation6 + $0x1f0] sm:$0xff]
    %v475 = vld [vmem:[#allocation6 + $0x1f8] sm:$0xff]
    %v476 = vld [vmem:[%s1] sm:$0xff]
    %v477 = vld [vmem:[%s2] sm:$0xff]
    %s478 = smul.u32 0, 4
    %s479 = smul.addr %s478, 8
    %s480 = scalar_lea.vmem [#allocation2], %s479
    %v481 = vld [vmem:[%s480] sm:$0xff]
    %v482 = vld [vmem:[%s480 + $0x8] sm:$0xff]
    %v483 = vld [vmem:[%s480 + $0x10] sm:$0xff]
    %v484 = vld [vmem:[%s480 + $0x18] sm:$0xff]
    %485 = vmatprep.subr.mxu0 %v413
    %486 = vmatpush1.msra.mxu0 %v412
    %487 = vmatprep.subr.mxu0 %v417
    %488 = vmatpush1.msra.mxu0 %v416
    %489 = vmatprep.subr.mxu0 %v421
    %490 = vmatpush1.msra.mxu0 %v420
    %491 = vmatprep.subr.mxu0 %v425
    %492 = vmatpush1.msra.mxu0 %v424
    %493 = vmatprep.subr.mxu0 %v429
    %494 = vmatpush1.msra.mxu0 %v428
    %495 = vmatprep.subr.mxu0 %v433
    %496 = vmatpush1.msra.mxu0 %v432
    %497 = vmatprep.subr.mxu0 %v437
    %498 = vmatpush1.msra.mxu0 %v436
    %499 = vmatprep.subr.mxu0 %v441
    %500 = vmatpush1.msra.mxu0 %v440
    %501 = vmatprep.subr.mxu0 %v445
    %502 = vmatpush1.msra.mxu0 %v444
    %503 = vmatprep.subr.mxu0 %v449
    %504 = vmatpush1.msra.mxu0 %v448
    %505 = vmatprep.subr.mxu0 %v453
    %506 = vmatpush1.msra.mxu0 %v452
    %507 = vmatprep.subr.mxu0 %v457
    %508 = vmatpush1.msra.mxu0 %v456
    %509 = vmatprep.subr.mxu0 %v461
    %510 = vmatpush1.msra.mxu0 %v460
    %511 = vmatprep.subr.mxu0 %v465
    %512 = vmatpush1.msra.mxu0 %v464
    %513 = vmatprep.subr.mxu0 %v469
    %514 = vmatpush1.msra.mxu0 %v468
    %515 = vmatprep.subr.mxu0 %v473
    %516 = vmatpush1.msra.mxu0 %v472
    %517 = vmatprep.subr.mxu0 0.0
    %518 = vmatpush1.msra.mxu0 0.0
    %519 = vmatprep.subr.mxu0 0.0
    %520 = vmatpush1.msra.mxu0 0.0
    %521 = vmatprep.subr.mxu0 0.0
    %522 = vmatpush1.msra.mxu0 0.0
    %523 = vmatprep.subr.mxu0 0.0
    %524 = vmatpush1.msra.mxu0 0.0
    %525 = vmatprep.subr.mxu0 0.0
    %526 = vmatpush1.msra.mxu0 0.0
    %527 = vmatprep.subr.mxu0 0.0
    %528 = vmatpush1.msra.mxu0 0.0
    %529 = vmatprep.subr.mxu0 0.0
    %530 = vmatpush1.msra.mxu0 0.0
    %531 = vmatprep.subr.mxu0 0.0
    %532 = vmatpush1.msra.mxu0 0.0
    %533 = vmatprep.subr.mxu0 0.0
    %534 = vmatpush1.msra.mxu0 0.0
    %535 = vmatprep.subr.mxu0 0.0
    %536 = vmatpush1.msra.mxu0 0.0
    %537 = vmatprep.subr.mxu0 0.0
    %538 = vmatpush1.msra.mxu0 0.0
    %539 = vmatprep.subr.mxu0 0.0
    %540 = vmatpush1.msra.mxu0 0.0
    %541 = vmatprep.subr.mxu0 0.0
    %542 = vmatpush1.msra.mxu0 0.0
    %543 = vmatprep.subr.mxu0 0.0
    %544 = vmatpush1.msra.mxu0 0.0
    %545 = vmatprep.subr.mxu0 0.0
    %546 = vmatpush1.msra.mxu0 0.0
    %547 = vmatprep.subr.mxu0 0.0
    %548 = vmatpush1.msra.mxu0 0.0
    %549 = vmatprep.mubr.f32.mxu0 0.0
    %550 = vmatmul.mubr.f32.gmra.mrb[0].mxu0 %v476
    %v551 = vpop.f32.mrb[0].mxu0
    %v552 = vadd.f32 0.0, %v551
    %v553 = vpop.f32.mrb[0].mxu0
    %v554 = vadd.f32 0.0, %v553
    %555 = vdwg.mxu0
    %556 = vmatprep.subr.mxu0 %v415
    %557 = vmatpush1.msra.mxu0 %v414
    %558 = vmatprep.subr.mxu0 %v419
    %559 = vmatpush1.msra.mxu0 %v418
    %560 = vmatprep.subr.mxu0 %v423
    %561 = vmatpush1.msra.mxu0 %v422
    %562 = vmatprep.subr.mxu0 %v427
    %563 = vmatpush1.msra.mxu0 %v426
    %564 = vmatprep.subr.mxu0 %v431
    %565 = vmatpush1.msra.mxu0 %v430
    %566 = vmatprep.subr.mxu0 %v435
    %567 = vmatpush1.msra.mxu0 %v434
    %568 = vmatprep.subr.mxu0 %v439
    %569 = vmatpush1.msra.mxu0 %v438
    %570 = vmatprep.subr.mxu0 %v443
    %571 = vmatpush1.msra.mxu0 %v442
    %572 = vmatprep.subr.mxu0 %v447
    %573 = vmatpush1.msra.mxu0 %v446
    %574 = vmatprep.subr.mxu0 %v451
    %575 = vmatpush1.msra.mxu0 %v450
    %576 = vmatprep.subr.mxu0 %v455
    %577 = vmatpush1.msra.mxu0 %v454
    %578 = vmatprep.subr.mxu0 %v459
    %579 = vmatpush1.msra.mxu0 %v458
    %580 = vmatprep.subr.mxu0 %v463
    %581 = vmatpush1.msra.mxu0 %v462
    %582 = vmatprep.subr.mxu0 %v467
    %583 = vmatpush1.msra.mxu0 %v466
    %584 = vmatprep.subr.mxu0 %v471
    %585 = vmatpush1.msra.mxu0 %v470
    %586 = vmatprep.subr.mxu0 %v475
    %587 = vmatpush1.msra.mxu0 %v474
    %588 = vmatprep.subr.mxu0 0.0
    %589 = vmatpush1.msra.mxu0 0.0
    %590 = vmatprep.subr.mxu0 0.0
    %591 = vmatpush1.msra.mxu0 0.0
    %592 = vmatprep.subr.mxu0 0.0
    %593 = vmatpush1.msra.mxu0 0.0
    %594 = vmatprep.subr.mxu0 0.0
    %595 = vmatpush1.msra.mxu0 0.0
    %596 = vmatprep.subr.mxu0 0.0
    %597 = vmatpush1.msra.mxu0 0.0
    %598 = vmatprep.subr.mxu0 0.0
    %599 = vmatpush1.msra.mxu0 0.0
    %600 = vmatprep.subr.mxu0 0.0
    %601 = vmatpush1.msra.mxu0 0.0
    %602 = vmatprep.subr.mxu0 0.0
    %603 = vmatpush1.msra.mxu0 0.0
    %604 = vmatprep.subr.mxu0 0.0
    %605 = vmatpush1.msra.mxu0 0.0
    %606 = vmatprep.subr.mxu0 0.0
    %607 = vmatpush1.msra.mxu0 0.0
    %608 = vmatprep.subr.mxu0 0.0
    %609 = vmatpush1.msra.mxu0 0.0
    %610 = vmatprep.subr.mxu0 0.0
    %611 = vmatpush1.msra.mxu0 0.0
    %612 = vmatprep.subr.mxu0 0.0
    %613 = vmatpush1.msra.mxu0 0.0
    %614 = vmatprep.subr.mxu0 0.0
    %615 = vmatpush1.msra.mxu0 0.0
    %616 = vmatprep.subr.mxu0 0.0
    %617 = vmatpush1.msra.mxu0 0.0
    %618 = vmatprep.subr.mxu0 0.0
    %619 = vmatpush1.msra.mxu0 0.0
    %620 = vmatprep.mubr.f32.mxu0 0.0
    %621 = vmatmul.mubr.f32.gmra.mrb[0].mxu0 %v476
    %v622 = vpop.f32.mrb[0].mxu0
    %v623 = vadd.f32 0.0, %v622
    %v624 = vpop.f32.mrb[0].mxu0
    %v625 = vadd.f32 0.0, %v624
    %626 = vdwg.mxu0
    %v627 = vadd.f32 %v481, %v552
    %v628 = vadd.f32 %v482, %v554
    %v629 = vadd.f32 %v483, %v623
    %v630 = vadd.f32 %v484, %v625
    %v631 = vxor.u32 %v627, 2147483648
    %v632 = vmul.f32 %v631, 1.442695
    %v633 = vpow.pop %v632
    %v634 = vadd.f32 %v633, 1.0
    %v635 = vrcp.pop %v634
    %v636 = vmul.f32 1.0, %v635
    %v637 = vxor.u32 %v628, 2147483648
    %v638 = vmul.f32 %v637, 1.442695
    %v639 = vpow.pop %v638
    %v640 = vadd.f32 %v639, 1.0
    %v641 = vrcp.pop %v640
    %v642 = vmul.f32 1.0, %v641
    %v643 = vtanh.pop %v629
    %v644 = vxor.u32 %v630, 2147483648
    %v645 = vmul.f32 %v644, 1.442695
    %v646 = vpow.pop %v645
    %v647 = vadd.f32 %v646, 1.0
    %v648 = vrcp.pop %v647
    %v649 = vmul.f32 1.0, %v648
    %v650 = vmul.f32 %v642, %v477
    %v651 = vmul.f32 %v636, %v643
    %v652 = vadd.f32 %v650, %v651
    %v653 = vtanh.pop %v652
    %v654 = vmul.f32 %v649, %v653
    %655 = vst [vmem:[#allocation3] sm:$0xff] %v654
    %s656 = smul.u32 1, 4
    %s657 = smul.addr %s656, 8
    %s658 = scalar_lea.vmem [#allocation2], %s657
    %v659 = vld [vmem:[%s658] sm:$0xff]
    %v660 = vld [vmem:[%s658 + $0x8] sm:$0xff]
    %v661 = vld [vmem:[%s658 + $0x10] sm:$0xff]
    %v662 = vld [vmem:[%s658 + $0x18] sm:$0xff]
    %663 = vmatprep.subr.mxu0 %v413
    %664 = vmatpush1.msra.mxu0 %v412
    %665 = vmatprep.subr.mxu0 %v417
    %666 = vmatpush1.msra.mxu0 %v416
    %667 = vmatprep.subr.mxu0 %v421
    %668 = vmatpush1.msra.mxu0 %v420
    %669 = vmatprep.subr.mxu0 %v425
    %670 = vmatpush1.msra.mxu0 %v424
    %671 = vmatprep.subr.mxu0 %v429
    %672 = vmatpush1.msra.mxu0 %v428
    %673 = vmatprep.subr.mxu0 %v433
    %674 = vmatpush1.msra.mxu0 %v432
    %675 = vmatprep.subr.mxu0 %v437
    %676 = vmatpush1.msra.mxu0 %v436
    %677 = vmatprep.subr.mxu0 %v441
    %678 = vmatpush1.msra.mxu0 %v440
    %679 = vmatprep.subr.mxu0 %v445
    %680 = vmatpush1.msra.mxu0 %v444
    %681 = vmatprep.subr.mxu0 %v449
    %682 = vmatpush1.msra.mxu0 %v448
    %683 = vmatprep.subr.mxu0 %v453
    %684 = vmatpush1.msra.mxu0 %v452
    %685 = vmatprep.subr.mxu0 %v457
    %686 = vmatpush1.msra.mxu0 %v456
    %687 = vmatprep.subr.mxu0 %v461
    %688 = vmatpush1.msra.mxu0 %v460
    %689 = vmatprep.subr.mxu0 %v465
    %690 = vmatpush1.msra.mxu0 %v464
    %691 = vmatprep.subr.mxu0 %v469
    %692 = vmatpush1.msra.mxu0 %v468
    %693 = vmatprep.subr.mxu0 %v473
    %694 = vmatpush1.msra.mxu0 %v472
    %695 = vmatprep.subr.mxu0 0.0
    %696 = vmatpush1.msra.mxu0 0.0
    %697 = vmatprep.subr.mxu0 0.0
    %698 = vmatpush1.msra.mxu0 0.0
    %699 = vmatprep.subr.mxu0 0.0
    %700 = vmatpush1.msra.mxu0 0.0
    %701 = vmatprep.subr.mxu0 0.0
    %702 = vmatpush1.msra.mxu0 0.0
    %703 = vmatprep.subr.mxu0 0.0
    %704 = vmatpush1.msra.mxu0 0.0
    %705 = vmatprep.subr.mxu0 0.0
    %706 = vmatpush1.msra.mxu0 0.0
    %707 = vmatprep.subr.mxu0 0.0
    %708 = vmatpush1.msra.mxu0 0.0
    %709 = vmatprep.subr.mxu0 0.0
    %710 = vmatpush1.msra.mxu0 0.0
    %711 = vmatprep.subr.mxu0 0.0
    %712 = vmatpush1.msra.mxu0 0.0
    %713 = vmatprep.subr.mxu0 0.0
    %714 = vmatpush1.msra.mxu0 0.0
    %715 = vmatprep.subr.mxu0 0.0
    %716 = vmatpush1.msra.mxu0 0.0
    %717 = vmatprep.subr.mxu0 0.0
    %718 = vmatpush1.msra.mxu0 0.0
    %719 = vmatprep.subr.mxu0 0.0
    %720 = vmatpush1.msra.mxu0 0.0
    %721 = vmatprep.subr.mxu0 0.0
    %722 = vmatpush1.msra.mxu0 0.0
    %723 = vmatprep.subr.mxu0 0.0
    %724 = vmatpush1.msra.mxu0 0.0
    %725 = vmatprep.subr.mxu0 0.0
    %726 = vmatpush1.msra.mxu0 0.0
    %727 = vmatprep.mubr.f32.mxu0 0.0
    %728 = vmatmul.mubr.f32.gmra.mrb[0].mxu0 %v654
    %v729 = vpop.f32.mrb[0].mxu0
    %v730 = vadd.f32 0.0, %v729
    %v731 = vpop.f32.mrb[0].mxu0
    %v732 = vadd.f32 0.0, %v731
    %733 = vdwg.mxu0
    %734 = vmatprep.subr.mxu0 %v415
    %735 = vmatpush1.msra.mxu0 %v414
    %736 = vmatprep.subr.mxu0 %v419
    %737 = vmatpush1.msra.mxu0 %v418
    %738 = vmatprep.subr.mxu0 %v423
    %739 = vmatpush1.msra.mxu0 %v422
    %740 = vmatprep.subr.mxu0 %v427
    %741 = vmatpush1.msra.mxu0 %v426
    %742 = vmatprep.subr.mxu0 %v431
    %743 = vmatpush1.msra.mxu0 %v430
    %744 = vmatprep.subr.mxu0 %v435
    %745 = vmatpush1.msra.mxu0 %v434
    %746 = vmatprep.subr.mxu0 %v439
    %747 = vmatpush1.msra.mxu0 %v438
    %748 = vmatprep.subr.mxu0 %v443
    %749 = vmatpush1.msra.mxu0 %v442
    %750 = vmatprep.subr.mxu0 %v447
    %751 = vmatpush1.msra.mxu0 %v446
    %752 = vmatprep.subr.mxu0 %v451
    %753 = vmatpush1.msra.mxu0 %v450
    %754 = vmatprep.subr.mxu0 %v455
    %755 = vmatpush1.msra.mxu0 %v454
    %756 = vmatprep.subr.mxu0 %v459
    %757 = vmatpush1.msra.mxu0 %v458
    %758 = vmatprep.subr.mxu0 %v463
    %759 = vmatpush1.msra.mxu0 %v462
    %760 = vmatprep.subr.mxu0 %v467
    %761 = vmatpush1.msra.mxu0 %v466
    %762 = vmatprep.subr.mxu0 %v471
    %763 = vmatpush1.msra.mxu0 %v470
    %764 = vmatprep.subr.mxu0 %v475
    %765 = vmatpush1.msra.mxu0 %v474
    %766 = vmatprep.subr.mxu0 0.0
    %767 = vmatpush1.msra.mxu0 0.0
    %768 = vmatprep.subr.mxu0 0.0
    %769 = vmatpush1.msra.mxu0 0.0
    %770 = vmatprep.subr.mxu0 0.0
    %771 = vmatpush1.msra.mxu0 0.0
    %772 = vmatprep.subr.mxu0 0.0
    %773 = vmatpush1.msra.mxu0 0.0
    %774 = vmatprep.subr.mxu0 0.0
    %775 = vmatpush1.msra.mxu0 0.0
    %776 = vmatprep.subr.mxu0 0.0
    %777 = vmatpush1.msra.mxu0 0.0
    %778 = vmatprep.subr.mxu0 0.0
    %779 = vmatpush1.msra.mxu0 0.0
    %780 = vmatprep.subr.mxu0 0.0
    %781 = vmatpush1.msra.mxu0 0.0
    %782 = vmatprep.subr.mxu0 0.0
    %783 = vmatpush1.msra.mxu0 0.0
    %784 = vmatprep.subr.mxu0 0.0
    %785 = vmatpush1.msra.mxu0 0.0
    %786 = vmatprep.subr.mxu0 0.0
    %787 = vmatpush1.msra.mxu0 0.0
    %788 = vmatprep.subr.mxu0 0.0
    %789 = vmatpush1.msra.mxu0 0.0
    %790 = vmatprep.subr.mxu0 0.0
    %791 = vmatpush1.msra.mxu0 0.0
    %792 = vmatprep.subr.mxu0 0.0
    %793 = vmatpush1.msra.mxu0 0.0
    %794 = vmatprep.subr.mxu0 0.0
    %795 = vmatpush1.msra.mxu0 0.0
    %796 = vmatprep.subr.mxu0 0.0
    %797 = vmatpush1.msra.mxu0 0.0
    %798 = vmatprep.mubr.f32.mxu0 0.0
    %799 = vmatmul.mubr.f32.gmra.mrb[0].mxu0 %v654
    %v800 = vpop.f32.mrb[0].mxu0
    %v801 = vadd.f32 0.0, %v800
    %v802 = vpop.f32.mrb[0].mxu0
    %v803 = vadd.f32 0.0, %v802
    %804 = vdwg.mxu0
    %v805 = vadd.f32 %v659, %v730
    %v806 = vadd.f32 %v660, %v732
    %v807 = vadd.f32 %v661, %v801
    %v808 = vadd.f32 %v662, %v803
    %v809 = vxor.u32 %v805, 2147483648
    %v810 = vmul.f32 %v809, 1.442695
    %v811 = vpow.pop %v810
    %v812 = vadd.f32 %v811, 1.0
    %v813 = vrcp.pop %v812
    %v814 = vmul.f32 1.0, %v813
    %v815 = vxor.u32 %v806, 2147483648
    %v816 = vmul.f32 %v815, 1.442695
    %v817 = vpow.pop %v816
    %v818 = vadd.f32 %v817, 1.0
    %v819 = vrcp.pop %v818
    %v820 = vmul.f32 1.0, %v819
    %v821 = vtanh.pop %v807
    %v822 = vxor.u32 %v808, 2147483648
    %v823 = vmul.f32 %v822, 1.442695
    %v824 = vpow.pop %v823
    %v825 = vadd.f32 %v824, 1.0
    %v826 = vrcp.pop %v825
    %v827 = vmul.f32 1.0, %v826
    %v828 = vmul.f32 %v820, %v652
    %v829 = vmul.f32 %v814, %v821
    %v830 = vadd.f32 %v828, %v829
    %v831 = vtanh.pop %v830
    %v832 = vmul.f32 %v827, %v831
    %s833 = scalar_lea.vmem [#allocation3], 8
    %834 = vst [vmem:[%s833] sm:$0xff] %v832
    %s835 = smul.u32 2, 4
    %s836 = smul.addr %s835, 8
    %s837 = scalar_lea.vmem [#allocation2], %s836
    %v838 = vld [vmem:[%s837] sm:$0xff]
    %v839 = vld [vmem:[%s837 + $0x8] sm:$0xff]
    %v840 = vld [vmem:[%s837 + $0x10] sm:$0xff]
    %v841 = vld [vmem:[%s837 + $0x18] sm:$0xff]
    %842 = vmatprep.subr.mxu0 %v413
    %843 = vmatpush1.msra.mxu0 %v412
    %844 = vmatprep.subr.mxu0 %v417
    %845 = vmatpush1.msra.mxu0 %v416
    %846 = vmatprep.subr.mxu0 %v421
    %847 = vmatpush1.msra.mxu0 %v420
    %848 = vmatprep.subr.mxu0 %v425
    %849 = vmatpush1.msra.mxu0 %v424
    %850 = vmatprep.subr.mxu0 %v429
    %851 = vmatpush1.msra.mxu0 %v428
    %852 = vmatprep.subr.mxu0 %v433
    %853 = vmatpush1.msra.mxu0 %v432
    %854 = vmatprep.subr.mxu0 %v437
    %855 = vmatpush1.msra.mxu0 %v436
    %856 = vmatprep.subr.mxu0 %v441
    %857 = vmatpush1.msra.mxu0 %v440
    %858 = vmatprep.subr.mxu0 %v445
    %859 = vmatpush1.msra.mxu0 %v444
    %860 = vmatprep.subr.mxu0 %v449
    %861 = vmatpush1.msra.mxu0 %v448
    %862 = vmatprep.subr.mxu0 %v453
    %863 = vmatpush1.msra.mxu0 %v452
    %864 = vmatprep.subr.mxu0 %v457
    %865 = vmatpush1.msra.mxu0 %v456
    %866 = vmatprep.subr.mxu0 %v461
    %867 = vmatpush1.msra.mxu0 %v460
    %868 = vmatprep.subr.mxu0 %v465
    %869 = vmatpush1.msra.mxu0 %v464
    %870 = vmatprep.subr.mxu0 %v469
    %871 = vmatpush1.msra.mxu0 %v468
    %872 = vmatprep.subr.mxu0 %v473
    %873 = vmatpush1.msra.mxu0 %v472
    %874 = vmatprep.subr.mxu0 0.0
    %875 = vmatpush1.msra.mxu0 0.0
    %876 = vmatprep.subr.mxu0 0.0
    %877 = vmatpush1.msra.mxu0 0.0
    %878 = vmatprep.subr.mxu0 0.0
    %879 = vmatpush1.msra.mxu0 0.0
    %880 = vmatprep.subr.mxu0 0.0
    %881 = vmatpush1.msra.mxu0 0.0
    %882 = vmatprep.subr.mxu0 0.0
    %883 = vmatpush1.msra.mxu0 0.0
    %884 = vmatprep.subr.mxu0 0.0
    %885 = vmatpush1.msra.mxu0 0.0
    %886 = vmatprep.subr.mxu0 0.0
    %887 = vmatpush1.msra.mxu0 0.0
    %888 = vmatprep.subr.mxu0 0.0
    %889 = vmatpush1.msra.mxu0 0.0
    %890 = vmatprep.subr.mxu0 0.0
    %891 = vmatpush1.msra.mxu0 0.0
    %892 = vmatprep.subr.mxu0 0.0
    %893 = vmatpush1.msra.mxu0 0.0
    %894 = vmatprep.subr.mxu0 0.0
    %895 = vmatpush1.msra.mxu0 0.0
    %896 = vmatprep.subr.mxu0 0.0
    %897 = vmatpush1.msra.mxu0 0.0
    %898 = vmatprep.subr.mxu0 0.0
    %899 = vmatpush1.msra.mxu0 0.0
    %900 = vmatprep.subr.mxu0 0.0
    %901 = vmatpush1.msra.mxu0 0.0
    %902 = vmatprep.subr.mxu0 0.0
    %903 = vmatpush1.msra.mxu0 0.0
    %904 = vmatprep.subr.mxu0 0.0
    %905 = vmatpush1.msra.mxu0 0.0
    %906 = vmatprep.mubr.f32.mxu0 0.0
    %907 = vmatmul.mubr.f32.gmra.mrb[0].mxu0 %v832
    %v908 = vpop.f32.mrb[0].mxu0
    %v909 = vadd.f32 0.0, %v908
    %v910 = vpop.f32.mrb[0].mxu0
    %v911 = vadd.f32 0.0, %v910
    %912 = vdwg.mxu0
    %913 = vmatprep.subr.mxu0 %v415
    %914 = vmatpush1.msra.mxu0 %v414
    %915 = vmatprep.subr.mxu0 %v419
    %916 = vmatpush1.msra.mxu0 %v418
    %917 = vmatprep.subr.mxu0 %v423
    %918 = vmatpush1.msra.mxu0 %v422
    %919 = vmatprep.subr.mxu0 %v427
    %920 = vmatpush1.msra.mxu0 %v426
    %921 = vmatprep.subr.mxu0 %v431
    %922 = vmatpush1.msra.mxu0 %v430
    %923 = vmatprep.subr.mxu0 %v435
    %924 = vmatpush1.msra.mxu0 %v434
    %925 = vmatprep.subr.mxu0 %v439
    %926 = vmatpush1.msra.mxu0 %v438
    %927 = vmatprep.subr.mxu0 %v443
    %928 = vmatpush1.msra.mxu0 %v442
    %929 = vmatprep.subr.mxu0 %v447
    %930 = vmatpush1.msra.mxu0 %v446
    %931 = vmatprep.subr.mxu0 %v451
    %932 = vmatpush1.msra.mxu0 %v450
    %933 = vmatprep.subr.mxu0 %v455
    %934 = vmatpush1.msra.mxu0 %v454
    %935 = vmatprep.subr.mxu0 %v459
    %936 = vmatpush1.msra.mxu0 %v458
    %937 = vmatprep.subr.mxu0 %v463
    %938 = vmatpush1.msra.mxu0 %v462
    %939 = vmatprep.subr.mxu0 %v467
    %940 = vmatpush1.msra.mxu0 %v466
    %941 = vmatprep.subr.mxu0 %v471
    %942 = vmatpush1.msra.mxu0 %v470
    %943 = vmatprep.subr.mxu0 %v475
    %944 = vmatpush1.msra.mxu0 %v474
    %945 = vmatprep.subr.mxu0 0.0
    %946 = vmatpush1.msra.mxu0 0.0
    %947 = vmatprep.subr.mxu0 0.0
    %948 = vmatpush1.msra.mxu0 0.0
    %949 = vmatprep.subr.mxu0 0.0
    %950 = vmatpush1.msra.mxu0 0.0
    %951 = vmatprep.subr.mxu0 0.0
    %952 = vmatpush1.msra.mxu0 0.0
    %953 = vmatprep.subr.mxu0 0.0
    %954 = vmatpush1.msra.mxu0 0.0
    %955 = vmatprep.subr.mxu0 0.0
    %956 = vmatpush1.msra.mxu0 0.0
    %957 = vmatprep.subr.mxu0 0.0
    %958 = vmatpush1.msra.mxu0 0.0
    %959 = vmatprep.subr.mxu0 0.0
    %960 = vmatpush1.msra.mxu0 0.0
    %961 = vmatprep.subr.mxu0 0.0
    %962 = vmatpush1.msra.mxu0 0.0
    %963 = vmatprep.subr.mxu0 0.0
    %964 = vmatpush1.msra.mxu0 0.0
    %965 = vmatprep.subr.mxu0 0.0
    %966 = vmatpush1.msra.mxu0 0.0
    %967 = vmatprep.subr.mxu0 0.0
    %968 = vmatpush1.msra.mxu0 0.0
    %969 = vmatprep.subr.mxu0 0.0
    %970 = vmatpush1.msra.mxu0 0.0
    %971 = vmatprep.subr.mxu0 0.0
    %972 = vmatpush1.msra.mxu0 0.0
    %973 = vmatprep.subr.mxu0 0.0
    %974 = vmatpush1.msra.mxu0 0.0
    %975 = vmatprep.subr.mxu0 0.0
    %976 = vmatpush1.msra.mxu0 0.0
    %977 = vmatprep.mubr.f32.mxu0 0.0
    %978 = vmatmul.mubr.f32.gmra.mrb[0].mxu0 %v832
    %v979 = vpop.f32.mrb[0].mxu0
    %v980 = vadd.f32 0.0, %v979
    %v981 = vpop.f32.mrb[0].mxu0
    %v982 = vadd.f32 0.0, %v981
    %983 = vdwg.mxu0
    %v984 = vadd.f32 %v838, %v909
    %v985 = vadd.f32 %v839, %v911
    %v986 = vadd.f32 %v840, %v980
    %v987 = vadd.f32 %v841, %v982
    %v988 = vxor.u32 %v984, 2147483648
    %v989 = vmul.f32 %v988, 1.442695
    %v990 = vpow.pop %v989
    %v991 = vadd.f32 %v990, 1.0
    %v992 = vrcp.pop %v991
    %v993 = vmul.f32 1.0, %v992
    %v994 = vxor.u32 %v985, 2147483648
    %v995 = vmul.f32 %v994, 1.442695
    %v996 = vpow.pop %v995
    %v997 = vadd.f32 %v996, 1.0
    %v998 = vrcp.pop %v997
    %v999 = vmul.f32 1.0, %v998
    %v1000 = vtanh.pop %v986
    %v1001 = vxor.u32 %v987, 2147483648
    %v1002 = vmul.f32 %v1001, 1.442695
    %v1003 = vpow.pop %v1002
    %v1004 = vadd.f32 %v1003, 1.0
    %v1005 = vrcp.pop %v1004
    %v1006 = vmul.f32 1.0, %v1005
    %v1007 = vmul.f32 %v999, %v830
    %v1008 = vmul.f32 %v993, %v1000
    %v1009 = vadd.f32 %v1007, %v1008
    %v1010 = vtanh.pop %v1009
    %v1011 = vmul.f32 %v1006, %v1010
    %s1012 = scalar_lea.vmem [#allocation3], 16
    %1013 = vst [vmem:[%s1012] sm:$0xff] %v1011
    %s1014 = smul.u32 3, 4
    %s1015 = smul.addr %s1014, 8
    %s1016 = scalar_lea.vmem [#allocation2], %s1015
    %v1017 = vld [vmem:[%s1016] sm:$0xff]
    %v1018 = vld [vmem:[%s1016 + $0x8] sm:$0xff]
    %v1019 = vld [vmem:[%s1016 + $0x10] sm:$0xff]
    %v1020 = vld [vmem:[%s1016 + $0x18] sm:$0xff]
    %1021 = vmatprep.subr.mxu0 %v413
    %1022 = vmatpush1.msra.mxu0 %v412
    %1023 = vmatprep.subr.mxu0 %v417
    %1024 = vmatpush1.msra.mxu0 %v416
    %1025 = vmatprep.subr.mxu0 %v421
    %1026 = vmatpush1.msra.mxu0 %v420
    %1027 = vmatprep.subr.mxu0 %v425
    %1028 = vmatpush1.msra.mxu0 %v424
    %1029 = vmatprep.subr.mxu0 %v429
    %1030 = vmatpush1.msra.mxu0 %v428
    %1031 = vmatprep.subr.mxu0 %v433
    %1032 = vmatpush1.msra.mxu0 %v432
    %1033 = vmatprep.subr.mxu0 %v437
    %1034 = vmatpush1.msra.mxu0 %v436
    %1035 = vmatprep.subr.mxu0 %v441
    %1036 = vmatpush1.msra.mxu0 %v440
    %1037 = vmatprep.subr.mxu0 %v445
    %1038 = vmatpush1.msra.mxu0 %v444
    %1039 = vmatprep.subr.mxu0 %v449
    %1040 = vmatpush1.msra.mxu0 %v448
    %1041 = vmatprep.subr.mxu0 %v453
    %1042 = vmatpush1.msra.mxu0 %v452
    %1043 = vmatprep.subr.mxu0 %v457
    %1044 = vmatpush1.msra.mxu0 %v456
    %1045 = vmatprep.subr.mxu0 %v461
    %1046 = vmatpush1.msra.mxu0 %v460
    %1047 = vmatprep.subr.mxu0 %v465
    %1048 = vmatpush1.msra.mxu0 %v464
    %1049 = vmatprep.subr.mxu0 %v469
    %1050 = vmatpush1.msra.mxu0 %v468
    %1051 = vmatprep.subr.mxu0 %v473
    %1052 = vmatpush1.msra.mxu0 %v472
    %1053 = vmatprep.subr.mxu0 0.0
    %1054 = vmatpush1.msra.mxu0 0.0
    %1055 = vmatprep.subr.mxu0 0.0
    %1056 = vmatpush1.msra.mxu0 0.0
    %1057 = vmatprep.subr.mxu0 0.0
    %1058 = vmatpush1.msra.mxu0 0.0
    %1059 = vmatprep.subr.mxu0 0.0
    %1060 = vmatpush1.msra.mxu0 0.0
    %1061 = vmatprep.subr.mxu0 0.0
    %1062 = vmatpush1.msra.mxu0 0.0
    %1063 = vmatprep.subr.mxu0 0.0
    %1064 = vmatpush1.msra.mxu0 0.0
    %1065 = vmatprep.subr.mxu0 0.0
    %1066 = vmatpush1.msra.mxu0 0.0
    %1067 = vmatprep.subr.mxu0 0.0
    %1068 = vmatpush1.msra.mxu0 0.0
    %1069 = vmatprep.subr.mxu0 0.0
    %1070 = vmatpush1.msra.mxu0 0.0
    %1071 = vmatprep.subr.mxu0 0.0
    %1072 = vmatpush1.msra.mxu0 0.0
    %1073 = vmatprep.subr.mxu0 0.0
    %1074 = vmatpush1.msra.mxu0 0.0
    %1075 = vmatprep.subr.mxu0 0.0
    %1076 = vmatpush1.msra.mxu0 0.0
    %1077 = vmatprep.subr.mxu0 0.0
    %1078 = vmatpush1.msra.mxu0 0.0
    %1079 = vmatprep.subr.mxu0 0.0
    %1080 = vmatpush1.msra.mxu0 0.0
    %1081 = vmatprep.subr.mxu0 0.0
    %1082 = vmatpush1.msra.mxu0 0.0
    %1083 = vmatprep.subr.mxu0 0.0
    %1084 = vmatpush1.msra.mxu0 0.0
    %1085 = vmatprep.mubr.f32.mxu0 0.0
    %1086 = vmatmul.mubr.f32.gmra.mrb[0].mxu0 %v1011
    %v1087 = vpop.f32.mrb[0].mxu0
    %v1088 = vadd.f32 0.0, %v1087
    %v1089 = vpop.f32.mrb[0].mxu0
    %v1090 = vadd.f32 0.0, %v1089
    %1091 = vdwg.mxu0
    %1092 = vmatprep.subr.mxu0 %v415
    %1093 = vmatpush1.msra.mxu0 %v414
    %1094 = vmatprep.subr.mxu0 %v419
    %1095 = vmatpush1.msra.mxu0 %v418
    %1096 = vmatprep.subr.mxu0 %v423
    %1097 = vmatpush1.msra.mxu0 %v422
    %1098 = vmatprep.subr.mxu0 %v427
    %1099 = vmatpush1.msra.mxu0 %v426
    %1100 = vmatprep.subr.mxu0 %v431
    %1101 = vmatpush1.msra.mxu0 %v430
    %1102 = vmatprep.subr.mxu0 %v435
    %1103 = vmatpush1.msra.mxu0 %v434
    %1104 = vmatprep.subr.mxu0 %v439
    %1105 = vmatpush1.msra.mxu0 %v438
    %1106 = vmatprep.subr.mxu0 %v443
    %1107 = vmatpush1.msra.mxu0 %v442
    %1108 = vmatprep.subr.mxu0 %v447
    %1109 = vmatpush1.msra.mxu0 %v446
    %1110 = vmatprep.subr.mxu0 %v451
    %1111 = vmatpush1.msra.mxu0 %v450
    %1112 = vmatprep.subr.mxu0 %v455
    %1113 = vmatpush1.msra.mxu0 %v454
    %1114 = vmatprep.subr.mxu0 %v459
    %1115 = vmatpush1.msra.mxu0 %v458
    %1116 = vmatprep.subr.mxu0 %v463
    %1117 = vmatpush1.msra.mxu0 %v462
    %1118 = vmatprep.subr.mxu0 %v467
    %1119 = vmatpush1.msra.mxu0 %v466
    %1120 = vmatprep.subr.mxu0 %v471
    %1121 = vmatpush1.msra.mxu0 %v470
    %1122 = vmatprep.subr.mxu0 %v475
    %1123 = vmatpush1.msra.mxu0 %v474
    %1124 = vmatprep.subr.mxu0 0.0
    %1125 = vmatpush1.msra.mxu0 0.0
    %1126 = vmatprep.subr.mxu0 0.0
    %1127 = vmatpush1.msra.mxu0 0.0
    %1128 = vmatprep.subr.mxu0 0.0
    %1129 = vmatpush1.msra.mxu0 0.0
    %1130 = vmatprep.subr.mxu0 0.0
    %1131 = vmatpush1.msra.mxu0 0.0
    %1132 = vmatprep.subr.mxu0 0.0
    %1133 = vmatpush1.msra.mxu0 0.0
    %1134 = vmatprep.subr.mxu0 0.0
    %1135 = vmatpush1.msra.mxu0 0.0
    %1136 = vmatprep.subr.mxu0 0.0
    %1137 = vmatpush1.msra.mxu0 0.0
    %1138 = vmatprep.subr.mxu0 0.0
    %1139 = vmatpush1.msra.mxu0 0.0
    %1140 = vmatprep.subr.mxu0 0.0
    %1141 = vmatpush1.msra.mxu0 0.0
    %1142 = vmatprep.subr.mxu0 0.0
    %1143 = vmatpush1.msra.mxu0 0.0
    %1144 = vmatprep.subr.mxu0 0.0
    %1145 = vmatpush1.msra.mxu0 0.0
    %1146 = vmatprep.subr.mxu0 0.0
    %1147 = vmatpush1.msra.mxu0 0.0
    %1148 = vmatprep.subr.mxu0 0.0
    %1149 = vmatpush1.msra.mxu0 0.0
    %1150 = vmatprep.subr.mxu0 0.0
    %1151 = vmatpush1.msra.mxu0 0.0
    %1152 = vmatprep.subr.mxu0 0.0
    %1153 = vmatpush1.msra.mxu0 0.0
    %1154 = vmatprep.subr.mxu0 0.0
    %1155 = vmatpush1.msra.mxu0 0.0
    %1156 = vmatprep.mubr.f32.mxu0 0.0
    %1157 = vmatmul.mubr.f32.gmra.mrb[0].mxu0 %v1011
    %v1158 = vpop.f32.mrb[0].mxu0
    %v1159 = vadd.f32 0.0, %v1158
    %v1160 = vpop.f32.mrb[0].mxu0
    %v1161 = vadd.f32 0.0, %v1160
    %1162 = vdwg.mxu0
    %v1163 = vadd.f32 %v1017, %v1088
    %v1164 = vadd.f32 %v1018, %v1090
    %v1165 = vadd.f32 %v1019, %v1159
    %v1166 = vadd.f32 %v1020, %v1161
    %v1167 = vxor.u32 %v1163, 2147483648
    %v1168 = vmul.f32 %v1167, 1.442695
    %v1169 = vpow.pop %v1168
    %v1170 = vadd.f32 %v1169, 1.0
    %v1171 = vrcp.pop %v1170
    %v1172 = vmul.f32 1.0, %v1171
    %v1173 = vxor.u32 %v1164, 2147483648
    %v1174 = vmul.f32 %v1173, 1.442695
    %v1175 = vpow.pop %v1174
    %v1176 = vadd.f32 %v1175, 1.0
    %v1177 = vrcp.pop %v1176
    %v1178 = vmul.f32 1.0, %v1177
    %v1179 = vtanh.pop %v1165
    %v1180 = vxor.u32 %v1166, 2147483648
    %v1181 = vmul.f32 %v1180, 1.442695
    %v1182 = vpow.pop %v1181
    %v1183 = vadd.f32 %v1182, 1.0
    %v1184 = vrcp.pop %v1183
    %v1185 = vmul.f32 1.0, %v1184
    %v1186 = vmul.f32 %v1178, %v1009
    %v1187 = vmul.f32 %v1172, %v1179
    %v1188 = vadd.f32 %v1186, %v1187
    %v1189 = vtanh.pop %v1188
    %v1190 = vmul.f32 %v1185, %v1189
    %s1191 = scalar_lea.vmem [#allocation3], 24
    %1192 = vst [vmem:[%s1191] sm:$0xff] %v1190
    %s1193 = smul.u32 4, 4
    %s1194 = smul.addr %s1193, 8
    %s1195 = scalar_lea.vmem [#allocation2], %s1194
    %v1196 = vld [vmem:[%s1195] sm:$0xff]
    %v1197 = vld [vmem:[%s1195 + $0x8] sm:$0xff]
    %v1198 = vld [vmem:[%s1195 + $0x10] sm:$0xff]
    %v1199 = vld [vmem:[%s1195 + $0x18] sm:$0xff]
    %1200 = vmatprep.subr.mxu0 %v413
    %1201 = vmatpush1.msra.mxu0 %v412
    %1202 = vmatprep.subr.mxu0 %v417
    %1203 = vmatpush1.msra.mxu0 %v416
    %1204 = vmatprep.subr.mxu0 %v421
    %1205 = vmatpush1.msra.mxu0 %v420
    %1206 = vmatprep.subr.mxu0 %v425
    %1207 = vmatpush1.msra.mxu0 %v424
    %1208 = vmatprep.subr.mxu0 %v429
    %1209 = vmatpush1.msra.mxu0 %v428
    %1210 = vmatprep.subr.mxu0 %v433
    %1211 = vmatpush1.msra.mxu0 %v432
    %1212 = vmatprep.subr.mxu0 %v437
    %1213 = vmatpush1.msra.mxu0 %v436
    %1214 = vmatprep.subr.mxu0 %v441
    %1215 = vmatpush1.msra.mxu0 %v440
    %1216 = vmatprep.subr.mxu0 %v445
    %1217 = vmatpush1.msra.mxu0 %v444
    %1218 = vmatprep.subr.mxu0 %v449
    %1219 = vmatpush1.msra.mxu0 %v448
    %1220 = vmatprep.subr.mxu0 %v453
    %1221 = vmatpush1.msra.mxu0 %v452
    %1222 = vmatprep.subr.mxu0 %v457
    %1223 = vmatpush1.msra.mxu0 %v456
    %1224 = vmatprep.subr.mxu0 %v461
    %1225 = vmatpush1.msra.mxu0 %v460
    %1226 = vmatprep.subr.mxu0 %v465
    %1227 = vmatpush1.msra.mxu0 %v464
    %1228 = vmatprep.subr.mxu0 %v469
    %1229 = vmatpush1.msra.mxu0 %v468
    %1230 = vmatprep.subr.mxu0 %v473
    %1231 = vmatpush1.msra.mxu0 %v472
    %1232 = vmatprep.subr.mxu0 0.0
    %1233 = vmatpush1.msra.mxu0 0.0
    %1234 = vmatprep.subr.mxu0 0.0
    %1235 = vmatpush1.msra.mxu0 0.0
    %1236 = vmatprep.subr.mxu0 0.0
    %1237 = vmatpush1.msra.mxu0 0.0
    %1238 = vmatprep.subr.mxu0 0.0
    %1239 = vmatpush1.msra.mxu0 0.0
    %1240 = vmatprep.subr.mxu0 0.0
    %1241 = vmatpush1.msra.mxu0 0.0
    %1242 = vmatprep.subr.mxu0 0.0
    %1243 = vmatpush1.msra.mxu0 0.0
    %1244 = vmatprep.subr.mxu0 0.0
    %1245 = vmatpush1.msra.mxu0 0.0
    %1246 = vmatprep.subr.mxu0 0.0
    %1247 = vmatpush1.msra.mxu0 0.0
    %1248 = vmatprep.subr.mxu0 0.0
    %1249 = vmatpush1.msra.mxu0 0.0
    %1250 = vmatprep.subr.mxu0 0.0
    %1251 = vmatpush1.msra.mxu0 0.0
    %1252 = vmatprep.subr.mxu0 0.0
    %1253 = vmatpush1.msra.mxu0 0.0
    %1254 = vmatprep.subr.mxu0 0.0
    %1255 = vmatpush1.msra.mxu0 0.0
    %1256 = vmatprep.subr.mxu0 0.0
    %1257 = vmatpush1.msra.mxu0 0.0
    %1258 = vmatprep.subr.mxu0 0.0
    %1259 = vmatpush1.msra.mxu0 0.0
    %1260 = vmatprep.subr.mxu0 0.0
    %1261 = vmatpush1.msra.mxu0 0.0
    %1262 = vmatprep.subr.mxu0 0.0
    %1263 = vmatpush1.msra.mxu0 0.0
    %1264 = vmatprep.mubr.f32.mxu0 0.0
    %1265 = vmatmul.mubr.f32.gmra.mrb[0].mxu0 %v1190
    %v1266 = vpop.f32.mrb[0].mxu0
    %v1267 = vadd.f32 0.0, %v1266
    %v1268 = vpop.f32.mrb[0].mxu0
    %v1269 = vadd.f32 0.0, %v1268
    %1270 = vdwg.mxu0
    %1271 = vmatprep.subr.mxu0 %v415
    %1272 = vmatpush1.msra.mxu0 %v414
    %1273 = vmatprep.subr.mxu0 %v419
    %1274 = vmatpush1.msra.mxu0 %v418
    %1275 = vmatprep.subr.mxu0 %v423
    %1276 = vmatpush1.msra.mxu0 %v422
    %1277 = vmatprep.subr.mxu0 %v427
    %1278 = vmatpush1.msra.mxu0 %v426
    %1279 = vmatprep.subr.mxu0 %v431
    %1280 = vmatpush1.msra.mxu0 %v430
    %1281 = vmatprep.subr.mxu0 %v435
    %1282 = vmatpush1.msra.mxu0 %v434
    %1283 = vmatprep.subr.mxu0 %v439
    %1284 = vmatpush1.msra.mxu0 %v438
    %1285 = vmatprep.subr.mxu0 %v443
    %1286 = vmatpush1.msra.mxu0 %v442
    %1287 = vmatprep.subr.mxu0 %v447
    %1288 = vmatpush1.msra.mxu0 %v446
    %1289 = vmatprep.subr.mxu0 %v451
    %1290 = vmatpush1.msra.mxu0 %v450
    %1291 = vmatprep.subr.mxu0 %v455
    %1292 = vmatpush1.msra.mxu0 %v454
    %1293 = vmatprep.subr.mxu0 %v459
    %1294 = vmatpush1.msra.mxu0 %v458
    %1295 = vmatprep.subr.mxu0 %v463
    %1296 = vmatpush1.msra.mxu0 %v462
    %1297 = vmatprep.subr.mxu0 %v467
    %1298 = vmatpush1.msra.mxu0 %v466
    %1299 = vmatprep.subr.mxu0 %v471
    %1300 = vmatpush1.msra.mxu0 %v470
    %1301 = vmatprep.subr.mxu0 %v475
    %1302 = vmatpush1.msra.mxu0 %v474
    %1303 = vmatprep.subr.mxu0 0.0
    %1304 = vmatpush1.msra.mxu0 0.0
    %1305 = vmatprep.subr.mxu0 0.0
    %1306 = vmatpush1.msra.mxu0 0.0
    %1307 = vmatprep.subr.mxu0 0.0
    %1308 = vmatpush1.msra.mxu0 0.0
    %1309 = vmatprep.subr.mxu0 0.0
    %1310 = vmatpush1.msra.mxu0 0.0
    %1311 = vmatprep.subr.mxu0 0.0
    %1312 = vmatpush1.msra.mxu0 0.0
    %1313 = vmatprep.subr.mxu0 0.0
    %1314 = vmatpush1.msra.mxu0 0.0
    %1315 = vmatprep.subr.mxu0 0.0
    %1316 = vmatpush1.msra.mxu0 0.0
    %1317 = vmatprep.subr.mxu0 0.0
    %1318 = vmatpush1.msra.mxu0 0.0
    %1319 = vmatprep.subr.mxu0 0.0
    %1320 = vmatpush1.msra.mxu0 0.0
    %1321 = vmatprep.subr.mxu0 0.0
    %1322 = vmatpush1.msra.mxu0 0.0
    %1323 = vmatprep.subr.mxu0 0.0
    %1324 = vmatpush1.msra.mxu0 0.0
    %1325 = vmatprep.subr.mxu0 0.0
    %1326 = vmatpush1.msra.mxu0 0.0
    %1327 = vmatprep.subr.mxu0 0.0
    %1328 = vmatpush1.msra.mxu0 0.0
    %1329 = vmatprep.subr.mxu0 0.0
    %1330 = vmatpush1.msra.mxu0 0.0
    %1331 = vmatprep.subr.mxu0 0.0
    %1332 = vmatpush1.msra.mxu0 0.0
    %1333 = vmatprep.subr.mxu0 0.0
    %1334 = vmatpush1.msra.mxu0 0.0
    %1335 = vmatprep.mubr.f32.mxu0 0.0
    %1336 = vmatmul.mubr.f32.gmra.mrb[0].mxu0 %v1190
    %v1337 = vpop.f32.mrb[0].mxu0
    %v1338 = vadd.f32 0.0, %v1337
    %v1339 = vpop.f32.mrb[0].mxu0
    %v1340 = vadd.f32 0.0, %v1339
    %1341 = vdwg.mxu0
    %v1342 = vadd.f32 %v1196, %v1267
    %v1343 = vadd.f32 %v1197, %v1269
    %v1344 = vadd.f32 %v1198, %v1338
    %v1345 = vadd.f32 %v1199, %v1340
    %v1346 = vxor.u32 %v1342, 2147483648
    %v1347 = vmul.f32 %v1346, 1.442695
    %v1348 = vpow.pop %v1347
    %v1349 = vadd.f32 %v1348, 1.0
    %v1350 = vrcp.pop %v1349
    %v1351 = vmul.f32 1.0, %v1350
    %v1352 = vxor.u32 %v1343, 2147483648
    %v1353 = vmul.f32 %v1352, 1.442695
    %v1354 = vpow.pop %v1353
    %v1355 = vadd.f32 %v1354, 1.0
    %v1356 = vrcp.pop %v1355
    %v1357 = vmul.f32 1.0, %v1356
    %v1358 = vtanh.pop %v1344
    %v1359 = vxor.u32 %v1345, 2147483648
    %v1360 = vmul.f32 %v1359, 1.442695
    %v1361 = vpow.pop %v1360
    %v1362 = vadd.f32 %v1361, 1.0
    %v1363 = vrcp.pop %v1362
    %v1364 = vmul.f32 1.0, %v1363
    %v1365 = vmul.f32 %v1357, %v1188
    %v1366 = vmul.f32 %v1351, %v1358
    %v1367 = vadd.f32 %v1365, %v1366
    %v1368 = vtanh.pop %v1367
    %v1369 = vmul.f32 %v1364, %v1368
    %s1370 = scalar_lea.vmem [#allocation3], 32
    %1371 = vst [vmem:[%s1370] sm:$0xff] %v1369
    %s1372 = smul.u32 5, 4
    %s1373 = smul.addr %s1372, 8
    %s1374 = scalar_lea.vmem [#allocation2], %s1373
    %v1375 = vld [vmem:[%s1374] sm:$0xff]
    %v1376 = vld [vmem:[%s1374 + $0x8] sm:$0xff]
    %v1377 = vld [vmem:[%s1374 + $0x10] sm:$0xff]
    %v1378 = vld [vmem:[%s1374 + $0x18] sm:$0xff]
    %1379 = vmatprep.subr.mxu0 %v413
    %1380 = vmatpush1.msra.mxu0 %v412
    %1381 = vmatprep.subr.mxu0 %v417
    %1382 = vmatpush1.msra.mxu0 %v416
    %1383 = vmatprep.subr.mxu0 %v421
    %1384 = vmatpush1.msra.mxu0 %v420
    %1385 = vmatprep.subr.mxu0 %v425
    %1386 = vmatpush1.msra.mxu0 %v424
    %1387 = vmatprep.subr.mxu0 %v429
    %1388 = vmatpush1.msra.mxu0 %v428
    %1389 = vmatprep.subr.mxu0 %v433
    %1390 = vmatpush1.msra.mxu0 %v432
    %1391 = vmatprep.subr.mxu0 %v437
    %1392 = vmatpush1.msra.mxu0 %v436
    %1393 = vmatprep.subr.mxu0 %v441
    %1394 = vmatpush1.msra.mxu0 %v440
    %1395 = vmatprep.subr.mxu0 %v445
    %1396 = vmatpush1.msra.mxu0 %v444
    %1397 = vmatprep.subr.mxu0 %v449
    %1398 = vmatpush1.msra.mxu0 %v448
    %1399 = vmatprep.subr.mxu0 %v453
    %1400 = vmatpush1.msra.mxu0 %v452
    %1401 = vmatprep.subr.mxu0 %v457
    %1402 = vmatpush1.msra.mxu0 %v456
    %1403 = vmatprep.subr.mxu0 %v461
    %1404 = vmatpush1.msra.mxu0 %v460
    %1405 = vmatprep.subr.mxu0 %v465
    %1406 = vmatpush1.msra.mxu0 %v464
    %1407 = vmatprep.subr.mxu0 %v469
    %1408 = vmatpush1.msra.mxu0 %v468
    %1409 = vmatprep.subr.mxu0 %v473
    %1410 = vmatpush1.msra.mxu0 %v472
    %1411 = vmatprep.subr.mxu0 0.0
    %1412 = vmatpush1.msra.mxu0 0.0
    %1413 = vmatprep.subr.mxu0 0.0
    %1414 = vmatpush1.msra.mxu0 0.0
    %1415 = vmatprep.subr.mxu0 0.0
    %1416 = vmatpush1.msra.mxu0 0.0
    %1417 = vmatprep.subr.mxu0 0.0
    %1418 = vmatpush1.msra.mxu0 0.0
    %1419 = vmatprep.subr.mxu0 0.0
    %1420 = vmatpush1.msra.mxu0 0.0
    %1421 = vmatprep.subr.mxu0 0.0
    %1422 = vmatpush1.msra.mxu0 0.0
    %1423 = vmatprep.subr.mxu0 0.0
    %1424 = vmatpush1.msra.mxu0 0.0
    %1425 = vmatprep.subr.mxu0 0.0
    %1426 = vmatpush1.msra.mxu0 0.0
    %1427 = vmatprep.subr.mxu0 0.0
    %1428 = vmatpush1.msra.mxu0 0.0
    %1429 = vmatprep.subr.mxu0 0.0
    %1430 = vmatpush1.msra.mxu0 0.0
    %1431 = vmatprep.subr.mxu0 0.0
    %1432 = vmatpush1.msra.mxu0 0.0
    %1433 = vmatprep.subr.mxu0 0.0
    %1434 = vmatpush1.msra.mxu0 0.0
    %1435 = vmatprep.subr.mxu0 0.0
    %1436 = vmatpush1.msra.mxu0 0.0
    %1437 = vmatprep.subr.mxu0 0.0
    %1438 = vmatpush1.msra.mxu0 0.0
    %1439 = vmatprep.subr.mxu0 0.0
    %1440 = vmatpush1.msra.mxu0 0.0
    %1441 = vmatprep.subr.mxu0 0.0
    %1442 = vmatpush1.msra.mxu0 0.0
    %1443 = vmatprep.mubr.f32.mxu0 0.0
    %1444 = vmatmul.mubr.f32.gmra.mrb[0].mxu0 %v1369
    %v1445 = vpop.f32.mrb[0].mxu0
    %v1446 = vadd.f32 0.0, %v1445
    %v1447 = vpop.f32.mrb[0].mxu0
    %v1448 = vadd.f32 0.0, %v1447
    %1449 = vdwg.mxu0
    %1450 = vmatprep.subr.mxu0 %v415
    %1451 = vmatpush1.msra.mxu0 %v414
    %1452 = vmatprep.subr.mxu0 %v419
    %1453 = vmatpush1.msra.mxu0 %v418
    %1454 = vmatprep.subr.mxu0 %v423
    %1455 = vmatpush1.msra.mxu0 %v422
    %1456 = vmatprep.subr.mxu0 %v427
    %1457 = vmatpush1.msra.mxu0 %v426
    %1458 = vmatprep.subr.mxu0 %v431
    %1459 = vmatpush1.msra.mxu0 %v430
    %1460 = vmatprep.subr.mxu0 %v435
    %1461 = vmatpush1.msra.mxu0 %v434
    %1462 = vmatprep.subr.mxu0 %v439
    %1463 = vmatpush1.msra.mxu0 %v438
    %1464 = vmatprep.subr.mxu0 %v443
    %1465 = vmatpush1.msra.mxu0 %v442
    %1466 = vmatprep.subr.mxu0 %v447
    %1467 = vmatpush1.msra.mxu0 %v446
    %1468 = vmatprep.subr.mxu0 %v451
    %1469 = vmatpush1.msra.mxu0 %v450
    %1470 = vmatprep.subr.mxu0 %v455
    %1471 = vmatpush1.msra.mxu0 %v454
    %1472 = vmatprep.subr.mxu0 %v459
    %1473 = vmatpush1.msra.mxu0 %v458
    %1474 = vmatprep.subr.mxu0 %v463
    %1475 = vmatpush1.msra.mxu0 %v462
    %1476 = vmatprep.subr.mxu0 %v467
    %1477 = vmatpush1.msra.mxu0 %v466
    %1478 = vmatprep.subr.mxu0 %v471
    %1479 = vmatpush1.msra.mxu0 %v470
    %1480 = vmatprep.subr.mxu0 %v475
    %1481 = vmatpush1.msra.mxu0 %v474
    %1482 = vmatprep.subr.mxu0 0.0
    %1483 = vmatpush1.msra.mxu0 0.0
    %1484 = vmatprep.subr.mxu0 0.0
    %1485 = vmatpush1.msra.mxu0 0.0
    %1486 = vmatprep.subr.mxu0 0.0
    %1487 = vmatpush1.msra.mxu0 0.0
    %1488 = vmatprep.subr.mxu0 0.0
    %1489 = vmatpush1.msra.mxu0 0.0
    %1490 = vmatprep.subr.mxu0 0.0
    %1491 = vmatpush1.msra.mxu0 0.0
    %1492 = vmatprep.subr.mxu0 0.0
    %1493 = vmatpush1.msra.mxu0 0.0
    %1494 = vmatprep.subr.mxu0 0.0
    %1495 = vmatpush1.msra.mxu0 0.0
    %1496 = vmatprep.subr.mxu0 0.0
    %1497 = vmatpush1.msra.mxu0 0.0
    %1498 = vmatprep.subr.mxu0 0.0
    %1499 = vmatpush1.msra.mxu0 0.0
    %1500 = vmatprep.subr.mxu0 0.0
    %1501 = vmatpush1.msra.mxu0 0.0
    %1502 = vmatprep.subr.mxu0 0.0
    %1503 = vmatpush1.msra.mxu0 0.0
    %1504 = vmatprep.subr.mxu0 0.0
    %1505 = vmatpush1.msra.mxu0 0.0
    %1506 = vmatprep.subr.mxu0 0.0
    %1507 = vmatpush1.msra.mxu0 0.0
    %1508 = vmatprep.subr.mxu0 0.0
    %1509 = vmatpush1.msra.mxu0 0.0
    %1510 = vmatprep.subr.mxu0 0.0
    %1511 = vmatpush1.msra.mxu0 0.0
    %1512 = vmatprep.subr.mxu0 0.0
    %1513 = vmatpush1.msra.mxu0 0.0
    %1514 = vmatprep.mubr.f32.mxu0 0.0
    %1515 = vmatmul.mubr.f32.gmra.mrb[0].mxu0 %v1369
    %v1516 = vpop.f32.mrb[0].mxu0
    %v1517 = vadd.f32 0.0, %v1516
    %v1518 = vpop.f32.mrb[0].mxu0
    %v1519 = vadd.f32 0.0, %v1518
    %1520 = vdwg.mxu0
    %v1521 = vadd.f32 %v1375, %v1446
    %v1522 = vadd.f32 %v1376, %v1448
    %v1523 = vadd.f32 %v1377, %v1517
    %v1524 = vadd.f32 %v1378, %v1519
    %v1525 = vxor.u32 %v1521, 2147483648
    %v1526 = vmul.f32 %v1525, 1.442695
    %v1527 = vpow.pop %v1526
    %v1528 = vadd.f32 %v1527, 1.0
    %v1529 = vrcp.pop %v1528
    %v1530 = vmul.f32 1.0, %v1529
    %v1531 = vxor.u32 %v1522, 2147483648
    %v1532 = vmul.f32 %v1531, 1.442695
    %v1533 = vpow.pop %v1532
    %v1534 = vadd.f32 %v1533, 1.0
    %v1535 = vrcp.pop %v1534
    %v1536 = vmul.f32 1.0, %v1535
    %v1537 = vtanh.pop %v1523
    %v1538 = vxor.u32 %v1524, 2147483648
    %v1539 = vmul.f32 %v1538, 1.442695
    %v1540 = vpow.pop %v1539
    %v1541 = vadd.f32 %v1540, 1.0
    %v1542 = vrcp.pop %v1541
    %v1543 = vmul.f32 1.0, %v1542
    %v1544 = vmul.f32 %v1536, %v1367
    %v1545 = vmul.f32 %v1530, %v1537
    %v1546 = vadd.f32 %v1544, %v1545
    %v1547 = vtanh.pop %v1546
    %v1548 = vmul.f32 %v1543, %v1547
    %s1549 = scalar_lea.vmem [#allocation3], 40
    %1550 = vst [vmem:[%s1549] sm:$0xff] %v1548
    %s1551 = smul.u32 6, 4
    %s1552 = smul.addr %s1551, 8
    %s1553 = scalar_lea.vmem [#allocation2], %s1552
    %v1554 = vld [vmem:[%s1553] sm:$0xff]
    %v1555 = vld [vmem:[%s1553 + $0x8] sm:$0xff]
    %v1556 = vld [vmem:[%s1553 + $0x10] sm:$0xff]
    %v1557 = vld [vmem:[%s1553 + $0x18] sm:$0xff]
    %1558 = vmatprep.subr.mxu0 %v413
    %1559 = vmatpush1.msra.mxu0 %v412
    %1560 = vmatprep.subr.mxu0 %v417
    %1561 = vmatpush1.msra.mxu0 %v416
    %1562 = vmatprep.subr.mxu0 %v421
    %1563 = vmatpush1.msra.mxu0 %v420
    %1564 = vmatprep.subr.mxu0 %v425
    %1565 = vmatpush1.msra.mxu0 %v424
    %1566 = vmatprep.subr.mxu0 %v429
    %1567 = vmatpush1.msra.mxu0 %v428
    %1568 = vmatprep.subr.mxu0 %v433
    %1569 = vmatpush1.msra.mxu0 %v432
    %1570 = vmatprep.subr.mxu0 %v437
    %1571 = vmatpush1.msra.mxu0 %v436
    %1572 = vmatprep.subr.mxu0 %v441
    %1573 = vmatpush1.msra.mxu0 %v440
    %1574 = vmatprep.subr.mxu0 %v445
    %1575 = vmatpush1.msra.mxu0 %v444
    %1576 = vmatprep.subr.mxu0 %v449
    %1577 = vmatpush1.msra.mxu0 %v448
    %1578 = vmatprep.subr.mxu0 %v453
    %1579 = vmatpush1.msra.mxu0 %v452
    %1580 = vmatprep.subr.mxu0 %v457
    %1581 = vmatpush1.msra.mxu0 %v456
    %1582 = vmatprep.subr.mxu0 %v461
    %1583 = vmatpush1.msra.mxu0 %v460
    %1584 = vmatprep.subr.mxu0 %v465
    %1585 = vmatpush1.msra.mxu0 %v464
    %1586 = vmatprep.subr.mxu0 %v469
    %1587 = vmatpush1.msra.mxu0 %v468
    %1588 = vmatprep.subr.mxu0 %v473
    %1589 = vmatpush1.msra.mxu0 %v472
    %1590 = vmatprep.subr.mxu0 0.0
    %1591 = vmatpush1.msra.mxu0 0.0
    %1592 = vmatprep.subr.mxu0 0.0
    %1593 = vmatpush1.msra.mxu0 0.0
    %1594 = vmatprep.subr.mxu0 0.0
    %1595 = vmatpush1.msra.mxu0 0.0
    %1596 = vmatprep.subr.mxu0 0.0
    %1597 = vmatpush1.msra.mxu0 0.0
    %1598 = vmatprep.subr.mxu0 0.0
    %1599 = vmatpush1.msra.mxu0 0.0
    %1600 = vmatprep.subr.mxu0 0.0
    %1601 = vmatpush1.msra.mxu0 0.0
    %1602 = vmatprep.subr.mxu0 0.0
    %1603 = vmatpush1.msra.mxu0 0.0
    %1604 = vmatprep.subr.mxu0 0.0
    %1605 = vmatpush1.msra.mxu0 0.0
    %1606 = vmatprep.subr.mxu0 0.0
    %1607 = vmatpush1.msra.mxu0 0.0
    %1608 = vmatprep.subr.mxu0 0.0
    %1609 = vmatpush1.msra.mxu0 0.0
    %1610 = vmatprep.subr.mxu0 0.0
    %1611 = vmatpush1.msra.mxu0 0.0
    %1612 = vmatprep.subr.mxu0 0.0
    %1613 = vmatpush1.msra.mxu0 0.0
    %1614 = vmatprep.subr.mxu0 0.0
    %1615 = vmatpush1.msra.mxu0 0.0
    %1616 = vmatprep.subr.mxu0 0.0
    %1617 = vmatpush1.msra.mxu0 0.0
    %1618 = vmatprep.subr.mxu0 0.0
    %1619 = vmatpush1.msra.mxu0 0.0
    %1620 = vmatprep.subr.mxu0 0.0
    %1621 = vmatpush1.msra.mxu0 0.0
    %1622 = vmatprep.mubr.f32.mxu0 0.0
    %1623 = vmatmul.mubr.f32.gmra.mrb[0].mxu0 %v1548
    %v1624 = vpop.f32.mrb[0].mxu0
    %v1625 = vadd.f32 0.0, %v1624
    %v1626 = vpop.f32.mrb[0].mxu0
    %v1627 = vadd.f32 0.0, %v1626
    %1628 = vdwg.mxu0
    %1629 = vmatprep.subr.mxu0 %v415
    %1630 = vmatpush1.msra.mxu0 %v414
    %1631 = vmatprep.subr.mxu0 %v419
    %1632 = vmatpush1.msra.mxu0 %v418
    %1633 = vmatprep.subr.mxu0 %v423
    %1634 = vmatpush1.msra.mxu0 %v422
    %1635 = vmatprep.subr.mxu0 %v427
    %1636 = vmatpush1.msra.mxu0 %v426
    %1637 = vmatprep.subr.mxu0 %v431
    %1638 = vmatpush1.msra.mxu0 %v430
    %1639 = vmatprep.subr.mxu0 %v435
    %1640 = vmatpush1.msra.mxu0 %v434
    %1641 = vmatprep.subr.mxu0 %v439
    %1642 = vmatpush1.msra.mxu0 %v438
    %1643 = vmatprep.subr.mxu0 %v443
    %1644 = vmatpush1.msra.mxu0 %v442
    %1645 = vmatprep.subr.mxu0 %v447
    %1646 = vmatpush1.msra.mxu0 %v446
    %1647 = vmatprep.subr.mxu0 %v451
    %1648 = vmatpush1.msra.mxu0 %v450
    %1649 = vmatprep.subr.mxu0 %v455
    %1650 = vmatpush1.msra.mxu0 %v454
    %1651 = vmatprep.subr.mxu0 %v459
    %1652 = vmatpush1.msra.mxu0 %v458
    %1653 = vmatprep.subr.mxu0 %v463
    %1654 = vmatpush1.msra.mxu0 %v462
    %1655 = vmatprep.subr.mxu0 %v467
    %1656 = vmatpush1.msra.mxu0 %v466
    %1657 = vmatprep.subr.mxu0 %v471
    %1658 = vmatpush1.msra.mxu0 %v470
    %1659 = vmatprep.subr.mxu0 %v475
    %1660 = vmatpush1.msra.mxu0 %v474
    %1661 = vmatprep.subr.mxu0 0.0
    %1662 = vmatpush1.msra.mxu0 0.0
    %1663 = vmatprep.subr.mxu0 0.0
    %1664 = vmatpush1.msra.mxu0 0.0
    %1665 = vmatprep.subr.mxu0 0.0
    %1666 = vmatpush1.msra.mxu0 0.0
    %1667 = vmatprep.subr.mxu0 0.0
    %1668 = vmatpush1.msra.mxu0 0.0
    %1669 = vmatprep.subr.mxu0 0.0
    %1670 = vmatpush1.msra.mxu0 0.0
    %1671 = vmatprep.subr.mxu0 0.0
    %1672 = vmatpush1.msra.mxu0 0.0
    %1673 = vmatprep.subr.mxu0 0.0
    %1674 = vmatpush1.msra.mxu0 0.0
    %1675 = vmatprep.subr.mxu0 0.0
    %1676 = vmatpush1.msra.mxu0 0.0
    %1677 = vmatprep.subr.mxu0 0.0
    %1678 = vmatpush1.msra.mxu0 0.0
    %1679 = vmatprep.subr.mxu0 0.0
    %1680 = vmatpush1.msra.mxu0 0.0
    %1681 = vmatprep.subr.mxu0 0.0
    %1682 = vmatpush1.msra.mxu0 0.0
    %1683 = vmatprep.subr.mxu0 0.0
    %1684 = vmatpush1.msra.mxu0 0.0
    %1685 = vmatprep.subr.mxu0 0.0
    %1686 = vmatpush1.msra.mxu0 0.0
    %1687 = vmatprep.subr.mxu0 0.0
    %1688 = vmatpush1.msra.mxu0 0.0
    %1689 = vmatprep.subr.mxu0 0.0
    %1690 = vmatpush1.msra.mxu0 0.0
    %1691 = vmatprep.subr.mxu0 0.0
    %1692 = vmatpush1.msra.mxu0 0.0
    %1693 = vmatprep.mubr.f32.mxu0 0.0
    %1694 = vmatmul.mubr.f32.gmra.mrb[0].mxu0 %v1548
    %v1695 = vpop.f32.mrb[0].mxu0
    %v1696 = vadd.f32 0.0, %v1695
    %v1697 = vpop.f32.mrb[0].mxu0
    %v1698 = vadd.f32 0.0, %v1697
    %1699 = vdwg.mxu0
    %v1700 = vadd.f32 %v1554, %v1625
    %v1701 = vadd.f32 %v1555, %v1627
    %v1702 = vadd.f32 %v1556, %v1696
    %v1703 = vadd.f32 %v1557, %v1698
    %v1704 = vxor.u32 %v1700, 2147483648
    %v1705 = vmul.f32 %v1704, 1.442695
    %v1706 = vpow.pop %v1705
    %v1707 = vadd.f32 %v1706, 1.0
    %v1708 = vrcp.pop %v1707
    %v1709 = vmul.f32 1.0, %v1708
    %v1710 = vxor.u32 %v1701, 2147483648
    %v1711 = vmul.f32 %v1710, 1.442695
    %v1712 = vpow.pop %v1711
    %v1713 = vadd.f32 %v1712, 1.0
    %v1714 = vrcp.pop %v1713
    %v1715 = vmul.f32 1.0, %v1714
    %v1716 = vtanh.pop %v1702
    %v1717 = vxor.u32 %v1703, 2147483648
    %v1718 = vmul.f32 %v1717, 1.442695
    %v1719 = vpow.pop %v1718
    %v1720 = vadd.f32 %v1719, 1.0
    %v1721 = vrcp.pop %v1720
    %v1722 = vmul.f32 1.0, %v1721
    %v1723 = vmul.f32 %v1715, %v1546
    %v1724 = vmul.f32 %v1709, %v1716
    %v1725 = vadd.f32 %v1723, %v1724
    %v1726 = vtanh.pop %v1725
    %v1727 = vmul.f32 %v1722, %v1726
    %s1728 = scalar_lea.vmem [#allocation3], 48
    %1729 = vst [vmem:[%s1728] sm:$0xff] %v1727
    %s1730 = smul.u32 7, 4
    %s1731 = smul.addr %s1730, 8
    %s1732 = scalar_lea.vmem [#allocation2], %s1731
    %v1733 = vld [vmem:[%s1732] sm:$0xff]
    %v1734 = vld [vmem:[%s1732 + $0x8] sm:$0xff]
    %v1735 = vld [vmem:[%s1732 + $0x10] sm:$0xff]
    %v1736 = vld [vmem:[%s1732 + $0x18] sm:$0xff]
    %1737 = vmatprep.subr.mxu0 %v413
    %1738 = vmatpush1.msra.mxu0 %v412
    %1739 = vmatprep.subr.mxu0 %v417
    %1740 = vmatpush1.msra.mxu0 %v416
    %1741 = vmatprep.subr.mxu0 %v421
    %1742 = vmatpush1.msra.mxu0 %v420
    %1743 = vmatprep.subr.mxu0 %v425
    %1744 = vmatpush1.msra.mxu0 %v424
    %1745 = vmatprep.subr.mxu0 %v429
    %1746 = vmatpush1.msra.mxu0 %v428
    %1747 = vmatprep.subr.mxu0 %v433
    %1748 = vmatpush1.msra.mxu0 %v432
    %1749 = vmatprep.subr.mxu0 %v437
    %1750 = vmatpush1.msra.mxu0 %v436
    %1751 = vmatprep.subr.mxu0 %v441
    %1752 = vmatpush1.msra.mxu0 %v440
    %1753 = vmatprep.subr.mxu0 %v445
    %1754 = vmatpush1.msra.mxu0 %v444
    %1755 = vmatprep.subr.mxu0 %v449
    %1756 = vmatpush1.msra.mxu0 %v448
    %1757 = vmatprep.subr.mxu0 %v453
    %1758 = vmatpush1.msra.mxu0 %v452
    %1759 = vmatprep.subr.mxu0 %v457
    %1760 = vmatpush1.msra.mxu0 %v456
    %1761 = vmatprep.subr.mxu0 %v461
    %1762 = vmatpush1.msra.mxu0 %v460
    %1763 = vmatprep.subr.mxu0 %v465
    %1764 = vmatpush1.msra.mxu0 %v464
    %1765 = vmatprep.subr.mxu0 %v469
    %1766 = vmatpush1.msra.mxu0 %v468
    %1767 = vmatprep.subr.mxu0 %v473
    %1768 = vmatpush1.msra.mxu0 %v472
    %1769 = vmatprep.subr.mxu0 0.0
    %1770 = vmatpush1.msra.mxu0 0.0
    %1771 = vmatprep.subr.mxu0 0.0
    %1772 = vmatpush1.msra.mxu0 0.0
    %1773 = vmatprep.subr.mxu0 0.0
    %1774 = vmatpush1.msra.mxu0 0.0
    %1775 = vmatprep.subr.mxu0 0.0
    %1776 = vmatpush1.msra.mxu0 0.0
    %1777 = vmatprep.subr.mxu0 0.0
    %1778 = vmatpush1.msra.mxu0 0.0
    %1779 = vmatprep.subr.mxu0 0.0
    %1780 = vmatpush1.msra.mxu0 0.0
    %1781 = vmatprep.subr.mxu0 0.0
    %1782 = vmatpush1.msra.mxu0 0.0
    %1783 = vmatprep.subr.mxu0 0.0
    %1784 = vmatpush1.msra.mxu0 0.0
    %1785 = vmatprep.subr.mxu0 0.0
    %1786 = vmatpush1.msra.mxu0 0.0
    %1787 = vmatprep.subr.mxu0 0.0
    %1788 = vmatpush1.msra.mxu0 0.0
    %1789 = vmatprep.subr.mxu0 0.0
    %1790 = vmatpush1.msra.mxu0 0.0
    %1791 = vmatprep.subr.mxu0 0.0
    %1792 = vmatpush1.msra.mxu0 0.0
    %1793 = vmatprep.subr.mxu0 0.0
    %1794 = vmatpush1.msra.mxu0 0.0
    %1795 = vmatprep.subr.mxu0 0.0
    %1796 = vmatpush1.msra.mxu0 0.0
    %1797 = vmatprep.subr.mxu0 0.0
    %1798 = vmatpush1.msra.mxu0 0.0
    %1799 = vmatprep.subr.mxu0 0.0
    %1800 = vmatpush1.msra.mxu0 0.0
    %1801 = vmatprep.mubr.f32.mxu0 0.0
    %1802 = vmatmul.mubr.f32.gmra.mrb[0].mxu0 %v1727
    %v1803 = vpop.f32.mrb[0].mxu0
    %v1804 = vadd.f32 0.0, %v1803
    %v1805 = vpop.f32.mrb[0].mxu0
    %v1806 = vadd.f32 0.0, %v1805
    %1807 = vdwg.mxu0
    %1808 = vmatprep.subr.mxu0 %v415
    %1809 = vmatpush1.msra.mxu0 %v414
    %1810 = vmatprep.subr.mxu0 %v419
    %1811 = vmatpush1.msra.mxu0 %v418
    %1812 = vmatprep.subr.mxu0 %v423
    %1813 = vmatpush1.msra.mxu0 %v422
    %1814 = vmatprep.subr.mxu0 %v427
    %1815 = vmatpush1.msra.mxu0 %v426
    %1816 = vmatprep.subr.mxu0 %v431
    %1817 = vmatpush1.msra.mxu0 %v430
    %1818 = vmatprep.subr.mxu0 %v435
    %1819 = vmatpush1.msra.mxu0 %v434
    %1820 = vmatprep.subr.mxu0 %v439
    %1821 = vmatpush1.msra.mxu0 %v438
    %1822 = vmatprep.subr.mxu0 %v443
    %1823 = vmatpush1.msra.mxu0 %v442
    %1824 = vmatprep.subr.mxu0 %v447
    %1825 = vmatpush1.msra.mxu0 %v446
    %1826 = vmatprep.subr.mxu0 %v451
    %1827 = vmatpush1.msra.mxu0 %v450
    %1828 = vmatprep.subr.mxu0 %v455
    %1829 = vmatpush1.msra.mxu0 %v454
    %1830 = vmatprep.subr.mxu0 %v459
    %1831 = vmatpush1.msra.mxu0 %v458
    %1832 = vmatprep.subr.mxu0 %v463
    %1833 = vmatpush1.msra.mxu0 %v462
    %1834 = vmatprep.subr.mxu0 %v467
    %1835 = vmatpush1.msra.mxu0 %v466
    %1836 = vmatprep.subr.mxu0 %v471
    %1837 = vmatpush1.msra.mxu0 %v470
    %1838 = vmatprep.subr.mxu0 %v475
    %1839 = vmatpush1.msra.mxu0 %v474
    %1840 = vmatprep.subr.mxu0 0.0
    %1841 = vmatpush1.msra.mxu0 0.0
    %1842 = vmatprep.subr.mxu0 0.0
    %1843 = vmatpush1.msra.mxu0 0.0
    %1844 = vmatprep.subr.mxu0 0.0
    %1845 = vmatpush1.msra.mxu0 0.0
    %1846 = vmatprep.subr.mxu0 0.0
    %1847 = vmatpush1.msra.mxu0 0.0
    %1848 = vmatprep.subr.mxu0 0.0
    %1849 = vmatpush1.msra.mxu0 0.0
    %1850 = vmatprep.subr.mxu0 0.0
    %1851 = vmatpush1.msra.mxu0 0.0
    %1852 = vmatprep.subr.mxu0 0.0
    %1853 = vmatpush1.msra.mxu0 0.0
    %1854 = vmatprep.subr.mxu0 0.0
    %1855 = vmatpush1.msra.mxu0 0.0
    %1856 = vmatprep.subr.mxu0 0.0
    %1857 = vmatpush1.msra.mxu0 0.0
    %1858 = vmatprep.subr.mxu0 0.0
    %1859 = vmatpush1.msra.mxu0 0.0
    %1860 = vmatprep.subr.mxu0 0.0
    %1861 = vmatpush1.msra.mxu0 0.0
    %1862 = vmatprep.subr.mxu0 0.0
    %1863 = vmatpush1.msra.mxu0 0.0
    %1864 = vmatprep.subr.mxu0 0.0
    %1865 = vmatpush1.msra.mxu0 0.0
    %1866 = vmatprep.subr.mxu0 0.0
    %1867 = vmatpush1.msra.mxu0 0.0
    %1868 = vmatprep.subr.mxu0 0.0
    %1869 = vmatpush1.msra.mxu0 0.0
    %1870 = vmatprep.subr.mxu0 0.0
    %1871 = vmatpush1.msra.mxu0 0.0
    %1872 = vmatprep.mubr.f32.mxu0 0.0
    %1873 = vmatmul.mubr.f32.gmra.mrb[0].mxu0 %v1727
    %v1874 = vpop.f32.mrb[0].mxu0
    %v1875 = vadd.f32 0.0, %v1874
    %v1876 = vpop.f32.mrb[0].mxu0
    %v1877 = vadd.f32 0.0, %v1876
    %1878 = vdwg.mxu0
    %v1879 = vadd.f32 %v1733, %v1804
    %v1880 = vadd.f32 %v1734, %v1806
    %v1881 = vadd.f32 %v1735, %v1875
    %v1882 = vadd.f32 %v1736, %v1877
    %v1883 = vxor.u32 %v1879, 2147483648
    %v1884 = vmul.f32 %v1883, 1.442695
    %v1885 = vpow.pop %v1884
    %v1886 = vadd.f32 %v1885, 1.0
    %v1887 = vrcp.pop %v1886
    %v1888 = vmul.f32 1.0, %v1887
    %v1889 = vxor.u32 %v1880, 2147483648
    %v1890 = vmul.f32 %v1889, 1.442695
    %v1891 = vpow.pop %v1890
    %v1892 = vadd.f32 %v1891, 1.0
    %v1893 = vrcp.pop %v1892
    %v1894 = vmul.f32 1.0, %v1893
    %v1895 = vtanh.pop %v1881
    %v1896 = vxor.u32 %v1882, 2147483648
    %v1897 = vmul.f32 %v1896, 1.442695
    %v1898 = vpow.pop %v1897
    %v1899 = vadd.f32 %v1898, 1.0
    %v1900 = vrcp.pop %v1899
    %v1901 = vmul.f32 1.0, %v1900
    %v1902 = vmul.f32 %v1894, %v1725
    %v1903 = vmul.f32 %v1888, %v1895
    %v1904 = vadd.f32 %v1902, %v1903
    %v1905 = vtanh.pop %v1904
    %v1906 = vmul.f32 %v1901, %v1905
    %s1907 = scalar_lea.vmem [#allocation3], 56
    %1908 = vst [vmem:[%s1907] sm:$0xff] %v1906
    %1909 = vst [vmem:[%s9] sm:$0xff] %v1906
    %1910 = vst [vmem:[%s10] sm:$0xff] %v1904
    %v1911 = vld [vmem:[#allocation3] sm:$0xff]
    %v1912 = vld [vmem:[#allocation3 + $0x8] sm:$0xff]
    %v1913 = vld [vmem:[#allocation3 + $0x10] sm:$0xff]
    %v1914 = vld [vmem:[#allocation3 + $0x18] sm:$0xff]
    %v1915 = vld [vmem:[#allocation3 + $0x20] sm:$0xff]
    %v1916 = vld [vmem:[#allocation3 + $0x28] sm:$0xff]
    %v1917 = vld [vmem:[#allocation3 + $0x30] sm:$0xff]
    %v1918 = vld [vmem:[#allocation3 + $0x38] sm:$0xff]
    %s1919 = scalar_lea.vmem [#allocation4], 512
    %v1920 = vld [vmem:[%s1919] sm:$0xff]
    %v1921 = vld [vmem:[%s1919 + $0x8] sm:$0xff]
    %v1922 = vld [vmem:[%s1919 + $0x10] sm:$0xff]
    %v1923 = vld [vmem:[%s1919 + $0x18] sm:$0xff]
    %v1924 = vld [vmem:[%s1919 + $0x20] sm:$0xff]
    %v1925 = vld [vmem:[%s1919 + $0x28] sm:$0xff]
    %v1926 = vld [vmem:[%s1919 + $0x30] sm:$0xff]
    %v1927 = vld [vmem:[%s1919 + $0x38] sm:$0xff]
    %v1928 = vld [vmem:[%s1919 + $0x40] sm:$0xff]
    %v1929 = vld [vmem:[%s1919 + $0x48] sm:$0xff]
    %v1930 = vld [vmem:[%s1919 + $0x50] sm:$0xff]
    %v1931 = vld [vmem:[%s1919 + $0x58] sm:$0xff]
    %v1932 = vld [vmem:[%s1919 + $0x60] sm:$0xff]
    %v1933 = vld [vmem:[%s1919 + $0x68] sm:$0xff]
    %v1934 = vld [vmem:[%s1919 + $0x70] sm:$0xff]
    %v1935 = vld [vmem:[%s1919 + $0x78] sm:$0xff]
    %v1936 = vld [vmem:[%s1919 + $0x80] sm:$0xff]
    %v1937 = vld [vmem:[%s1919 + $0x88] sm:$0xff]
    %v1938 = vld [vmem:[%s1919 + $0x90] sm:$0xff]
    %v1939 = vld [vmem:[%s1919 + $0x98] sm:$0xff]
    %v1940 = vld [vmem:[%s1919 + $0xa0] sm:$0xff]
    %v1941 = vld [vmem:[%s1919 + $0xa8] sm:$0xff]
    %v1942 = vld [vmem:[%s1919 + $0xb0] sm:$0xff]
    %v1943 = vld [vmem:[%s1919 + $0xb8] sm:$0xff]
    %v1944 = vld [vmem:[%s1919 + $0xc0] sm:$0xff]
    %v1945 = vld [vmem:[%s1919 + $0xc8] sm:$0xff]
    %v1946 = vld [vmem:[%s1919 + $0xd0] sm:$0xff]
    %v1947 = vld [vmem:[%s1919 + $0xd8] sm:$0xff]
    %v1948 = vld [vmem:[%s1919 + $0xe0] sm:$0xff]
    %v1949 = vld [vmem:[%s1919 + $0xe8] sm:$0xff]
    %v1950 = vld [vmem:[%s1919 + $0xf0] sm:$0xff]
    %v1951 = vld [vmem:[%s1919 + $0xf8] sm:$0xff]
    %v1952 = vld [vmem:[%s1919 + $0x100] sm:$0xff]
    %v1953 = vld [vmem:[%s1919 + $0x108] sm:$0xff]
    %v1954 = vld [vmem:[%s1919 + $0x110] sm:$0xff]
    %v1955 = vld [vmem:[%s1919 + $0x118] sm:$0xff]
    %v1956 = vld [vmem:[%s1919 + $0x120] sm:$0xff]
    %v1957 = vld [vmem:[%s1919 + $0x128] sm:$0xff]
    %v1958 = vld [vmem:[%s1919 + $0x130] sm:$0xff]
    %v1959 = vld [vmem:[%s1919 + $0x138] sm:$0xff]
    %v1960 = vld [vmem:[%s1919 + $0x140] sm:$0xff]
    %v1961 = vld [vmem:[%s1919 + $0x148] sm:$0xff]
    %v1962 = vld [vmem:[%s1919 + $0x150] sm:$0xff]
    %v1963 = vld [vmem:[%s1919 + $0x158] sm:$0xff]
    %v1964 = vld [vmem:[%s1919 + $0x160] sm:$0xff]
    %v1965 = vld [vmem:[%s1919 + $0x168] sm:$0xff]
    %v1966 = vld [vmem:[%s1919 + $0x170] sm:$0xff]
    %v1967 = vld [vmem:[%s1919 + $0x178] sm:$0xff]
    %v1968 = vld [vmem:[%s1919 + $0x180] sm:$0xff]
    %v1969 = vld [vmem:[%s1919 + $0x188] sm:$0xff]
    %v1970 = vld [vmem:[%s1919 + $0x190] sm:$0xff]
    %v1971 = vld [vmem:[%s1919 + $0x198] sm:$0xff]
    %v1972 = vld [vmem:[%s1919 + $0x1a0] sm:$0xff]
    %v1973 = vld [vmem:[%s1919 + $0x1a8] sm:$0xff]
    %v1974 = vld [vmem:[%s1919 + $0x1b0] sm:$0xff]
    %v1975 = vld [vmem:[%s1919 + $0x1b8] sm:$0xff]
    %v1976 = vld [vmem:[%s1919 + $0x1c0] sm:$0xff]
    %v1977 = vld [vmem:[%s1919 + $0x1c8] sm:$0xff]
    %v1978 = vld [vmem:[%s1919 + $0x1d0] sm:$0xff]
    %v1979 = vld [vmem:[%s1919 + $0x1d8] sm:$0xff]
    %v1980 = vld [vmem:[%s1919 + $0x1e0] sm:$0xff]
    %v1981 = vld [vmem:[%s1919 + $0x1e8] sm:$0xff]
    %v1982 = vld [vmem:[%s1919 + $0x1f0] sm:$0xff]
    %v1983 = vld [vmem:[%s1919 + $0x1f8] sm:$0xff]
    %s1984 = scalar_lea.vmem %s5, 4
    %v1985 = vld [vmem:[%s1984] sm:$0xf]
    %v1987 = vlaneseq
    %v1988 = vshrl.u32 %v1987, 7
    %v1989 = vsub.s32 0, %v1988
    %v1990 = vrot.slane %v1985, %v1989
    %v1991 = vlaneseq
    %v1992 = vshrl.u32 %v1991, 7
    %v1993 = vsub.s32 1, %v1992
    %v1994 = vrot.slane %v1985, %v1993
    %v1995 = vlaneseq
    %v1996 = vshrl.u32 %v1995, 7
    %v1997 = vsub.s32 2, %v1996
    %v1998 = vrot.slane %v1985, %v1997
    %v1999 = vlaneseq
    %v2000 = vshrl.u32 %v1999, 7
    %v2001 = vsub.s32 3, %v2000
    %v2002 = vrot.slane %v1985, %v2001
    %2007 = vmatprep.subr.mxu0 %v1921
    %2008 = vmatpush1.msra.mxu0 %v1920
    %2009 = vmatprep.subr.mxu0 %v1925
    %2010 = vmatpush1.msra.mxu0 %v1924
    %2011 = vmatprep.subr.mxu0 %v1929
    %2012 = vmatpush1.msra.mxu0 %v1928
    %2013 = vmatprep.subr.mxu0 %v1933
    %2014 = vmatpush1.msra.mxu0 %v1932
    %2015 = vmatprep.subr.mxu0 %v1937
    %2016 = vmatpush1.msra.mxu0 %v1936
    %2017 = vmatprep.subr.mxu0 %v1941
    %2018 = vmatpush1.msra.mxu0 %v1940
    %2019 = vmatprep.subr.mxu0 %v1945
    %2020 = vmatpush1.msra.mxu0 %v1944
    %2021 = vmatprep.subr.mxu0 %v1949
    %2022 = vmatpush1.msra.mxu0 %v1948
    %2023 = vmatprep.subr.mxu0 %v1953
    %2024 = vmatpush1.msra.mxu0 %v1952
    %2025 = vmatprep.subr.mxu0 %v1957
    %2026 = vmatpush1.msra.mxu0 %v1956
    %2027 = vmatprep.subr.mxu0 %v1961
    %2028 = vmatpush1.msra.mxu0 %v1960
    %2029 = vmatprep.subr.mxu0 %v1965
    %2030 = vmatpush1.msra.mxu0 %v1964
    %2031 = vmatprep.subr.mxu0 %v1969
    %2032 = vmatpush1.msra.mxu0 %v1968
    %2033 = vmatprep.subr.mxu0 %v1973
    %2034 = vmatpush1.msra.mxu0 %v1972
    %2035 = vmatprep.subr.mxu0 %v1977
    %2036 = vmatpush1.msra.mxu0 %v1976
    %2037 = vmatprep.subr.mxu0 %v1981
    %2038 = vmatpush1.msra.mxu0 %v1980
    %2039 = vmatprep.subr.mxu0 0.0
    %2040 = vmatpush1.msra.mxu0 0.0
    %2041 = vmatprep.subr.mxu0 0.0
    %2042 = vmatpush1.msra.mxu0 0.0
    %2043 = vmatprep.subr.mxu0 0.0
    %2044 = vmatpush1.msra.mxu0 0.0
    %2045 = vmatprep.subr.mxu0 0.0
    %2046 = vmatpush1.msra.mxu0 0.0
    %2047 = vmatprep.subr.mxu0 0.0
    %2048 = vmatpush1.msra.mxu0 0.0
    %2049 = vmatprep.subr.mxu0 0.0
    %2050 = vmatpush1.msra.mxu0 0.0
    %2051 = vmatprep.subr.mxu0 0.0
    %2052 = vmatpush1.msra.mxu0 0.0
    %2053 = vmatprep.subr.mxu0 0.0
    %2054 = vmatpush1.msra.mxu0 0.0
    %2055 = vmatprep.subr.mxu0 0.0
    %2056 = vmatpush1.msra.mxu0 0.0
    %2057 = vmatprep.subr.mxu0 0.0
    %2058 = vmatpush1.msra.mxu0 0.0
    %2059 = vmatprep.subr.mxu0 0.0
    %2060 = vmatpush1.msra.mxu0 0.0
    %2061 = vmatprep.subr.mxu0 0.0
    %2062 = vmatpush1.msra.mxu0 0.0
    %2063 = vmatprep.subr.mxu0 0.0
    %2064 = vmatpush1.msra.mxu0 0.0
    %2065 = vmatprep.subr.mxu0 0.0
    %2066 = vmatpush1.msra.mxu0 0.0
    %2067 = vmatprep.subr.mxu0 0.0
    %2068 = vmatpush1.msra.mxu0 0.0
    %2069 = vmatprep.subr.mxu0 0.0
    %2070 = vmatpush1.msra.mxu0 0.0
    %2071 = vmatprep.mubr.f32.mxu0 0.0
    %2072 = vmatmul.mubr.f32.gmra.mrb[0].mxu0 %v1911
    %v2073 = vpop.f32.mrb[0].mxu0
    %v2074 = vadd.f32 %v1990, %v2073
    %v2075 = vpop.f32.mrb[0].mxu0
    %v2076 = vadd.f32 %v1994, %v2075
    %2077 = vmatprep.mubr.f32.mxu0 0.0
    %2078 = vmatmul.mubr.f32.gmra.mrb[0].mxu0 %v1912
    %v2079 = vpop.f32.mrb[0].mxu0
    %v2080 = vadd.f32 %v1990, %v2079
    %v2081 = vpop.f32.mrb[0].mxu0
    %v2082 = vadd.f32 %v1994, %v2081
    %2083 = vmatprep.mubr.f32.mxu0 0.0
    %2084 = vmatmul.mubr.f32.gmra.mrb[0].mxu0 %v1913
    %v2085 = vpop.f32.mrb[0].mxu0
    %v2086 = vadd.f32 %v1990, %v2085
    %v2087 = vpop.f32.mrb[0].mxu0
    %v2088 = vadd.f32 %v1994, %v2087
    %2089 = vmatprep.mubr.f32.mxu0 0.0
    %2090 = vmatmul.mubr.f32.gmra.mrb[0].mxu0 %v1914
    %v2091 = vpop.f32.mrb[0].mxu0
    %v2092 = vadd.f32 %v1990, %v2091
    %v2093 = vpop.f32.mrb[0].mxu0
    %v2094 = vadd.f32 %v1994, %v2093
    %2095 = vmatprep.mubr.f32.mxu0 0.0
    %2096 = vmatmul.mubr.f32.gmra.mrb[0].mxu0 %v1915
    %v2097 = vpop.f32.mrb[0].mxu0
    %v2098 = vadd.f32 %v1990, %v2097
    %v2099 = vpop.f32.mrb[0].mxu0
    %v2100 = vadd.f32 %v1994, %v2099
    %2101 = vmatprep.mubr.f32.mxu0 0.0
    %2102 = vmatmul.mubr.f32.gmra.mrb[0].mxu0 %v1916
    %v2103 = vpop.f32.mrb[0].mxu0
    %v2104 = vadd.f32 %v1990, %v2103
    %v2105 = vpop.f32.mrb[0].mxu0
    %v2106 = vadd.f32 %v1994, %v2105
    %2107 = vmatprep.mubr.f32.mxu0 0.0
    %2108 = vmatmul.mubr.f32.gmra.mrb[0].mxu0 %v1917
    %v2109 = vpop.f32.mrb[0].mxu0
    %v2110 = vadd.f32 %v1990, %v2109
    %v2111 = vpop.f32.mrb[0].mxu0
    %v2112 = vadd.f32 %v1994, %v2111
    %2113 = vmatprep.mubr.f32.mxu0 0.0
    %2114 = vmatmul.mubr.f32.gmra.mrb[0].mxu0 %v1918
    %v2115 = vpop.f32.mrb[0].mxu0
    %v2116 = vadd.f32 %v1990, %v2115
    %v2117 = vpop.f32.mrb[0].mxu0
    %v2118 = vadd.f32 %v1994, %v2117
    %2119 = vdwg.mxu0
    %2120 = vmatprep.subr.mxu0 %v1923
    %2121 = vmatpush1.msra.mxu0 %v1922
    %2122 = vmatprep.subr.mxu0 %v1927
    %2123 = vmatpush1.msra.mxu0 %v1926
    %2124 = vmatprep.subr.mxu0 %v1931
    %2125 = vmatpush1.msra.mxu0 %v1930
    %2126 = vmatprep.subr.mxu0 %v1935
    %2127 = vmatpush1.msra.mxu0 %v1934
    %2128 = vmatprep.subr.mxu0 %v1939
    %2129 = vmatpush1.msra.mxu0 %v1938
    %2130 = vmatprep.subr.mxu0 %v1943
    %2131 = vmatpush1.msra.mxu0 %v1942
    %2132 = vmatprep.subr.mxu0 %v1947
    %2133 = vmatpush1.msra.mxu0 %v1946
    %2134 = vmatprep.subr.mxu0 %v1951
    %2135 = vmatpush1.msra.mxu0 %v1950
    %2136 = vmatprep.subr.mxu0 %v1955
    %2137 = vmatpush1.msra.mxu0 %v1954
    %2138 = vmatprep.subr.mxu0 %v1959
    %2139 = vmatpush1.msra.mxu0 %v1958
    %2140 = vmatprep.subr.mxu0 %v1963
    %2141 = vmatpush1.msra.mxu0 %v1962
    %2142 = vmatprep.subr.mxu0 %v1967
    %2143 = vmatpush1.msra.mxu0 %v1966
    %2144 = vmatprep.subr.mxu0 %v1971
    %2145 = vmatpush1.msra.mxu0 %v1970
    %2146 = vmatprep.subr.mxu0 %v1975
    %2147 = vmatpush1.msra.mxu0 %v1974
    %2148 = vmatprep.subr.mxu0 %v1979
    %2149 = vmatpush1.msra.mxu0 %v1978
    %2150 = vmatprep.subr.mxu0 %v1983
    %2151 = vmatpush1.msra.mxu0 %v1982
    %2152 = vmatprep.subr.mxu0 0.0
    %2153 = vmatpush1.msra.mxu0 0.0
    %2154 = vmatprep.subr.mxu0 0.0
    %2155 = vmatpush1.msra.mxu0 0.0
    %2156 = vmatprep.subr.mxu0 0.0
    %2157 = vmatpush1.msra.mxu0 0.0
    %2158 = vmatprep.subr.mxu0 0.0
    %2159 = vmatpush1.msra.mxu0 0.0
    %2160 = vmatprep.subr.mxu0 0.0
    %2161 = vmatpush1.msra.mxu0 0.0
    %2162 = vmatprep.subr.mxu0 0.0
    %2163 = vmatpush1.msra.mxu0 0.0
    %2164 = vmatprep.subr.mxu0 0.0
    %2165 = vmatpush1.msra.mxu0 0.0
    %2166 = vmatprep.subr.mxu0 0.0
    %2167 = vmatpush1.msra.mxu0 0.0
    %2168 = vmatprep.subr.mxu0 0.0
    %2169 = vmatpush1.msra.mxu0 0.0
    %2170 = vmatprep.subr.mxu0 0.0
    %2171 = vmatpush1.msra.mxu0 0.0
    %2172 = vmatprep.subr.mxu0 0.0
    %2173 = vmatpush1.msra.mxu0 0.0
    %2174 = vmatprep.subr.mxu0 0.0
    %2175 = vmatpush1.msra.mxu0 0.0
    %2176 = vmatprep.subr.mxu0 0.0
    %2177 = vmatpush1.msra.mxu0 0.0
    %2178 = vmatprep.subr.mxu0 0.0
    %2179 = vmatpush1.msra.mxu0 0.0
    %2180 = vmatprep.subr.mxu0 0.0
    %2181 = vmatpush1.msra.mxu0 0.0
    %2182 = vmatprep.subr.mxu0 0.0
    %2183 = vmatpush1.msra.mxu0 0.0
    %2184 = vmatprep.mubr.f32.mxu0 0.0
    %2185 = vmatmul.mubr.f32.gmra.mrb[0].mxu0 %v1911
    %v2186 = vpop.f32.mrb[0].mxu0
    %v2187 = vadd.f32 %v1998, %v2186
    %v2188 = vpop.f32.mrb[0].mxu0
    %v2189 = vadd.f32 %v2002, %v2188
    %2190 = vmatprep.mubr.f32.mxu0 0.0
    %2191 = vmatmul.mubr.f32.gmra.mrb[0].mxu0 %v1912
    %v2192 = vpop.f32.mrb[0].mxu0
    %v2193 = vadd.f32 %v1998, %v2192
    %v2194 = vpop.f32.mrb[0].mxu0
    %v2195 = vadd.f32 %v2002, %v2194
    %2196 = vmatprep.mubr.f32.mxu0 0.0
    %2197 = vmatmul.mubr.f32.gmra.mrb[0].mxu0 %v1913
    %v2198 = vpop.f32.mrb[0].mxu0
    %v2199 = vadd.f32 %v1998, %v2198
    %v2200 = vpop.f32.mrb[0].mxu0
    %v2201 = vadd.f32 %v2002, %v2200
    %2202 = vmatprep.mubr.f32.mxu0 0.0
    %2203 = vmatmul.mubr.f32.gmra.mrb[0].mxu0 %v1914
    %v2204 = vpop.f32.mrb[0].mxu0
    %v2205 = vadd.f32 %v1998, %v2204
    %v2206 = vpop.f32.mrb[0].mxu0
    %v2207 = vadd.f32 %v2002, %v2206
    %2208 = vmatprep.mubr.f32.mxu0 0.0
    %2209 = vmatmul.mubr.f32.gmra.mrb[0].mxu0 %v1915
    %v2210 = vpop.f32.mrb[0].mxu0
    %v2211 = vadd.f32 %v1998, %v2210
    %v2212 = vpop.f32.mrb[0].mxu0
    %v2213 = vadd.f32 %v2002, %v2212
    %2214 = vmatprep.mubr.f32.mxu0 0.0
    %2215 = vmatmul.mubr.f32.gmra.mrb[0].mxu0 %v1916
    %v2216 = vpop.f32.mrb[0].mxu0
    %v2217 = vadd.f32 %v1998, %v2216
    %v2218 = vpop.f32.mrb[0].mxu0
    %v2219 = vadd.f32 %v2002, %v2218
    %2220 = vmatprep.mubr.f32.mxu0 0.0
    %2221 = vmatmul.mubr.f32.gmra.mrb[0].mxu0 %v1917
    %v2222 = vpop.f32.mrb[0].mxu0
    %v2223 = vadd.f32 %v1998, %v2222
    %v2224 = vpop.f32.mrb[0].mxu0
    %v2225 = vadd.f32 %v2002, %v2224
    %2226 = vmatprep.mubr.f32.mxu0 0.0
    %2227 = vmatmul.mubr.f32.gmra.mrb[0].mxu0 %v1918
    %v2228 = vpop.f32.mrb[0].mxu0
    %v2229 = vadd.f32 %v1998, %v2228
    %v2230 = vpop.f32.mrb[0].mxu0
    %v2231 = vadd.f32 %v2002, %v2230
    %2232 = vdwg.mxu0
    %2233 = vst [vmem:[#allocation2] sm:$0xff] %v2074
    %2234 = vst [vmem:[#allocation2 + $0x8] sm:$0xff] %v2076
    %2235 = vst [vmem:[#allocation2 + $0x10] sm:$0xff] %v2187
    %2236 = vst [vmem:[#allocation2 + $0x18] sm:$0xff] %v2189
    %2237 = vst [vmem:[#allocation2 + $0x20] sm:$0xff] %v2080
    %2238 = vst [vmem:[#allocation2 + $0x28] sm:$0xff] %v2082
    %2239 = vst [vmem:[#allocation2 + $0x30] sm:$0xff] %v2193
    %2240 = vst [vmem:[#allocation2 + $0x38] sm:$0xff] %v2195
    %2241 = vst [vmem:[#allocation2 + $0x40] sm:$0xff] %v2086
    %2242 = vst [vmem:[#allocation2 + $0x48] sm:$0xff] %v2088
    %2243 = vst [vmem:[#allocation2 + $0x50] sm:$0xff] %v2199
    %2244 = vst [vmem:[#allocation2 + $0x58] sm:$0xff] %v2201
    %2245 = vst [vmem:[#allocation2 + $0x60] sm:$0xff] %v2092
    %2246 = vst [vmem:[#allocation2 + $0x68] sm:$0xff] %v2094
    %2247 = vst [vmem:[#allocation2 + $0x70] sm:$0xff] %v2205
    %2248 = vst [vmem:[#allocation2 + $0x78] sm:$0xff] %v2207
    %2249 = vst [vmem:[#allocation2 + $0x80] sm:$0xff] %v2098
    %2250 = vst [vmem:[#allocation2 + $0x88] sm:$0xff] %v2100
    %2251 = vst [vmem:[#allocation2 + $0x90] sm:$0xff] %v2211
    %2252 = vst [vmem:[#allocation2 + $0x98] sm:$0xff] %v2213
    %2253 = vst [vmem:[#allocation2 + $0xa0] sm:$0xff] %v2104
    %2254 = vst [vmem:[#allocation2 + $0xa8] sm:$0xff] %v2106
    %2255 = vst [vmem:[#allocation2 + $0xb0] sm:$0xff] %v2217
    %2256 = vst [vmem:[#allocation2 + $0xb8] sm:$0xff] %v2219
    %2257 = vst [vmem:[#allocation2 + $0xc0] sm:$0xff] %v2110
    %2258 = vst [vmem:[#allocation2 + $0xc8] sm:$0xff] %v2112
    %2259 = vst [vmem:[#allocation2 + $0xd0] sm:$0xff] %v2223
    %2260 = vst [vmem:[#allocation2 + $0xd8] sm:$0xff] %v2225
    %2261 = vst [vmem:[#allocation2 + $0xe0] sm:$0xff] %v2116
    %2262 = vst [vmem:[#allocation2 + $0xe8] sm:$0xff] %v2118
    %2263 = vst [vmem:[#allocation2 + $0xf0] sm:$0xff] %v2229
    %2264 = vst [vmem:[#allocation2 + $0xf8] sm:$0xff] %v2231
    %s2265 = scalar_lea.vmem [#allocation6], 512
    %v2266 = vld [vmem:[%s2265] sm:$0xff]
    %v2267 = vld [vmem:[%s2265 + $0x8] sm:$0xff]
    %v2268 = vld [vmem:[%s2265 + $0x10] sm:$0xff]
    %v2269 = vld [vmem:[%s2265 + $0x18] sm:$0xff]
    %v2270 = vld [vmem:[%s2265 + $0x20] sm:$0xff]
    %v2271 = vld [vmem:[%s2265 + $0x28] sm:$0xff]
    %v2272 = vld [vmem:[%s2265 + $0x30] sm:$0xff]
    %v2273 = vld [vmem:[%s2265 + $0x38] sm:$0xff]
    %v2274 = vld [vmem:[%s2265 + $0x40] sm:$0xff]
    %v2275 = vld [vmem:[%s2265 + $0x48] sm:$0xff]
    %v2276 = vld [vmem:[%s2265 + $0x50] sm:$0xff]
    %v2277 = vld [vmem:[%s2265 + $0x58] sm:$0xff]
    %v2278 = vld [vmem:[%s2265 + $0x60] sm:$0xff]
    %v2279 = vld [vmem:[%s2265 + $0x68] sm:$0xff]
    %v2280 = vld [vmem:[%s2265 + $0x70] sm:$0xff]
    %v2281 = vld [vmem:[%s2265 + $0x78] sm:$0xff]
    %v2282 = vld [vmem:[%s2265 + $0x80] sm:$0xff]
    %v2283 = vld [vmem:[%s2265 + $0x88] sm:$0xff]
    %v2284 = vld [vmem:[%s2265 + $0x90] sm:$0xff]
    %v2285 = vld [vmem:[%s2265 + $0x98] sm:$0xff]
    %v2286 = vld [vmem:[%s2265 + $0xa0] sm:$0xff]
    %v2287 = vld [vmem:[%s2265 + $0xa8] sm:$0xff]
    %v2288 = vld [vmem:[%s2265 + $0xb0] sm:$0xff]
    %v2289 = vld [vmem:[%s2265 + $0xb8] sm:$0xff]
    %v2290 = vld [vmem:[%s2265 + $0xc0] sm:$0xff]
    %v2291 = vld [vmem:[%s2265 + $0xc8] sm:$0xff]
    %v2292 = vld [vmem:[%s2265 + $0xd0] sm:$0xff]
    %v2293 = vld [vmem:[%s2265 + $0xd8] sm:$0xff]
    %v2294 = vld [vmem:[%s2265 + $0xe0] sm:$0xff]
    %v2295 = vld [vmem:[%s2265 + $0xe8] sm:$0xff]
    %v2296 = vld [vmem:[%s2265 + $0xf0] sm:$0xff]
    %v2297 = vld [vmem:[%s2265 + $0xf8] sm:$0xff]
    %v2298 = vld [vmem:[%s2265 + $0x100] sm:$0xff]
    %v2299 = vld [vmem:[%s2265 + $0x108] sm:$0xff]
    %v2300 = vld [vmem:[%s2265 + $0x110] sm:$0xff]
    %v2301 = vld [vmem:[%s2265 + $0x118] sm:$0xff]
    %v2302 = vld [vmem:[%s2265 + $0x120] sm:$0xff]
    %v2303 = vld [vmem:[%s2265 + $0x128] sm:$0xff]
    %v2304 = vld [vmem:[%s2265 + $0x130] sm:$0xff]
    %v2305 = vld [vmem:[%s2265 + $0x138] sm:$0xff]
    %v2306 = vld [vmem:[%s2265 + $0x140] sm:$0xff]
    %v2307 = vld [vmem:[%s2265 + $0x148] sm:$0xff]
    %v2308 = vld [vmem:[%s2265 + $0x150] sm:$0xff]
    %v2309 = vld [vmem:[%s2265 + $0x158] sm:$0xff]
    %v2310 = vld [vmem:[%s2265 + $0x160] sm:$0xff]
    %v2311 = vld [vmem:[%s2265 + $0x168] sm:$0xff]
    %v2312 = vld [vmem:[%s2265 + $0x170] sm:$0xff]
    %v2313 = vld [vmem:[%s2265 + $0x178] sm:$0xff]
    %v2314 = vld [vmem:[%s2265 + $0x180] sm:$0xff]
    %v2315 = vld [vmem:[%s2265 + $0x188] sm:$0xff]
    %v2316 = vld [vmem:[%s2265 + $0x190] sm:$0xff]
    %v2317 = vld [vmem:[%s2265 + $0x198] sm:$0xff]
    %v2318 = vld [vmem:[%s2265 + $0x1a0] sm:$0xff]
    %v2319 = vld [vmem:[%s2265 + $0x1a8] sm:$0xff]
    %v2320 = vld [vmem:[%s2265 + $0x1b0] sm:$0xff]
    %v2321 = vld [vmem:[%s2265 + $0x1b8] sm:$0xff]
    %v2322 = vld [vmem:[%s2265 + $0x1c0] sm:$0xff]
    %v2323 = vld [vmem:[%s2265 + $0x1c8] sm:$0xff]
    %v2324 = vld [vmem:[%s2265 + $0x1d0] sm:$0xff]
    %v2325 = vld [vmem:[%s2265 + $0x1d8] sm:$0xff]
    %v2326 = vld [vmem:[%s2265 + $0x1e0] sm:$0xff]
    %v2327 = vld [vmem:[%s2265 + $0x1e8] sm:$0xff]
    %v2328 = vld [vmem:[%s2265 + $0x1f0] sm:$0xff]
    %v2329 = vld [vmem:[%s2265 + $0x1f8] sm:$0xff]
    %s2330 = scalar_lea.vmem %s1, 8
    %v2331 = vld [vmem:[%s2330] sm:$0xff]
    %s2332 = scalar_lea.vmem %s2, 8
    %v2333 = vld [vmem:[%s2332] sm:$0xff]
    %v2334 = vld [vmem:[%s480] sm:$0xff]
    %v2335 = vld [vmem:[%s480 + $0x8] sm:$0xff]
    %v2336 = vld [vmem:[%s480 + $0x10] sm:$0xff]
    %v2337 = vld [vmem:[%s480 + $0x18] sm:$0xff]
    %2338 = vmatprep.subr.mxu0 %v2267
    %2339 = vmatpush1.msra.mxu0 %v2266
    %2340 = vmatprep.subr.mxu0 %v2271
    %2341 = vmatpush1.msra.mxu0 %v2270
    %2342 = vmatprep.subr.mxu0 %v2275
    %2343 = vmatpush1.msra.mxu0 %v2274
    %2344 = vmatprep.subr.mxu0 %v2279
    %2345 = vmatpush1.msra.mxu0 %v2278
    %2346 = vmatprep.subr.mxu0 %v2283
    %2347 = vmatpush1.msra.mxu0 %v2282
    %2348 = vmatprep.subr.mxu0 %v2287
    %2349 = vmatpush1.msra.mxu0 %v2286
    %2350 = vmatprep.subr.mxu0 %v2291
    %2351 = vmatpush1.msra.mxu0 %v2290
    %2352 = vmatprep.subr.mxu0 %v2295
    %2353 = vmatpush1.msra.mxu0 %v2294
    %2354 = vmatprep.subr.mxu0 %v2299
    %2355 = vmatpush1.msra.mxu0 %v2298
    %2356 = vmatprep.subr.mxu0 %v2303
    %2357 = vmatpush1.msra.mxu0 %v2302
    %2358 = vmatprep.subr.mxu0 %v2307
    %2359 = vmatpush1.msra.mxu0 %v2306
    %2360 = vmatprep.subr.mxu0 %v2311
    %2361 = vmatpush1.msra.mxu0 %v2310
    %2362 = vmatprep.subr.mxu0 %v2315
    %2363 = vmatpush1.msra.mxu0 %v2314
    %2364 = vmatprep.subr.mxu0 %v2319
    %2365 = vmatpush1.msra.mxu0 %v2318
    %2366 = vmatprep.subr.mxu0 %v2323
    %2367 = vmatpush1.msra.mxu0 %v2322
    %2368 = vmatprep.subr.mxu0 %v2327
    %2369 = vmatpush1.msra.mxu0 %v2326
    %2370 = vmatprep.subr.mxu0 0.0
    %2371 = vmatpush1.msra.mxu0 0.0
    %2372 = vmatprep.subr.mxu0 0.0
    %2373 = vmatpush1.msra.mxu0 0.0
    %2374 = vmatprep.subr.mxu0 0.0
    %2375 = vmatpush1.msra.mxu0 0.0
    %2376 = vmatprep.subr.mxu0 0.0
    %2377 = vmatpush1.msra.mxu0 0.0
    %2378 = vmatprep.subr.mxu0 0.0
    %2379 = vmatpush1.msra.mxu0 0.0
    %2380 = vmatprep.subr.mxu0 0.0
    %2381 = vmatpush1.msra.mxu0 0.0
    %2382 = vmatprep.subr.mxu0 0.0
    %2383 = vmatpush1.msra.mxu0 0.0
    %2384 = vmatprep.subr.mxu0 0.0
    %2385 = vmatpush1.msra.mxu0 0.0
    %2386 = vmatprep.subr.mxu0 0.0
    %2387 = vmatpush1.msra.mxu0 0.0
    %2388 = vmatprep.subr.mxu0 0.0
    %2389 = vmatpush1.msra.mxu0 0.0
    %2390 = vmatprep.subr.mxu0 0.0
    %2391 = vmatpush1.msra.mxu0 0.0
    %2392 = vmatprep.subr.mxu0 0.0
    %2393 = vmatpush1.msra.mxu0 0.0
    %2394 = vmatprep.subr.mxu0 0.0
    %2395 = vmatpush1.msra.mxu0 0.0
    %2396 = vmatprep.subr.mxu0 0.0
    %2397 = vmatpush1.msra.mxu0 0.0
    %2398 = vmatprep.subr.mxu0 0.0
    %2399 = vmatpush1.msra.mxu0 0.0
    %2400 = vmatprep.subr.mxu0 0.0
    %2401 = vmatpush1.msra.mxu0 0.0
    %2402 = vmatprep.mubr.f32.mxu0 0.0
    %2403 = vmatmul.mubr.f32.gmra.mrb[0].mxu0 %v2331
    %v2404 = vpop.f32.mrb[0].mxu0
    %v2405 = vadd.f32 0.0, %v2404
    %v2406 = vpop.f32.mrb[0].mxu0
    %v2407 = vadd.f32 0.0, %v2406
    %2408 = vdwg.mxu0
    %2409 = vmatprep.subr.mxu0 %v2269
    %2410 = vmatpush1.msra.mxu0 %v2268
    %2411 = vmatprep.subr.mxu0 %v2273
    %2412 = vmatpush1.msra.mxu0 %v2272
    %2413 = vmatprep.subr.mxu0 %v2277
    %2414 = vmatpush1.msra.mxu0 %v2276
    %2415 = vmatprep.subr.mxu0 %v2281
    %2416 = vmatpush1.msra.mxu0 %v2280
    %2417 = vmatprep.subr.mxu0 %v2285
    %2418 = vmatpush1.msra.mxu0 %v2284
    %2419 = vmatprep.subr.mxu0 %v2289
    %2420 = vmatpush1.msra.mxu0 %v2288
    %2421 = vmatprep.subr.mxu0 %v2293
    %2422 = vmatpush1.msra.mxu0 %v2292
    %2423 = vmatprep.subr.mxu0 %v2297
    %2424 = vmatpush1.msra.mxu0 %v2296
    %2425 = vmatprep.subr.mxu0 %v2301
    %2426 = vmatpush1.msra.mxu0 %v2300
    %2427 = vmatprep.subr.mxu0 %v2305
    %2428 = vmatpush1.msra.mxu0 %v2304
    %2429 = vmatprep.subr.mxu0 %v2309
    %2430 = vmatpush1.msra.mxu0 %v2308
    %2431 = vmatprep.subr.mxu0 %v2313
    %2432 = vmatpush1.msra.mxu0 %v2312
    %2433 = vmatprep.subr.mxu0 %v2317
    %2434 = vmatpush1.msra.mxu0 %v2316
    %2435 = vmatprep.subr.mxu0 %v2321
    %2436 = vmatpush1.msra.mxu0 %v2320
    %2437 = vmatprep.subr.mxu0 %v2325
    %2438 = vmatpush1.msra.mxu0 %v2324
    %2439 = vmatprep.subr.mxu0 %v2329
    %2440 = vmatpush1.msra.mxu0 %v2328
    %2441 = vmatprep.subr.mxu0 0.0
    %2442 = vmatpush1.msra.mxu0 0.0
    %2443 = vmatprep.subr.mxu0 0.0
    %2444 = vmatpush1.msra.mxu0 0.0
    %2445 = vmatprep.subr.mxu0 0.0
    %2446 = vmatpush1.msra.mxu0 0.0
    %2447 = vmatprep.subr.mxu0 0.0
    %2448 = vmatpush1.msra.mxu0 0.0
    %2449 = vmatprep.subr.mxu0 0.0
    %2450 = vmatpush1.msra.mxu0 0.0
    %2451 = vmatprep.subr.mxu0 0.0
    %2452 = vmatpush1.msra.mxu0 0.0
    %2453 = vmatprep.subr.mxu0 0.0
    %2454 = vmatpush1.msra.mxu0 0.0
    %2455 = vmatprep.subr.mxu0 0.0
    %2456 = vmatpush1.msra.mxu0 0.0
    %2457 = vmatprep.subr.mxu0 0.0
    %2458 = vmatpush1.msra.mxu0 0.0
    %2459 = vmatprep.subr.mxu0 0.0
    %2460 = vmatpush1.msra.mxu0 0.0
    %2461 = vmatprep.subr.mxu0 0.0
    %2462 = vmatpush1.msra.mxu0 0.0
    %2463 = vmatprep.subr.mxu0 0.0
    %2464 = vmatpush1.msra.mxu0 0.0
    %2465 = vmatprep.subr.mxu0 0.0
    %2466 = vmatpush1.msra.mxu0 0.0
    %2467 = vmatprep.subr.mxu0 0.0
    %2468 = vmatpush1.msra.mxu0 0.0
    %2469 = vmatprep.subr.mxu0 0.0
    %2470 = vmatpush1.msra.mxu0 0.0
    %2471 = vmatprep.subr.mxu0 0.0
    %2472 = vmatpush1.msra.mxu0 0.0
    %2473 = vmatprep.mubr.f32.mxu0 0.0
    %2474 = vmatmul.mubr.f32.gmra.mrb[0].mxu0 %v2331
    %v2475 = vpop.f32.mrb[0].mxu0
    %v2476 = vadd.f32 0.0, %v2475
    %v2477 = vpop.f32.mrb[0].mxu0
    %v2478 = vadd.f32 0.0, %v2477
    %2479 = vdwg.mxu0
    %v2480 = vadd.f32 %v2334, %v2405
    %v2481 = vadd.f32 %v2335, %v2407
    %v2482 = vadd.f32 %v2336, %v2476
    %v2483 = vadd.f32 %v2337, %v2478
    %v2484 = vxor.u32 %v2480, 2147483648
    %v2485 = vmul.f32 %v2484, 1.442695
    %v2486 = vpow.pop %v2485
    %v2487 = vadd.f32 %v2486, 1.0
    %v2488 = vrcp.pop %v2487
    %v2489 = vmul.f32 1.0, %v2488
    %v2490 = vxor.u32 %v2481, 2147483648
    %v2491 = vmul.f32 %v2490, 1.442695
    %v2492 = vpow.pop %v2491
    %v2493 = vadd.f32 %v2492, 1.0
    %v2494 = vrcp.pop %v2493
    %v2495 = vmul.f32 1.0, %v2494
    %v2496 = vtanh.pop %v2482
    %v2497 = vxor.u32 %v2483, 2147483648
    %v2498 = vmul.f32 %v2497, 1.442695
    %v2499 = vpow.pop %v2498
    %v2500 = vadd.f32 %v2499, 1.0
    %v2501 = vrcp.pop %v2500
    %v2502 = vmul.f32 1.0, %v2501
    %v2503 = vmul.f32 %v2495, %v2333
    %v2504 = vmul.f32 %v2489, %v2496
    %v2505 = vadd.f32 %v2503, %v2504
    %v2506 = vtanh.pop %v2505
    %v2507 = vmul.f32 %v2502, %v2506
    %v2508 = vld [vmem:[%s658] sm:$0xff]
    %v2509 = vld [vmem:[%s658 + $0x8] sm:$0xff]
    %v2510 = vld [vmem:[%s658 + $0x10] sm:$0xff]
    %v2511 = vld [vmem:[%s658 + $0x18] sm:$0xff]
    %2512 = vmatprep.subr.mxu0 %v2267
    %2513 = vmatpush1.msra.mxu0 %v2266
    %2514 = vmatprep.subr.mxu0 %v2271
    %2515 = vmatpush1.msra.mxu0 %v2270
    %2516 = vmatprep.subr.mxu0 %v2275
    %2517 = vmatpush1.msra.mxu0 %v2274
    %2518 = vmatprep.subr.mxu0 %v2279
    %2519 = vmatpush1.msra.mxu0 %v2278
    %2520 = vmatprep.subr.mxu0 %v2283
    %2521 = vmatpush1.msra.mxu0 %v2282
    %2522 = vmatprep.subr.mxu0 %v2287
    %2523 = vmatpush1.msra.mxu0 %v2286
    %2524 = vmatprep.subr.mxu0 %v2291
    %2525 = vmatpush1.msra.mxu0 %v2290
    %2526 = vmatprep.subr.mxu0 %v2295
    %2527 = vmatpush1.msra.mxu0 %v2294
    %2528 = vmatprep.subr.mxu0 %v2299
    %2529 = vmatpush1.msra.mxu0 %v2298
    %2530 = vmatprep.subr.mxu0 %v2303
    %2531 = vmatpush1.msra.mxu0 %v2302
    %2532 = vmatprep.subr.mxu0 %v2307
    %2533 = vmatpush1.msra.mxu0 %v2306
    %2534 = vmatprep.subr.mxu0 %v2311
    %2535 = vmatpush1.msra.mxu0 %v2310
    %2536 = vmatprep.subr.mxu0 %v2315
    %2537 = vmatpush1.msra.mxu0 %v2314
    %2538 = vmatprep.subr.mxu0 %v2319
    %2539 = vmatpush1.msra.mxu0 %v2318
    %2540 = vmatprep.subr.mxu0 %v2323
    %2541 = vmatpush1.msra.mxu0 %v2322
    %2542 = vmatprep.subr.mxu0 %v2327
    %2543 = vmatpush1.msra.mxu0 %v2326
    %2544 = vmatprep.subr.mxu0 0.0
    %2545 = vmatpush1.msra.mxu0 0.0
    %2546 = vmatprep.subr.mxu0 0.0
    %2547 = vmatpush1.msra.mxu0 0.0
    %2548 = vmatprep.subr.mxu0 0.0
    %2549 = vmatpush1.msra.mxu0 0.0
    %2550 = vmatprep.subr.mxu0 0.0
    %2551 = vmatpush1.msra.mxu0 0.0
    %2552 = vmatprep.subr.mxu0 0.0
    %2553 = vmatpush1.msra.mxu0 0.0
    %2554 = vmatprep.subr.mxu0 0.0
    %2555 = vmatpush1.msra.mxu0 0.0
    %2556 = vmatprep.subr.mxu0 0.0
    %2557 = vmatpush1.msra.mxu0 0.0
    %2558 = vmatprep.subr.mxu0 0.0
    %2559 = vmatpush1.msra.mxu0 0.0
    %2560 = vmatprep.subr.mxu0 0.0
    %2561 = vmatpush1.msra.mxu0 0.0
    %2562 = vmatprep.subr.mxu0 0.0
    %2563 = vmatpush1.msra.mxu0 0.0
    %2564 = vmatprep.subr.mxu0 0.0
    %2565 = vmatpush1.msra.mxu0 0.0
    %2566 = vmatprep.subr.mxu0 0.0
    %2567 = vmatpush1.msra.mxu0 0.0
    %2568 = vmatprep.subr.mxu0 0.0
    %2569 = vmatpush1.msra.mxu0 0.0
    %2570 = vmatprep.subr.mxu0 0.0
    %2571 = vmatpush1.msra.mxu0 0.0
    %2572 = vmatprep.subr.mxu0 0.0
    %2573 = vmatpush1.msra.mxu0 0.0
    %2574 = vmatprep.subr.mxu0 0.0
    %2575 = vmatpush1.msra.mxu0 0.0
    %2576 = vmatprep.mubr.f32.mxu0 0.0
    %2577 = vmatmul.mubr.f32.gmra.mrb[0].mxu0 %v2507
    %v2578 = vpop.f32.mrb[0].mxu0
    %v2579 = vadd.f32 0.0, %v2578
    %v2580 = vpop.f32.mrb[0].mxu0
    %v2581 = vadd.f32 0.0, %v2580
    %2582 = vdwg.mxu0
    %2583 = vmatprep.subr.mxu0 %v2269
    %2584 = vmatpush1.msra.mxu0 %v2268
    %2585 = vmatprep.subr.mxu0 %v2273
    %2586 = vmatpush1.msra.mxu0 %v2272
    %2587 = vmatprep.subr.mxu0 %v2277
    %2588 = vmatpush1.msra.mxu0 %v2276
    %2589 = vmatprep.subr.mxu0 %v2281
    %2590 = vmatpush1.msra.mxu0 %v2280
    %2591 = vmatprep.subr.mxu0 %v2285
    %2592 = vmatpush1.msra.mxu0 %v2284
    %2593 = vmatprep.subr.mxu0 %v2289
    %2594 = vmatpush1.msra.mxu0 %v2288
    %2595 = vmatprep.subr.mxu0 %v2293
    %2596 = vmatpush1.msra.mxu0 %v2292
    %2597 = vmatprep.subr.mxu0 %v2297
    %2598 = vmatpush1.msra.mxu0 %v2296
    %2599 = vmatprep.subr.mxu0 %v2301
    %2600 = vmatpush1.msra.mxu0 %v2300
    %2601 = vmatprep.subr.mxu0 %v2305
    %2602 = vmatpush1.msra.mxu0 %v2304
    %2603 = vmatprep.subr.mxu0 %v2309
    %2604 = vmatpush1.msra.mxu0 %v2308
    %2605 = vmatprep.subr.mxu0 %v2313
    %2606 = vmatpush1.msra.mxu0 %v2312
    %2607 = vmatprep.subr.mxu0 %v2317
    %2608 = vmatpush1.msra.mxu0 %v2316
    %2609 = vmatprep.subr.mxu0 %v2321
    %2610 = vmatpush1.msra.mxu0 %v2320
    %2611 = vmatprep.subr.mxu0 %v2325
    %2612 = vmatpush1.msra.mxu0 %v2324
    %2613 = vmatprep.subr.mxu0 %v2329
    %2614 = vmatpush1.msra.mxu0 %v2328
    %2615 = vmatprep.subr.mxu0 0.0
    %2616 = vmatpush1.msra.mxu0 0.0
    %2617 = vmatprep.subr.mxu0 0.0
    %2618 = vmatpush1.msra.mxu0 0.0
    %2619 = vmatprep.subr.mxu0 0.0
    %2620 = vmatpush1.msra.mxu0 0.0
    %2621 = vmatprep.subr.mxu0 0.0
    %2622 = vmatpush1.msra.mxu0 0.0
    %2623 = vmatprep.subr.mxu0 0.0
    %2624 = vmatpush1.msra.mxu0 0.0
    %2625 = vmatprep.subr.mxu0 0.0
    %2626 = vmatpush1.msra.mxu0 0.0
    %2627 = vmatprep.subr.mxu0 0.0
    %2628 = vmatpush1.msra.mxu0 0.0
    %2629 = vmatprep.subr.mxu0 0.0
    %2630 = vmatpush1.msra.mxu0 0.0
    %2631 = vmatprep.subr.mxu0 0.0
    %2632 = vmatpush1.msra.mxu0 0.0
    %2633 = vmatprep.subr.mxu0 0.0
    %2634 = vmatpush1.msra.mxu0 0.0
    %2635 = vmatprep.subr.mxu0 0.0
    %2636 = vmatpush1.msra.mxu0 0.0
    %2637 = vmatprep.subr.mxu0 0.0
    %2638 = vmatpush1.msra.mxu0 0.0
    %2639 = vmatprep.subr.mxu0 0.0
    %2640 = vmatpush1.msra.mxu0 0.0
    %2641 = vmatprep.subr.mxu0 0.0
    %2642 = vmatpush1.msra.mxu0 0.0
    %2643 = vmatprep.subr.mxu0 0.0
    %2644 = vmatpush1.msra.mxu0 0.0
    %2645 = vmatprep.subr.mxu0 0.0
    %2646 = vmatpush1.msra.mxu0 0.0
    %2647 = vmatprep.mubr.f32.mxu0 0.0
    %2648 = vmatmul.mubr.f32.gmra.mrb[0].mxu0 %v2507
    %v2649 = vpop.f32.mrb[0].mxu0
    %v2650 = vadd.f32 0.0, %v2649
    %v2651 = vpop.f32.mrb[0].mxu0
    %v2652 = vadd.f32 0.0, %v2651
    %2653 = vdwg.mxu0
    %v2654 = vadd.f32 %v2508, %v2579
    %v2655 = vadd.f32 %v2509, %v2581
    %v2656 = vadd.f32 %v2510, %v2650
    %v2657 = vadd.f32 %v2511, %v2652
    %v2658 = vxor.u32 %v2654, 2147483648
    %v2659 = vmul.f32 %v2658, 1.442695
    %v2660 = vpow.pop %v2659
    %v2661 = vadd.f32 %v2660, 1.0
    %v2662 = vrcp.pop %v2661
    %v2663 = vmul.f32 1.0, %v2662
    %v2664 = vxor.u32 %v2655, 2147483648
    %v2665 = vmul.f32 %v2664, 1.442695
    %v2666 = vpow.pop %v2665
    %v2667 = vadd.f32 %v2666, 1.0
    %v2668 = vrcp.pop %v2667
    %v2669 = vmul.f32 1.0, %v2668
    %v2670 = vtanh.pop %v2656
    %v2671 = vxor.u32 %v2657, 2147483648
    %v2672 = vmul.f32 %v2671, 1.442695
    %v2673 = vpow.pop %v2672
    %v2674 = vadd.f32 %v2673, 1.0
    %v2675 = vrcp.pop %v2674
    %v2676 = vmul.f32 1.0, %v2675
    %v2677 = vmul.f32 %v2669, %v2505
    %v2678 = vmul.f32 %v2663, %v2670
    %v2679 = vadd.f32 %v2677, %v2678
    %v2680 = vtanh.pop %v2679
    %v2681 = vmul.f32 %v2676, %v2680
    %v2682 = vld [vmem:[%s837] sm:$0xff]
    %v2683 = vld [vmem:[%s837 + $0x8] sm:$0xff]
    %v2684 = vld [vmem:[%s837 + $0x10] sm:$0xff]
    %v2685 = vld [vmem:[%s837 + $0x18] sm:$0xff]
    %2686 = vmatprep.subr.mxu0 %v2267
    %2687 = vmatpush1.msra.mxu0 %v2266
    %2688 = vmatprep.subr.mxu0 %v2271
    %2689 = vmatpush1.msra.mxu0 %v2270
    %2690 = vmatprep.subr.mxu0 %v2275
    %2691 = vmatpush1.msra.mxu0 %v2274
    %2692 = vmatprep.subr.mxu0 %v2279
    %2693 = vmatpush1.msra.mxu0 %v2278
    %2694 = vmatprep.subr.mxu0 %v2283
    %2695 = vmatpush1.msra.mxu0 %v2282
    %2696 = vmatprep.subr.mxu0 %v2287
    %2697 = vmatpush1.msra.mxu0 %v2286
    %2698 = vmatprep.subr.mxu0 %v2291
    %2699 = vmatpush1.msra.mxu0 %v2290
    %2700 = vmatprep.subr.mxu0 %v2295
    %2701 = vmatpush1.msra.mxu0 %v2294
    %2702 = vmatprep.subr.mxu0 %v2299
    %2703 = vmatpush1.msra.mxu0 %v2298
    %2704 = vmatprep.subr.mxu0 %v2303
    %2705 = vmatpush1.msra.mxu0 %v2302
    %2706 = vmatprep.subr.mxu0 %v2307
    %2707 = vmatpush1.msra.mxu0 %v2306
    %2708 = vmatprep.subr.mxu0 %v2311
    %2709 = vmatpush1.msra.mxu0 %v2310
    %2710 = vmatprep.subr.mxu0 %v2315
    %2711 = vmatpush1.msra.mxu0 %v2314
    %2712 = vmatprep.subr.mxu0 %v2319
    %2713 = vmatpush1.msra.mxu0 %v2318
    %2714 = vmatprep.subr.mxu0 %v2323
    %2715 = vmatpush1.msra.mxu0 %v2322
    %2716 = vmatprep.subr.mxu0 %v2327
    %2717 = vmatpush1.msra.mxu0 %v2326
    %2718 = vmatprep.subr.mxu0 0.0
    %2719 = vmatpush1.msra.mxu0 0.0
    %2720 = vmatprep.subr.mxu0 0.0
    %2721 = vmatpush1.msra.mxu0 0.0
    %2722 = vmatprep.subr.mxu0 0.0
    %2723 = vmatpush1.msra.mxu0 0.0
    %2724 = vmatprep.subr.mxu0 0.0
    %2725 = vmatpush1.msra.mxu0 0.0
    %2726 = vmatprep.subr.mxu0 0.0
    %2727 = vmatpush1.msra.mxu0 0.0
    %2728 = vmatprep.subr.mxu0 0.0
    %2729 = vmatpush1.msra.mxu0 0.0
    %2730 = vmatprep.subr.mxu0 0.0
    %2731 = vmatpush1.msra.mxu0 0.0
    %2732 = vmatprep.subr.mxu0 0.0
    %2733 = vmatpush1.msra.mxu0 0.0
    %2734 = vmatprep.subr.mxu0 0.0
    %2735 = vmatpush1.msra.mxu0 0.0
    %2736 = vmatprep.subr.mxu0 0.0
    %2737 = vmatpush1.msra.mxu0 0.0
    %2738 = vmatprep.subr.mxu0 0.0
    %2739 = vmatpush1.msra.mxu0 0.0
    %2740 = vmatprep.subr.mxu0 0.0
    %2741 = vmatpush1.msra.mxu0 0.0
    %2742 = vmatprep.subr.mxu0 0.0
    %2743 = vmatpush1.msra.mxu0 0.0
    %2744 = vmatprep.subr.mxu0 0.0
    %2745 = vmatpush1.msra.mxu0 0.0
    %2746 = vmatprep.subr.mxu0 0.0
    %2747 = vmatpush1.msra.mxu0 0.0
    %2748 = vmatprep.subr.mxu0 0.0
    %2749 = vmatpush1.msra.mxu0 0.0
    %2750 = vmatprep.mubr.f32.mxu0 0.0
    %2751 = vmatmul.mubr.f32.gmra.mrb[0].mxu0 %v2681
    %v2752 = vpop.f32.mrb[0].mxu0
    %v2753 = vadd.f32 0.0, %v2752
    %v2754 = vpop.f32.mrb[0].mxu0
    %v2755 = vadd.f32 0.0, %v2754
    %2756 = vdwg.mxu0
    %2757 = vmatprep.subr.mxu0 %v2269
    %2758 = vmatpush1.msra.mxu0 %v2268
    %2759 = vmatprep.subr.mxu0 %v2273
    %2760 = vmatpush1.msra.mxu0 %v2272
    %2761 = vmatprep.subr.mxu0 %v2277
    %2762 = vmatpush1.msra.mxu0 %v2276
    %2763 = vmatprep.subr.mxu0 %v2281
    %2764 = vmatpush1.msra.mxu0 %v2280
    %2765 = vmatprep.subr.mxu0 %v2285
    %2766 = vmatpush1.msra.mxu0 %v2284
    %2767 = vmatprep.subr.mxu0 %v2289
    %2768 = vmatpush1.msra.mxu0 %v2288
    %2769 = vmatprep.subr.mxu0 %v2293
    %2770 = vmatpush1.msra.mxu0 %v2292
    %2771 = vmatprep.subr.mxu0 %v2297
    %2772 = vmatpush1.msra.mxu0 %v2296
    %2773 = vmatprep.subr.mxu0 %v2301
    %2774 = vmatpush1.msra.mxu0 %v2300
    %2775 = vmatprep.subr.mxu0 %v2305
    %2776 = vmatpush1.msra.mxu0 %v2304
    %2777 = vmatprep.subr.mxu0 %v2309
    %2778 = vmatpush1.msra.mxu0 %v2308
    %2779 = vmatprep.subr.mxu0 %v2313
    %2780 = vmatpush1.msra.mxu0 %v2312
    %2781 = vmatprep.subr.mxu0 %v2317
    %2782 = vmatpush1.msra.mxu0 %v2316
    %2783 = vmatprep.subr.mxu0 %v2321
    %2784 = vmatpush1.msra.mxu0 %v2320
    %2785 = vmatprep.subr.mxu0 %v2325
    %2786 = vmatpush1.msra.mxu0 %v2324
    %2787 = vmatprep.subr.mxu0 %v2329
    %2788 = vmatpush1.msra.mxu0 %v2328
    %2789 = vmatprep.subr.mxu0 0.0
    %2790 = vmatpush1.msra.mxu0 0.0
    %2791 = vmatprep.subr.mxu0 0.0
    %2792 = vmatpush1.msra.mxu0 0.0
    %2793 = vmatprep.subr.mxu0 0.0
    %2794 = vmatpush1.msra.mxu0 0.0
    %2795 = vmatprep.subr.mxu0 0.0
    %2796 = vmatpush1.msra.mxu0 0.0
    %2797 = vmatprep.subr.mxu0 0.0
    %2798 = vmatpush1.msra.mxu0 0.0
    %2799 = vmatprep.subr.mxu0 0.0
    %2800 = vmatpush1.msra.mxu0 0.0
    %2801 = vmatprep.subr.mxu0 0.0
    %2802 = vmatpush1.msra.mxu0 0.0
    %2803 = vmatprep.subr.mxu0 0.0
    %2804 = vmatpush1.msra.mxu0 0.0
    %2805 = vmatprep.subr.mxu0 0.0
    %2806 = vmatpush1.msra.mxu0 0.0
    %2807 = vmatprep.subr.mxu0 0.0
    %2808 = vmatpush1.msra.mxu0 0.0
    %2809 = vmatprep.subr.mxu0 0.0
    %2810 = vmatpush1.msra.mxu0 0.0
    %2811 = vmatprep.subr.mxu0 0.0
    %2812 = vmatpush1.msra.mxu0 0.0
    %2813 = vmatprep.subr.mxu0 0.0
    %2814 = vmatpush1.msra.mxu0 0.0
    %2815 = vmatprep.subr.mxu0 0.0
    %2816 = vmatpush1.msra.mxu0 0.0
    %2817 = vmatprep.subr.mxu0 0.0
    %2818 = vmatpush1.msra.mxu0 0.0
    %2819 = vmatprep.subr.mxu0 0.0
    %2820 = vmatpush1.msra.mxu0 0.0
    %2821 = vmatprep.mubr.f32.mxu0 0.0
    %2822 = vmatmul.mubr.f32.gmra.mrb[0].mxu0 %v2681
    %v2823 = vpop.f32.mrb[0].mxu0
    %v2824 = vadd.f32 0.0, %v2823
    %v2825 = vpop.f32.mrb[0].mxu0
    %v2826 = vadd.f32 0.0, %v2825
    %2827 = vdwg.mxu0
    %v2828 = vadd.f32 %v2682, %v2753
    %v2829 = vadd.f32 %v2683, %v2755
    %v2830 = vadd.f32 %v2684, %v2824
    %v2831 = vadd.f32 %v2685, %v2826
    %v2832 = vxor.u32 %v2828, 2147483648
    %v2833 = vmul.f32 %v2832, 1.442695
    %v2834 = vpow.pop %v2833
    %v2835 = vadd.f32 %v2834, 1.0
    %v2836 = vrcp.pop %v2835
    %v2837 = vmul.f32 1.0, %v2836
    %v2838 = vxor.u32 %v2829, 2147483648
    %v2839 = vmul.f32 %v2838, 1.442695
    %v2840 = vpow.pop %v2839
    %v2841 = vadd.f32 %v2840, 1.0
    %v2842 = vrcp.pop %v2841
    %v2843 = vmul.f32 1.0, %v2842
    %v2844 = vtanh.pop %v2830
    %v2845 = vxor.u32 %v2831, 2147483648
    %v2846 = vmul.f32 %v2845, 1.442695
    %v2847 = vpow.pop %v2846
    %v2848 = vadd.f32 %v2847, 1.0
    %v2849 = vrcp.pop %v2848
    %v2850 = vmul.f32 1.0, %v2849
    %v2851 = vmul.f32 %v2843, %v2679
    %v2852 = vmul.f32 %v2837, %v2844
    %v2853 = vadd.f32 %v2851, %v2852
    %v2854 = vtanh.pop %v2853
    %v2855 = vmul.f32 %v2850, %v2854
    %v2856 = vld [vmem:[%s1016] sm:$0xff]
    %v2857 = vld [vmem:[%s1016 + $0x8] sm:$0xff]
    %v2858 = vld [vmem:[%s1016 + $0x10] sm:$0xff]
    %v2859 = vld [vmem:[%s1016 + $0x18] sm:$0xff]
    %2860 = vmatprep.subr.mxu0 %v2267
    %2861 = vmatpush1.msra.mxu0 %v2266
    %2862 = vmatprep.subr.mxu0 %v2271
    %2863 = vmatpush1.msra.mxu0 %v2270
    %2864 = vmatprep.subr.mxu0 %v2275
    %2865 = vmatpush1.msra.mxu0 %v2274
    %2866 = vmatprep.subr.mxu0 %v2279
    %2867 = vmatpush1.msra.mxu0 %v2278
    %2868 = vmatprep.subr.mxu0 %v2283
    %2869 = vmatpush1.msra.mxu0 %v2282
    %2870 = vmatprep.subr.mxu0 %v2287
    %2871 = vmatpush1.msra.mxu0 %v2286
    %2872 = vmatprep.subr.mxu0 %v2291
    %2873 = vmatpush1.msra.mxu0 %v2290
    %2874 = vmatprep.subr.mxu0 %v2295
    %2875 = vmatpush1.msra.mxu0 %v2294
    %2876 = vmatprep.subr.mxu0 %v2299
    %2877 = vmatpush1.msra.mxu0 %v2298
    %2878 = vmatprep.subr.mxu0 %v2303
    %2879 = vmatpush1.msra.mxu0 %v2302
    %2880 = vmatprep.subr.mxu0 %v2307
    %2881 = vmatpush1.msra.mxu0 %v2306
    %2882 = vmatprep.subr.mxu0 %v2311
    %2883 = vmatpush1.msra.mxu0 %v2310
    %2884 = vmatprep.subr.mxu0 %v2315
    %2885 = vmatpush1.msra.mxu0 %v2314
    %2886 = vmatprep.subr.mxu0 %v2319
    %2887 = vmatpush1.msra.mxu0 %v2318
    %2888 = vmatprep.subr.mxu0 %v2323
    %2889 = vmatpush1.msra.mxu0 %v2322
    %2890 = vmatprep.subr.mxu0 %v2327
    %2891 = vmatpush1.msra.mxu0 %v2326
    %2892 = vmatprep.subr.mxu0 0.0
    %2893 = vmatpush1.msra.mxu0 0.0
    %2894 = vmatprep.subr.mxu0 0.0
    %2895 = vmatpush1.msra.mxu0 0.0
    %2896 = vmatprep.subr.mxu0 0.0
    %2897 = vmatpush1.msra.mxu0 0.0
    %2898 = vmatprep.subr.mxu0 0.0
    %2899 = vmatpush1.msra.mxu0 0.0
    %2900 = vmatprep.subr.mxu0 0.0
    %2901 = vmatpush1.msra.mxu0 0.0
    %2902 = vmatprep.subr.mxu0 0.0
    %2903 = vmatpush1.msra.mxu0 0.0
    %2904 = vmatprep.subr.mxu0 0.0
    %2905 = vmatpush1.msra.mxu0 0.0
    %2906 = vmatprep.subr.mxu0 0.0
    %2907 = vmatpush1.msra.mxu0 0.0
    %2908 = vmatprep.subr.mxu0 0.0
    %2909 = vmatpush1.msra.mxu0 0.0
    %2910 = vmatprep.subr.mxu0 0.0
    %2911 = vmatpush1.msra.mxu0 0.0
    %2912 = vmatprep.subr.mxu0 0.0
    %2913 = vmatpush1.msra.mxu0 0.0
    %2914 = vmatprep.subr.mxu0 0.0
    %2915 = vmatpush1.msra.mxu0 0.0
    %2916 = vmatprep.subr.mxu0 0.0
    %2917 = vmatpush1.msra.mxu0 0.0
    %2918 = vmatprep.subr.mxu0 0.0
    %2919 = vmatpush1.msra.mxu0 0.0
    %2920 = vmatprep.subr.mxu0 0.0
    %2921 = vmatpush1.msra.mxu0 0.0
    %2922 = vmatprep.subr.mxu0 0.0
    %2923 = vmatpush1.msra.mxu0 0.0
    %2924 = vmatprep.mubr.f32.mxu0 0.0
    %2925 = vmatmul.mubr.f32.gmra.mrb[0].mxu0 %v2855
    %v2926 = vpop.f32.mrb[0].mxu0
    %v2927 = vadd.f32 0.0, %v2926
    %v2928 = vpop.f32.mrb[0].mxu0
    %v2929 = vadd.f32 0.0, %v2928
    %2930 = vdwg.mxu0
    %2931 = vmatprep.subr.mxu0 %v2269
    %2932 = vmatpush1.msra.mxu0 %v2268
    %2933 = vmatprep.subr.mxu0 %v2273
    %2934 = vmatpush1.msra.mxu0 %v2272
    %2935 = vmatprep.subr.mxu0 %v2277
    %2936 = vmatpush1.msra.mxu0 %v2276
    %2937 = vmatprep.subr.mxu0 %v2281
    %2938 = vmatpush1.msra.mxu0 %v2280
    %2939 = vmatprep.subr.mxu0 %v2285
    %2940 = vmatpush1.msra.mxu0 %v2284
    %2941 = vmatprep.subr.mxu0 %v2289
    %2942 = vmatpush1.msra.mxu0 %v2288
    %2943 = vmatprep.subr.mxu0 %v2293
    %2944 = vmatpush1.msra.mxu0 %v2292
    %2945 = vmatprep.subr.mxu0 %v2297
    %2946 = vmatpush1.msra.mxu0 %v2296
    %2947 = vmatprep.subr.mxu0 %v2301
    %2948 = vmatpush1.msra.mxu0 %v2300
    %2949 = vmatprep.subr.mxu0 %v2305
    %2950 = vmatpush1.msra.mxu0 %v2304
    %2951 = vmatprep.subr.mxu0 %v2309
    %2952 = vmatpush1.msra.mxu0 %v2308
    %2953 = vmatprep.subr.mxu0 %v2313
    %2954 = vmatpush1.msra.mxu0 %v2312
    %2955 = vmatprep.subr.mxu0 %v2317
    %2956 = vmatpush1.msra.mxu0 %v2316
    %2957 = vmatprep.subr.mxu0 %v2321
    %2958 = vmatpush1.msra.mxu0 %v2320
    %2959 = vmatprep.subr.mxu0 %v2325
    %2960 = vmatpush1.msra.mxu0 %v2324
    %2961 = vmatprep.subr.mxu0 %v2329
    %2962 = vmatpush1.msra.mxu0 %v2328
    %2963 = vmatprep.subr.mxu0 0.0
    %2964 = vmatpush1.msra.mxu0 0.0
    %2965 = vmatprep.subr.mxu0 0.0
    %2966 = vmatpush1.msra.mxu0 0.0
    %2967 = vmatprep.subr.mxu0 0.0
    %2968 = vmatpush1.msra.mxu0 0.0
    %2969 = vmatprep.subr.mxu0 0.0
    %2970 = vmatpush1.msra.mxu0 0.0
    %2971 = vmatprep.subr.mxu0 0.0
    %2972 = vmatpush1.msra.mxu0 0.0
    %2973 = vmatprep.subr.mxu0 0.0
    %2974 = vmatpush1.msra.mxu0 0.0
    %2975 = vmatprep.subr.mxu0 0.0
    %2976 = vmatpush1.msra.mxu0 0.0
    %2977 = vmatprep.subr.mxu0 0.0
    %2978 = vmatpush1.msra.mxu0 0.0
    %2979 = vmatprep.subr.mxu0 0.0
    %2980 = vmatpush1.msra.mxu0 0.0
    %2981 = vmatprep.subr.mxu0 0.0
    %2982 = vmatpush1.msra.mxu0 0.0
    %2983 = vmatprep.subr.mxu0 0.0
    %2984 = vmatpush1.msra.mxu0 0.0
    %2985 = vmatprep.subr.mxu0 0.0
    %2986 = vmatpush1.msra.mxu0 0.0
    %2987 = vmatprep.subr.mxu0 0.0
    %2988 = vmatpush1.msra.mxu0 0.0
    %2989 = vmatprep.subr.mxu0 0.0
    %2990 = vmatpush1.msra.mxu0 0.0
    %2991 = vmatprep.subr.mxu0 0.0
    %2992 = vmatpush1.msra.mxu0 0.0
    %2993 = vmatprep.subr.mxu0 0.0
    %2994 = vmatpush1.msra.mxu0 0.0
    %2995 = vmatprep.mubr.f32.mxu0 0.0
    %2996 = vmatmul.mubr.f32.gmra.mrb[0].mxu0 %v2855
    %v2997 = vpop.f32.mrb[0].mxu0
    %v2998 = vadd.f32 0.0, %v2997
    %v2999 = vpop.f32.mrb[0].mxu0
    %v3000 = vadd.f32 0.0, %v2999
    %3001 = vdwg.mxu0
    %v3002 = vadd.f32 %v2856, %v2927
    %v3003 = vadd.f32 %v2857, %v2929
    %v3004 = vadd.f32 %v2858, %v2998
    %v3005 = vadd.f32 %v2859, %v3000
    %v3006 = vxor.u32 %v3002, 2147483648
    %v3007 = vmul.f32 %v3006, 1.442695
    %v3008 = vpow.pop %v3007
    %v3009 = vadd.f32 %v3008, 1.0
    %v3010 = vrcp.pop %v3009
    %v3011 = vmul.f32 1.0, %v3010
    %v3012 = vxor.u32 %v3003, 2147483648
    %v3013 = vmul.f32 %v3012, 1.442695
    %v3014 = vpow.pop %v3013
    %v3015 = vadd.f32 %v3014, 1.0
    %v3016 = vrcp.pop %v3015
    %v3017 = vmul.f32 1.0, %v3016
    %v3018 = vtanh.pop %v3004
    %v3019 = vxor.u32 %v3005, 2147483648
    %v3020 = vmul.f32 %v3019, 1.442695
    %v3021 = vpow.pop %v3020
    %v3022 = vadd.f32 %v3021, 1.0
    %v3023 = vrcp.pop %v3022
    %v3024 = vmul.f32 1.0, %v3023
    %v3025 = vmul.f32 %v3017, %v2853
    %v3026 = vmul.f32 %v3011, %v3018
    %v3027 = vadd.f32 %v3025, %v3026
    %v3028 = vtanh.pop %v3027
    %v3029 = vmul.f32 %v3024, %v3028
    %v3030 = vld [vmem:[%s1195] sm:$0xff]
    %v3031 = vld [vmem:[%s1195 + $0x8] sm:$0xff]
    %v3032 = vld [vmem:[%s1195 + $0x10] sm:$0xff]
    %v3033 = vld [vmem:[%s1195 + $0x18] sm:$0xff]
    %3034 = vmatprep.subr.mxu0 %v2267
    %3035 = vmatpush1.msra.mxu0 %v2266
    %3036 = vmatprep.subr.mxu0 %v2271
    %3037 = vmatpush1.msra.mxu0 %v2270
    %3038 = vmatprep.subr.mxu0 %v2275
    %3039 = vmatpush1.msra.mxu0 %v2274
    %3040 = vmatprep.subr.mxu0 %v2279
    %3041 = vmatpush1.msra.mxu0 %v2278
    %3042 = vmatprep.subr.mxu0 %v2283
    %3043 = vmatpush1.msra.mxu0 %v2282
    %3044 = vmatprep.subr.mxu0 %v2287
    %3045 = vmatpush1.msra.mxu0 %v2286
    %3046 = vmatprep.subr.mxu0 %v2291
    %3047 = vmatpush1.msra.mxu0 %v2290
    %3048 = vmatprep.subr.mxu0 %v2295
    %3049 = vmatpush1.msra.mxu0 %v2294
    %3050 = vmatprep.subr.mxu0 %v2299
    %3051 = vmatpush1.msra.mxu0 %v2298
    %3052 = vmatprep.subr.mxu0 %v2303
    %3053 = vmatpush1.msra.mxu0 %v2302
    %3054 = vmatprep.subr.mxu0 %v2307
    %3055 = vmatpush1.msra.mxu0 %v2306
    %3056 = vmatprep.subr.mxu0 %v2311
    %3057 = vmatpush1.msra.mxu0 %v2310
    %3058 = vmatprep.subr.mxu0 %v2315
    %3059 = vmatpush1.msra.mxu0 %v2314
    %3060 = vmatprep.subr.mxu0 %v2319
    %3061 = vmatpush1.msra.mxu0 %v2318
    %3062 = vmatprep.subr.mxu0 %v2323
    %3063 = vmatpush1.msra.mxu0 %v2322
    %3064 = vmatprep.subr.mxu0 %v2327
    %3065 = vmatpush1.msra.mxu0 %v2326
    %3066 = vmatprep.subr.mxu0 0.0
    %3067 = vmatpush1.msra.mxu0 0.0
    %3068 = vmatprep.subr.mxu0 0.0
    %3069 = vmatpush1.msra.mxu0 0.0
    %3070 = vmatprep.subr.mxu0 0.0
    %3071 = vmatpush1.msra.mxu0 0.0
    %3072 = vmatprep.subr.mxu0 0.0
    %3073 = vmatpush1.msra.mxu0 0.0
    %3074 = vmatprep.subr.mxu0 0.0
    %3075 = vmatpush1.msra.mxu0 0.0
    %3076 = vmatprep.subr.mxu0 0.0
    %3077 = vmatpush1.msra.mxu0 0.0
    %3078 = vmatprep.subr.mxu0 0.0
    %3079 = vmatpush1.msra.mxu0 0.0
    %3080 = vmatprep.subr.mxu0 0.0
    %3081 = vmatpush1.msra.mxu0 0.0
    %3082 = vmatprep.subr.mxu0 0.0
    %3083 = vmatpush1.msra.mxu0 0.0
    %3084 = vmatprep.subr.mxu0 0.0
    %3085 = vmatpush1.msra.mxu0 0.0
    %3086 = vmatprep.subr.mxu0 0.0
    %3087 = vmatpush1.msra.mxu0 0.0
    %3088 = vmatprep.subr.mxu0 0.0
    %3089 = vmatpush1.msra.mxu0 0.0
    %3090 = vmatprep.subr.mxu0 0.0
    %3091 = vmatpush1.msra.mxu0 0.0
    %3092 = vmatprep.subr.mxu0 0.0
    %3093 = vmatpush1.msra.mxu0 0.0
    %3094 = vmatprep.subr.mxu0 0.0
    %3095 = vmatpush1.msra.mxu0 0.0
    %3096 = vmatprep.subr.mxu0 0.0
    %3097 = vmatpush1.msra.mxu0 0.0
    %3098 = vmatprep.mubr.f32.mxu0 0.0
    %3099 = vmatmul.mubr.f32.gmra.mrb[0].mxu0 %v3029
    %v3100 = vpop.f32.mrb[0].mxu0
    %v3101 = vadd.f32 0.0, %v3100
    %v3102 = vpop.f32.mrb[0].mxu0
    %v3103 = vadd.f32 0.0, %v3102
    %3104 = vdwg.mxu0
    %3105 = vmatprep.subr.mxu0 %v2269
    %3106 = vmatpush1.msra.mxu0 %v2268
    %3107 = vmatprep.subr.mxu0 %v2273
    %3108 = vmatpush1.msra.mxu0 %v2272
    %3109 = vmatprep.subr.mxu0 %v2277
    %3110 = vmatpush1.msra.mxu0 %v2276
    %3111 = vmatprep.subr.mxu0 %v2281
    %3112 = vmatpush1.msra.mxu0 %v2280
    %3113 = vmatprep.subr.mxu0 %v2285
    %3114 = vmatpush1.msra.mxu0 %v2284
    %3115 = vmatprep.subr.mxu0 %v2289
    %3116 = vmatpush1.msra.mxu0 %v2288
    %3117 = vmatprep.subr.mxu0 %v2293
    %3118 = vmatpush1.msra.mxu0 %v2292
    %3119 = vmatprep.subr.mxu0 %v2297
    %3120 = vmatpush1.msra.mxu0 %v2296
    %3121 = vmatprep.subr.mxu0 %v2301
    %3122 = vmatpush1.msra.mxu0 %v2300
    %3123 = vmatprep.subr.mxu0 %v2305
    %3124 = vmatpush1.msra.mxu0 %v2304
    %3125 = vmatprep.subr.mxu0 %v2309
    %3126 = vmatpush1.msra.mxu0 %v2308
    %3127 = vmatprep.subr.mxu0 %v2313
    %3128 = vmatpush1.msra.mxu0 %v2312
    %3129 = vmatprep.subr.mxu0 %v2317
    %3130 = vmatpush1.msra.mxu0 %v2316
    %3131 = vmatprep.subr.mxu0 %v2321
    %3132 = vmatpush1.msra.mxu0 %v2320
    %3133 = vmatprep.subr.mxu0 %v2325
    %3134 = vmatpush1.msra.mxu0 %v2324
    %3135 = vmatprep.subr.mxu0 %v2329
    %3136 = vmatpush1.msra.mxu0 %v2328
    %3137 = vmatprep.subr.mxu0 0.0
    %3138 = vmatpush1.msra.mxu0 0.0
    %3139 = vmatprep.subr.mxu0 0.0
    %3140 = vmatpush1.msra.mxu0 0.0
    %3141 = vmatprep.subr.mxu0 0.0
    %3142 = vmatpush1.msra.mxu0 0.0
    %3143 = vmatprep.subr.mxu0 0.0
    %3144 = vmatpush1.msra.mxu0 0.0
    %3145 = vmatprep.subr.mxu0 0.0
    %3146 = vmatpush1.msra.mxu0 0.0
    %3147 = vmatprep.subr.mxu0 0.0
    %3148 = vmatpush1.msra.mxu0 0.0
    %3149 = vmatprep.subr.mxu0 0.0
    %3150 = vmatpush1.msra.mxu0 0.0
    %3151 = vmatprep.subr.mxu0 0.0
    %3152 = vmatpush1.msra.mxu0 0.0
    %3153 = vmatprep.subr.mxu0 0.0
    %3154 = vmatpush1.msra.mxu0 0.0
    %3155 = vmatprep.subr.mxu0 0.0
    %3156 = vmatpush1.msra.mxu0 0.0
    %3157 = vmatprep.subr.mxu0 0.0
    %3158 = vmatpush1.msra.mxu0 0.0
    %3159 = vmatprep.subr.mxu0 0.0
    %3160 = vmatpush1.msra.mxu0 0.0
    %3161 = vmatprep.subr.mxu0 0.0
    %3162 = vmatpush1.msra.mxu0 0.0
    %3163 = vmatprep.subr.mxu0 0.0
    %3164 = vmatpush1.msra.mxu0 0.0
    %3165 = vmatprep.subr.mxu0 0.0
    %3166 = vmatpush1.msra.mxu0 0.0
    %3167 = vmatprep.subr.mxu0 0.0
    %3168 = vmatpush1.msra.mxu0 0.0
    %3169 = vmatprep.mubr.f32.mxu0 0.0
    %3170 = vmatmul.mubr.f32.gmra.mrb[0].mxu0 %v3029
    %v3171 = vpop.f32.mrb[0].mxu0
    %v3172 = vadd.f32 0.0, %v3171
    %v3173 = vpop.f32.mrb[0].mxu0
    %v3174 = vadd.f32 0.0, %v3173
    %3175 = vdwg.mxu0
    %v3176 = vadd.f32 %v3030, %v3101
    %v3177 = vadd.f32 %v3031, %v3103
    %v3178 = vadd.f32 %v3032, %v3172
    %v3179 = vadd.f32 %v3033, %v3174
    %v3180 = vxor.u32 %v3176, 2147483648
    %v3181 = vmul.f32 %v3180, 1.442695
    %v3182 = vpow.pop %v3181
    %v3183 = vadd.f32 %v3182, 1.0
    %v3184 = vrcp.pop %v3183
    %v3185 = vmul.f32 1.0, %v3184
    %v3186 = vxor.u32 %v3177, 2147483648
    %v3187 = vmul.f32 %v3186, 1.442695
    %v3188 = vpow.pop %v3187
    %v3189 = vadd.f32 %v3188, 1.0
    %v3190 = vrcp.pop %v3189
    %v3191 = vmul.f32 1.0, %v3190
    %v3192 = vtanh.pop %v3178
    %v3193 = vxor.u32 %v3179, 2147483648
    %v3194 = vmul.f32 %v3193, 1.442695
    %v3195 = vpow.pop %v3194
    %v3196 = vadd.f32 %v3195, 1.0
    %v3197 = vrcp.pop %v3196
    %v3198 = vmul.f32 1.0, %v3197
    %v3199 = vmul.f32 %v3191, %v3027
    %v3200 = vmul.f32 %v3185, %v3192
    %v3201 = vadd.f32 %v3199, %v3200
    %v3202 = vtanh.pop %v3201
    %v3203 = vmul.f32 %v3198, %v3202
    %v3204 = vld [vmem:[%s1374] sm:$0xff]
    %v3205 = vld [vmem:[%s1374 + $0x8] sm:$0xff]
    %v3206 = vld [vmem:[%s1374 + $0x10] sm:$0xff]
    %v3207 = vld [vmem:[%s1374 + $0x18] sm:$0xff]
    %3208 = vmatprep.subr.mxu0 %v2267
    %3209 = vmatpush1.msra.mxu0 %v2266
    %3210 = vmatprep.subr.mxu0 %v2271
    %3211 = vmatpush1.msra.mxu0 %v2270
    %3212 = vmatprep.subr.mxu0 %v2275
    %3213 = vmatpush1.msra.mxu0 %v2274
    %3214 = vmatprep.subr.mxu0 %v2279
    %3215 = vmatpush1.msra.mxu0 %v2278
    %3216 = vmatprep.subr.mxu0 %v2283
    %3217 = vmatpush1.msra.mxu0 %v2282
    %3218 = vmatprep.subr.mxu0 %v2287
    %3219 = vmatpush1.msra.mxu0 %v2286
    %3220 = vmatprep.subr.mxu0 %v2291
    %3221 = vmatpush1.msra.mxu0 %v2290
    %3222 = vmatprep.subr.mxu0 %v2295
    %3223 = vmatpush1.msra.mxu0 %v2294
    %3224 = vmatprep.subr.mxu0 %v2299
    %3225 = vmatpush1.msra.mxu0 %v2298
    %3226 = vmatprep.subr.mxu0 %v2303
    %3227 = vmatpush1.msra.mxu0 %v2302
    %3228 = vmatprep.subr.mxu0 %v2307
    %3229 = vmatpush1.msra.mxu0 %v2306
    %3230 = vmatprep.subr.mxu0 %v2311
    %3231 = vmatpush1.msra.mxu0 %v2310
    %3232 = vmatprep.subr.mxu0 %v2315
    %3233 = vmatpush1.msra.mxu0 %v2314
    %3234 = vmatprep.subr.mxu0 %v2319
    %3235 = vmatpush1.msra.mxu0 %v2318
    %3236 = vmatprep.subr.mxu0 %v2323
    %3237 = vmatpush1.msra.mxu0 %v2322
    %3238 = vmatprep.subr.mxu0 %v2327
    %3239 = vmatpush1.msra.mxu0 %v2326
    %3240 = vmatprep.subr.mxu0 0.0
    %3241 = vmatpush1.msra.mxu0 0.0
    %3242 = vmatprep.subr.mxu0 0.0
    %3243 = vmatpush1.msra.mxu0 0.0
    %3244 = vmatprep.subr.mxu0 0.0
    %3245 = vmatpush1.msra.mxu0 0.0
    %3246 = vmatprep.subr.mxu0 0.0
    %3247 = vmatpush1.msra.mxu0 0.0
    %3248 = vmatprep.subr.mxu0 0.0
    %3249 = vmatpush1.msra.mxu0 0.0
    %3250 = vmatprep.subr.mxu0 0.0
    %3251 = vmatpush1.msra.mxu0 0.0
    %3252 = vmatprep.subr.mxu0 0.0
    %3253 = vmatpush1.msra.mxu0 0.0
    %3254 = vmatprep.subr.mxu0 0.0
    %3255 = vmatpush1.msra.mxu0 0.0
    %3256 = vmatprep.subr.mxu0 0.0
    %3257 = vmatpush1.msra.mxu0 0.0
    %3258 = vmatprep.subr.mxu0 0.0
    %3259 = vmatpush1.msra.mxu0 0.0
    %3260 = vmatprep.subr.mxu0 0.0
    %3261 = vmatpush1.msra.mxu0 0.0
    %3262 = vmatprep.subr.mxu0 0.0
    %3263 = vmatpush1.msra.mxu0 0.0
    %3264 = vmatprep.subr.mxu0 0.0
    %3265 = vmatpush1.msra.mxu0 0.0
    %3266 = vmatprep.subr.mxu0 0.0
    %3267 = vmatpush1.msra.mxu0 0.0
    %3268 = vmatprep.subr.mxu0 0.0
    %3269 = vmatpush1.msra.mxu0 0.0
    %3270 = vmatprep.subr.mxu0 0.0
    %3271 = vmatpush1.msra.mxu0 0.0
    %3272 = vmatprep.mubr.f32.mxu0 0.0
    %3273 = vmatmul.mubr.f32.gmra.mrb[0].mxu0 %v3203
    %v3274 = vpop.f32.mrb[0].mxu0
    %v3275 = vadd.f32 0.0, %v3274
    %v3276 = vpop.f32.mrb[0].mxu0
    %v3277 = vadd.f32 0.0, %v3276
    %3278 = vdwg.mxu0
    %3279 = vmatprep.subr.mxu0 %v2269
    %3280 = vmatpush1.msra.mxu0 %v2268
    %3281 = vmatprep.subr.mxu0 %v2273
    %3282 = vmatpush1.msra.mxu0 %v2272
    %3283 = vmatprep.subr.mxu0 %v2277
    %3284 = vmatpush1.msra.mxu0 %v2276
    %3285 = vmatprep.subr.mxu0 %v2281
    %3286 = vmatpush1.msra.mxu0 %v2280
    %3287 = vmatprep.subr.mxu0 %v2285
    %3288 = vmatpush1.msra.mxu0 %v2284
    %3289 = vmatprep.subr.mxu0 %v2289
    %3290 = vmatpush1.msra.mxu0 %v2288
    %3291 = vmatprep.subr.mxu0 %v2293
    %3292 = vmatpush1.msra.mxu0 %v2292
    %3293 = vmatprep.subr.mxu0 %v2297
    %3294 = vmatpush1.msra.mxu0 %v2296
    %3295 = vmatprep.subr.mxu0 %v2301
    %3296 = vmatpush1.msra.mxu0 %v2300
    %3297 = vmatprep.subr.mxu0 %v2305
    %3298 = vmatpush1.msra.mxu0 %v2304
    %3299 = vmatprep.subr.mxu0 %v2309
    %3300 = vmatpush1.msra.mxu0 %v2308
    %3301 = vmatprep.subr.mxu0 %v2313
    %3302 = vmatpush1.msra.mxu0 %v2312
    %3303 = vmatprep.subr.mxu0 %v2317
    %3304 = vmatpush1.msra.mxu0 %v2316
    %3305 = vmatprep.subr.mxu0 %v2321
    %3306 = vmatpush1.msra.mxu0 %v2320
    %3307 = vmatprep.subr.mxu0 %v2325
    %3308 = vmatpush1.msra.mxu0 %v2324
    %3309 = vmatprep.subr.mxu0 %v2329
    %3310 = vmatpush1.msra.mxu0 %v2328
    %3311 = vmatprep.subr.mxu0 0.0
    %3312 = vmatpush1.msra.mxu0 0.0
    %3313 = vmatprep.subr.mxu0 0.0
    %3314 = vmatpush1.msra.mxu0 0.0
    %3315 = vmatprep.subr.mxu0 0.0
    %3316 = vmatpush1.msra.mxu0 0.0
    %3317 = vmatprep.subr.mxu0 0.0
    %3318 = vmatpush1.msra.mxu0 0.0
    %3319 = vmatprep.subr.mxu0 0.0
    %3320 = vmatpush1.msra.mxu0 0.0
    %3321 = vmatprep.subr.mxu0 0.0
    %3322 = vmatpush1.msra.mxu0 0.0
    %3323 = vmatprep.subr.mxu0 0.0
    %3324 = vmatpush1.msra.mxu0 0.0
    %3325 = vmatprep.subr.mxu0 0.0
    %3326 = vmatpush1.msra.mxu0 0.0
    %3327 = vmatprep.subr.mxu0 0.0
    %3328 = vmatpush1.msra.mxu0 0.0
    %3329 = vmatprep.subr.mxu0 0.0
    %3330 = vmatpush1.msra.mxu0 0.0
    %3331 = vmatprep.subr.mxu0 0.0
    %3332 = vmatpush1.msra.mxu0 0.0
    %3333 = vmatprep.subr.mxu0 0.0
    %3334 = vmatpush1.msra.mxu0 0.0
    %3335 = vmatprep.subr.mxu0 0.0
    %3336 = vmatpush1.msra.mxu0 0.0
    %3337 = vmatprep.subr.mxu0 0.0
    %3338 = vmatpush1.msra.mxu0 0.0
    %3339 = vmatprep.subr.mxu0 0.0
    %3340 = vmatpush1.msra.mxu0 0.0
    %3341 = vmatprep.subr.mxu0 0.0
    %3342 = vmatpush1.msra.mxu0 0.0
    %3343 = vmatprep.mubr.f32.mxu0 0.0
    %3344 = vmatmul.mubr.f32.gmra.mrb[0].mxu0 %v3203
    %v3345 = vpop.f32.mrb[0].mxu0
    %v3346 = vadd.f32 0.0, %v3345
    %v3347 = vpop.f32.mrb[0].mxu0
    %v3348 = vadd.f32 0.0, %v3347
    %3349 = vdwg.mxu0
    %v3350 = vadd.f32 %v3204, %v3275
    %v3351 = vadd.f32 %v3205, %v3277
    %v3352 = vadd.f32 %v3206, %v3346
    %v3353 = vadd.f32 %v3207, %v3348
    %v3354 = vxor.u32 %v3350, 2147483648
    %v3355 = vmul.f32 %v3354, 1.442695
    %v3356 = vpow.pop %v3355
    %v3357 = vadd.f32 %v3356, 1.0
    %v3358 = vrcp.pop %v3357
    %v3359 = vmul.f32 1.0, %v3358
    %v3360 = vxor.u32 %v3351, 2147483648
    %v3361 = vmul.f32 %v3360, 1.442695
    %v3362 = vpow.pop %v3361
    %v3363 = vadd.f32 %v3362, 1.0
    %v3364 = vrcp.pop %v3363
    %v3365 = vmul.f32 1.0, %v3364
    %v3366 = vtanh.pop %v3352
    %v3367 = vxor.u32 %v3353, 2147483648
    %v3368 = vmul.f32 %v3367, 1.442695
    %v3369 = vpow.pop %v3368
    %v3370 = vadd.f32 %v3369, 1.0
    %v3371 = vrcp.pop %v3370
    %v3372 = vmul.f32 1.0, %v3371
    %v3373 = vmul.f32 %v3365, %v3201
    %v3374 = vmul.f32 %v3359, %v3366
    %v3375 = vadd.f32 %v3373, %v3374
    %v3376 = vtanh.pop %v3375
    %v3377 = vmul.f32 %v3372, %v3376
    %v3378 = vld [vmem:[%s1553] sm:$0xff]
    %v3379 = vld [vmem:[%s1553 + $0x8] sm:$0xff]
    %v3380 = vld [vmem:[%s1553 + $0x10] sm:$0xff]
    %v3381 = vld [vmem:[%s1553 + $0x18] sm:$0xff]
    %3382 = vmatprep.subr.mxu0 %v2267
    %3383 = vmatpush1.msra.mxu0 %v2266
    %3384 = vmatprep.subr.mxu0 %v2271
    %3385 = vmatpush1.msra.mxu0 %v2270
    %3386 = vmatprep.subr.mxu0 %v2275
    %3387 = vmatpush1.msra.mxu0 %v2274
    %3388 = vmatprep.subr.mxu0 %v2279
    %3389 = vmatpush1.msra.mxu0 %v2278
    %3390 = vmatprep.subr.mxu0 %v2283
    %3391 = vmatpush1.msra.mxu0 %v2282
    %3392 = vmatprep.subr.mxu0 %v2287
    %3393 = vmatpush1.msra.mxu0 %v2286
    %3394 = vmatprep.subr.mxu0 %v2291
    %3395 = vmatpush1.msra.mxu0 %v2290
    %3396 = vmatprep.subr.mxu0 %v2295
    %3397 = vmatpush1.msra.mxu0 %v2294
    %3398 = vmatprep.subr.mxu0 %v2299
    %3399 = vmatpush1.msra.mxu0 %v2298
    %3400 = vmatprep.subr.mxu0 %v2303
    %3401 = vmatpush1.msra.mxu0 %v2302
    %3402 = vmatprep.subr.mxu0 %v2307
    %3403 = vmatpush1.msra.mxu0 %v2306
    %3404 = vmatprep.subr.mxu0 %v2311
    %3405 = vmatpush1.msra.mxu0 %v2310
    %3406 = vmatprep.subr.mxu0 %v2315
    %3407 = vmatpush1.msra.mxu0 %v2314
    %3408 = vmatprep.subr.mxu0 %v2319
    %3409 = vmatpush1.msra.mxu0 %v2318
    %3410 = vmatprep.subr.mxu0 %v2323
    %3411 = vmatpush1.msra.mxu0 %v2322
    %3412 = vmatprep.subr.mxu0 %v2327
    %3413 = vmatpush1.msra.mxu0 %v2326
    %3414 = vmatprep.subr.mxu0 0.0
    %3415 = vmatpush1.msra.mxu0 0.0
    %3416 = vmatprep.subr.mxu0 0.0
    %3417 = vmatpush1.msra.mxu0 0.0
    %3418 = vmatprep.subr.mxu0 0.0
    %3419 = vmatpush1.msra.mxu0 0.0
    %3420 = vmatprep.subr.mxu0 0.0
    %3421 = vmatpush1.msra.mxu0 0.0
    %3422 = vmatprep.subr.mxu0 0.0
    %3423 = vmatpush1.msra.mxu0 0.0
    %3424 = vmatprep.subr.mxu0 0.0
    %3425 = vmatpush1.msra.mxu0 0.0
    %3426 = vmatprep.subr.mxu0 0.0
    %3427 = vmatpush1.msra.mxu0 0.0
    %3428 = vmatprep.subr.mxu0 0.0
    %3429 = vmatpush1.msra.mxu0 0.0
    %3430 = vmatprep.subr.mxu0 0.0
    %3431 = vmatpush1.msra.mxu0 0.0
    %3432 = vmatprep.subr.mxu0 0.0
    %3433 = vmatpush1.msra.mxu0 0.0
    %3434 = vmatprep.subr.mxu0 0.0
    %3435 = vmatpush1.msra.mxu0 0.0
    %3436 = vmatprep.subr.mxu0 0.0
    %3437 = vmatpush1.msra.mxu0 0.0
    %3438 = vmatprep.subr.mxu0 0.0
    %3439 = vmatpush1.msra.mxu0 0.0
    %3440 = vmatprep.subr.mxu0 0.0
    %3441 = vmatpush1.msra.mxu0 0.0
    %3442 = vmatprep.subr.mxu0 0.0
    %3443 = vmatpush1.msra.mxu0 0.0
    %3444 = vmatprep.subr.mxu0 0.0
    %3445 = vmatpush1.msra.mxu0 0.0
    %3446 = vmatprep.mubr.f32.mxu0 0.0
    %3447 = vmatmul.mubr.f32.gmra.mrb[0].mxu0 %v3377
    %v3448 = vpop.f32.mrb[0].mxu0
    %v3449 = vadd.f32 0.0, %v3448
    %v3450 = vpop.f32.mrb[0].mxu0
    %v3451 = vadd.f32 0.0, %v3450
    %3452 = vdwg.mxu0
    %3453 = vmatprep.subr.mxu0 %v2269
    %3454 = vmatpush1.msra.mxu0 %v2268
    %3455 = vmatprep.subr.mxu0 %v2273
    %3456 = vmatpush1.msra.mxu0 %v2272
    %3457 = vmatprep.subr.mxu0 %v2277
    %3458 = vmatpush1.msra.mxu0 %v2276
    %3459 = vmatprep.subr.mxu0 %v2281
    %3460 = vmatpush1.msra.mxu0 %v2280
    %3461 = vmatprep.subr.mxu0 %v2285
    %3462 = vmatpush1.msra.mxu0 %v2284
    %3463 = vmatprep.subr.mxu0 %v2289
    %3464 = vmatpush1.msra.mxu0 %v2288
    %3465 = vmatprep.subr.mxu0 %v2293
    %3466 = vmatpush1.msra.mxu0 %v2292
    %3467 = vmatprep.subr.mxu0 %v2297
    %3468 = vmatpush1.msra.mxu0 %v2296
    %3469 = vmatprep.subr.mxu0 %v2301
    %3470 = vmatpush1.msra.mxu0 %v2300
    %3471 = vmatprep.subr.mxu0 %v2305
    %3472 = vmatpush1.msra.mxu0 %v2304
    %3473 = vmatprep.subr.mxu0 %v2309
    %3474 = vmatpush1.msra.mxu0 %v2308
    %3475 = vmatprep.subr.mxu0 %v2313
    %3476 = vmatpush1.msra.mxu0 %v2312
    %3477 = vmatprep.subr.mxu0 %v2317
    %3478 = vmatpush1.msra.mxu0 %v2316
    %3479 = vmatprep.subr.mxu0 %v2321
    %3480 = vmatpush1.msra.mxu0 %v2320
    %3481 = vmatprep.subr.mxu0 %v2325
    %3482 = vmatpush1.msra.mxu0 %v2324
    %3483 = vmatprep.subr.mxu0 %v2329
    %3484 = vmatpush1.msra.mxu0 %v2328
    %3485 = vmatprep.subr.mxu0 0.0
    %3486 = vmatpush1.msra.mxu0 0.0
    %3487 = vmatprep.subr.mxu0 0.0
    %3488 = vmatpush1.msra.mxu0 0.0
    %3489 = vmatprep.subr.mxu0 0.0
    %3490 = vmatpush1.msra.mxu0 0.0
    %3491 = vmatprep.subr.mxu0 0.0
    %3492 = vmatpush1.msra.mxu0 0.0
    %3493 = vmatprep.subr.mxu0 0.0
    %3494 = vmatpush1.msra.mxu0 0.0
    %3495 = vmatprep.subr.mxu0 0.0
    %3496 = vmatpush1.msra.mxu0 0.0
    %3497 = vmatprep.subr.mxu0 0.0
    %3498 = vmatpush1.msra.mxu0 0.0
    %3499 = vmatprep.subr.mxu0 0.0
    %3500 = vmatpush1.msra.mxu0 0.0
    %3501 = vmatprep.subr.mxu0 0.0
    %3502 = vmatpush1.msra.mxu0 0.0
    %3503 = vmatprep.subr.mxu0 0.0
    %3504 = vmatpush1.msra.mxu0 0.0
    %3505 = vmatprep.subr.mxu0 0.0
    %3506 = vmatpush1.msra.mxu0 0.0
    %3507 = vmatprep.subr.mxu0 0.0
    %3508 = vmatpush1.msra.mxu0 0.0
    %3509 = vmatprep.subr.mxu0 0.0
    %3510 = vmatpush1.msra.mxu0 0.0
    %3511 = vmatprep.subr.mxu0 0.0
    %3512 = vmatpush1.msra.mxu0 0.0
    %3513 = vmatprep.subr.mxu0 0.0
    %3514 = vmatpush1.msra.mxu0 0.0
    %3515 = vmatprep.subr.mxu0 0.0
    %3516 = vmatpush1.msra.mxu0 0.0
    %3517 = vmatprep.mubr.f32.mxu0 0.0
    %3518 = vmatmul.mubr.f32.gmra.mrb[0].mxu0 %v3377
    %v3519 = vpop.f32.mrb[0].mxu0
    %v3520 = vadd.f32 0.0, %v3519
    %v3521 = vpop.f32.mrb[0].mxu0
    %v3522 = vadd.f32 0.0, %v3521
    %3523 = vdwg.mxu0
    %v3524 = vadd.f32 %v3378, %v3449
    %v3525 = vadd.f32 %v3379, %v3451
    %v3526 = vadd.f32 %v3380, %v3520
    %v3527 = vadd.f32 %v3381, %v3522
    %v3528 = vxor.u32 %v3524, 2147483648
    %v3529 = vmul.f32 %v3528, 1.442695
    %v3530 = vpow.pop %v3529
    %v3531 = vadd.f32 %v3530, 1.0
    %v3532 = vrcp.pop %v3531
    %v3533 = vmul.f32 1.0, %v3532
    %v3534 = vxor.u32 %v3525, 2147483648
    %v3535 = vmul.f32 %v3534, 1.442695
    %v3536 = vpow.pop %v3535
    %v3537 = vadd.f32 %v3536, 1.0
    %v3538 = vrcp.pop %v3537
    %v3539 = vmul.f32 1.0, %v3538
    %v3540 = vtanh.pop %v3526
    %v3541 = vxor.u32 %v3527, 2147483648
    %v3542 = vmul.f32 %v3541, 1.442695
    %v3543 = vpow.pop %v3542
    %v3544 = vadd.f32 %v3543, 1.0
    %v3545 = vrcp.pop %v3544
    %v3546 = vmul.f32 1.0, %v3545
    %v3547 = vmul.f32 %v3539, %v3375
    %v3548 = vmul.f32 %v3533, %v3540
    %v3549 = vadd.f32 %v3547, %v3548
    %v3550 = vtanh.pop %v3549
    %v3551 = vmul.f32 %v3546, %v3550
    %v3552 = vld [vmem:[%s1732] sm:$0xff]
    %v3553 = vld [vmem:[%s1732 + $0x8] sm:$0xff]
    %v3554 = vld [vmem:[%s1732 + $0x10] sm:$0xff]
    %v3555 = vld [vmem:[%s1732 + $0x18] sm:$0xff]
    %3556 = vmatprep.subr.mxu0 %v2267
    %3557 = vmatpush1.msra.mxu0 %v2266
    %3558 = vmatprep.subr.mxu0 %v2271
    %3559 = vmatpush1.msra.mxu0 %v2270
    %3560 = vmatprep.subr.mxu0 %v2275
    %3561 = vmatpush1.msra.mxu0 %v2274
    %3562 = vmatprep.subr.mxu0 %v2279
    %3563 = vmatpush1.msra.mxu0 %v2278
    %3564 = vmatprep.subr.mxu0 %v2283
    %3565 = vmatpush1.msra.mxu0 %v2282
    %3566 = vmatprep.subr.mxu0 %v2287
    %3567 = vmatpush1.msra.mxu0 %v2286
    %3568 = vmatprep.subr.mxu0 %v2291
    %3569 = vmatpush1.msra.mxu0 %v2290
    %3570 = vmatprep.subr.mxu0 %v2295
    %3571 = vmatpush1.msra.mxu0 %v2294
    %3572 = vmatprep.subr.mxu0 %v2299
    %3573 = vmatpush1.msra.mxu0 %v2298
    %3574 = vmatprep.subr.mxu0 %v2303
    %3575 = vmatpush1.msra.mxu0 %v2302
    %3576 = vmatprep.subr.mxu0 %v2307
    %3577 = vmatpush1.msra.mxu0 %v2306
    %3578 = vmatprep.subr.mxu0 %v2311
    %3579 = vmatpush1.msra.mxu0 %v2310
    %3580 = vmatprep.subr.mxu0 %v2315
    %3581 = vmatpush1.msra.mxu0 %v2314
    %3582 = vmatprep.subr.mxu0 %v2319
    %3583 = vmatpush1.msra.mxu0 %v2318
    %3584 = vmatprep.subr.mxu0 %v2323
    %3585 = vmatpush1.msra.mxu0 %v2322
    %3586 = vmatprep.subr.mxu0 %v2327
    %3587 = vmatpush1.msra.mxu0 %v2326
    %3588 = vmatprep.subr.mxu0 0.0
    %3589 = vmatpush1.msra.mxu0 0.0
    %3590 = vmatprep.subr.mxu0 0.0
    %3591 = vmatpush1.msra.mxu0 0.0
    %3592 = vmatprep.subr.mxu0 0.0
    %3593 = vmatpush1.msra.mxu0 0.0
    %3594 = vmatprep.subr.mxu0 0.0
    %3595 = vmatpush1.msra.mxu0 0.0
    %3596 = vmatprep.subr.mxu0 0.0
    %3597 = vmatpush1.msra.mxu0 0.0
    %3598 = vmatprep.subr.mxu0 0.0
    %3599 = vmatpush1.msra.mxu0 0.0
    %3600 = vmatprep.subr.mxu0 0.0
    %3601 = vmatpush1.msra.mxu0 0.0
    %3602 = vmatprep.subr.mxu0 0.0
    %3603 = vmatpush1.msra.mxu0 0.0
    %3604 = vmatprep.subr.mxu0 0.0
    %3605 = vmatpush1.msra.mxu0 0.0
    %3606 = vmatprep.subr.mxu0 0.0
    %3607 = vmatpush1.msra.mxu0 0.0
    %3608 = vmatprep.subr.mxu0 0.0
    %3609 = vmatpush1.msra.mxu0 0.0
    %3610 = vmatprep.subr.mxu0 0.0
    %3611 = vmatpush1.msra.mxu0 0.0
    %3612 = vmatprep.subr.mxu0 0.0
    %3613 = vmatpush1.msra.mxu0 0.0
    %3614 = vmatprep.subr.mxu0 0.0
    %3615 = vmatpush1.msra.mxu0 0.0
    %3616 = vmatprep.subr.mxu0 0.0
    %3617 = vmatpush1.msra.mxu0 0.0
    %3618 = vmatprep.subr.mxu0 0.0
    %3619 = vmatpush1.msra.mxu0 0.0
    %3620 = vmatprep.mubr.f32.mxu0 0.0
    %3621 = vmatmul.mubr.f32.gmra.mrb[0].mxu0 %v3551
    %v3622 = vpop.f32.mrb[0].mxu0
    %v3623 = vadd.f32 0.0, %v3622
    %v3624 = vpop.f32.mrb[0].mxu0
    %v3625 = vadd.f32 0.0, %v3624
    %3626 = vdwg.mxu0
    %3627 = vmatprep.subr.mxu0 %v2269
    %3628 = vmatpush1.msra.mxu0 %v2268
    %3629 = vmatprep.subr.mxu0 %v2273
    %3630 = vmatpush1.msra.mxu0 %v2272
    %3631 = vmatprep.subr.mxu0 %v2277
    %3632 = vmatpush1.msra.mxu0 %v2276
    %3633 = vmatprep.subr.mxu0 %v2281
    %3634 = vmatpush1.msra.mxu0 %v2280
    %3635 = vmatprep.subr.mxu0 %v2285
    %3636 = vmatpush1.msra.mxu0 %v2284
    %3637 = vmatprep.subr.mxu0 %v2289
    %3638 = vmatpush1.msra.mxu0 %v2288
    %3639 = vmatprep.subr.mxu0 %v2293
    %3640 = vmatpush1.msra.mxu0 %v2292
    %3641 = vmatprep.subr.mxu0 %v2297
    %3642 = vmatpush1.msra.mxu0 %v2296
    %3643 = vmatprep.subr.mxu0 %v2301
    %3644 = vmatpush1.msra.mxu0 %v2300
    %3645 = vmatprep.subr.mxu0 %v2305
    %3646 = vmatpush1.msra.mxu0 %v2304
    %3647 = vmatprep.subr.mxu0 %v2309
    %3648 = vmatpush1.msra.mxu0 %v2308
    %3649 = vmatprep.subr.mxu0 %v2313
    %3650 = vmatpush1.msra.mxu0 %v2312
    %3651 = vmatprep.subr.mxu0 %v2317
    %3652 = vmatpush1.msra.mxu0 %v2316
    %3653 = vmatprep.subr.mxu0 %v2321
    %3654 = vmatpush1.msra.mxu0 %v2320
    %3655 = vmatprep.subr.mxu0 %v2325
    %3656 = vmatpush1.msra.mxu0 %v2324
    %3657 = vmatprep.subr.mxu0 %v2329
    %3658 = vmatpush1.msra.mxu0 %v2328
    %3659 = vmatprep.subr.mxu0 0.0
    %3660 = vmatpush1.msra.mxu0 0.0
    %3661 = vmatprep.subr.mxu0 0.0
    %3662 = vmatpush1.msra.mxu0 0.0
    %3663 = vmatprep.subr.mxu0 0.0
    %3664 = vmatpush1.msra.mxu0 0.0
    %3665 = vmatprep.subr.mxu0 0.0
    %3666 = vmatpush1.msra.mxu0 0.0
    %3667 = vmatprep.subr.mxu0 0.0
    %3668 = vmatpush1.msra.mxu0 0.0
    %3669 = vmatprep.subr.mxu0 0.0
    %3670 = vmatpush1.msra.mxu0 0.0
    %3671 = vmatprep.subr.mxu0 0.0
    %3672 = vmatpush1.msra.mxu0 0.0
    %3673 = vmatprep.subr.mxu0 0.0
    %3674 = vmatpush1.msra.mxu0 0.0
    %3675 = vmatprep.subr.mxu0 0.0
    %3676 = vmatpush1.msra.mxu0 0.0
    %3677 = vmatprep.subr.mxu0 0.0
    %3678 = vmatpush1.msra.mxu0 0.0
    %3679 = vmatprep.subr.mxu0 0.0
    %3680 = vmatpush1.msra.mxu0 0.0
    %3681 = vmatprep.subr.mxu0 0.0
    %3682 = vmatpush1.msra.mxu0 0.0
    %3683 = vmatprep.subr.mxu0 0.0
    %3684 = vmatpush1.msra.mxu0 0.0
    %3685 = vmatprep.subr.mxu0 0.0
    %3686 = vmatpush1.msra.mxu0 0.0
    %3687 = vmatprep.subr.mxu0 0.0
    %3688 = vmatpush1.msra.mxu0 0.0
    %3689 = vmatprep.subr.mxu0 0.0
    %3690 = vmatpush1.msra.mxu0 0.0
    %3691 = vmatprep.mubr.f32.mxu0 0.0
    %3692 = vmatmul.mubr.f32.gmra.mrb[0].mxu0 %v3551
    %v3693 = vpop.f32.mrb[0].mxu0
    %v3694 = vadd.f32 0.0, %v3693
    %v3695 = vpop.f32.mrb[0].mxu0
    %v3696 = vadd.f32 0.0, %v3695
    %3697 = vdwg.mxu0
    %v3698 = vadd.f32 %v3552, %v3623
    %v3699 = vadd.f32 %v3553, %v3625
    %v3700 = vadd.f32 %v3554, %v3694
    %v3701 = vadd.f32 %v3555, %v3696
    %v3702 = vxor.u32 %v3698, 2147483648
    %v3703 = vmul.f32 %v3702, 1.442695
    %v3704 = vpow.pop %v3703
    %v3705 = vadd.f32 %v3704, 1.0
    %v3706 = vrcp.pop %v3705
    %v3707 = vmul.f32 1.0, %v3706
    %v3708 = vxor.u32 %v3699, 2147483648
    %v3709 = vmul.f32 %v3708, 1.442695
    %v3710 = vpow.pop %v3709
    %v3711 = vadd.f32 %v3710, 1.0
    %v3712 = vrcp.pop %v3711
    %v3713 = vmul.f32 1.0, %v3712
    %v3714 = vtanh.pop %v3700
    %v3715 = vxor.u32 %v3701, 2147483648
    %v3716 = vmul.f32 %v3715, 1.442695
    %v3717 = vpow.pop %v3716
    %v3718 = vadd.f32 %v3717, 1.0
    %v3719 = vrcp.pop %v3718
    %v3720 = vmul.f32 1.0, %v3719
    %v3721 = vmul.f32 %v3713, %v3549
    %v3722 = vmul.f32 %v3707, %v3714
    %v3723 = vadd.f32 %v3721, %v3722
    %v3724 = vtanh.pop %v3723
    %v3725 = vmul.f32 %v3720, %v3724
    %s3726 = scalar_lea.vmem %s9, 8
    %3727 = vst [vmem:[%s3726] sm:$0xff] %v3725
    %s3728 = scalar_lea.vmem %s10, 8
    %3729 = vst [vmem:[%s3728] sm:$0xff] %v3723
    %v3730 = vld [vmem:[%s6] sm:$0xff]
    %v3731 = vld [vmem:[%s6 + $0x8] sm:$0xff]
    %v3732 = vld [vmem:[%s6 + $0x10] sm:$0xff]
    %v3733 = vld [vmem:[%s6 + $0x18] sm:$0xff]
    %v3734 = vld [vmem:[%s6 + $0x20] sm:$0xff]
    %v3735 = vld [vmem:[%s6 + $0x28] sm:$0xff]
    %v3736 = vld [vmem:[%s6 + $0x30] sm:$0xff]
    %v3737 = vld [vmem:[%s6 + $0x38] sm:$0xff]
    %v3738 = vld [vmem:[%s6 + $0x40] sm:$0xff]
    %v3739 = vld [vmem:[%s6 + $0x48] sm:$0xff]
    %v3740 = vld [vmem:[%s6 + $0x50] sm:$0xff]
    %v3741 = vld [vmem:[%s6 + $0x58] sm:$0xff]
    %v3742 = vld [vmem:[%s6 + $0x60] sm:$0xff]
    %v3743 = vld [vmem:[%s6 + $0x68] sm:$0xff]
    %v3744 = vld [vmem:[%s6 + $0x70] sm:$0xff]
    %v3745 = vld [vmem:[%s6 + $0x78] sm:$0xff]
    %v3746 = vld [vmem:[%s7] sm:$0x1]
    %v3748 = vlaneseq
    %v3749 = vshrl.u32 %v3748, 7
    %v3750 = vsub.s32 0, %v3749
    %v3751 = vrot.slane %v3746, %v3750
    %3753 = vmatprep.subr.mxu0 0.0
    %3754 = vmatpush1.msra.mxu0 %v3730
    %3755 = vmatprep.subr.mxu0 0.0
    %3756 = vmatpush1.msra.mxu0 %v3731
    %3757 = vmatprep.subr.mxu0 0.0
    %3758 = vmatpush1.msra.mxu0 %v3732
    %3759 = vmatprep.subr.mxu0 0.0
    %3760 = vmatpush1.msra.mxu0 %v3733
    %3761 = vmatprep.subr.mxu0 0.0
    %3762 = vmatpush1.msra.mxu0 %v3734
    %3763 = vmatprep.subr.mxu0 0.0
    %3764 = vmatpush1.msra.mxu0 %v3735
    %3765 = vmatprep.subr.mxu0 0.0
    %3766 = vmatpush1.msra.mxu0 %v3736
    %3767 = vmatprep.subr.mxu0 0.0
    %3768 = vmatpush1.msra.mxu0 %v3737
    %3769 = vmatprep.subr.mxu0 0.0
    %3770 = vmatpush1.msra.mxu0 %v3738
    %3771 = vmatprep.subr.mxu0 0.0
    %3772 = vmatpush1.msra.mxu0 %v3739
    %3773 = vmatprep.subr.mxu0 0.0
    %3774 = vmatpush1.msra.mxu0 %v3740
    %3775 = vmatprep.subr.mxu0 0.0
    %3776 = vmatpush1.msra.mxu0 %v3741
    %3777 = vmatprep.subr.mxu0 0.0
    %3778 = vmatpush1.msra.mxu0 %v3742
    %3779 = vmatprep.subr.mxu0 0.0
    %3780 = vmatpush1.msra.mxu0 %v3743
    %3781 = vmatprep.subr.mxu0 0.0
    %3782 = vmatpush1.msra.mxu0 %v3744
    %3783 = vmatprep.subr.mxu0 0.0
    %3784 = vmatpush1.msra.mxu0 %v3745
    %3785 = vmatprep.subr.mxu0 0.0
    %3786 = vmatpush1.msra.mxu0 0.0
    %3787 = vmatprep.subr.mxu0 0.0
    %3788 = vmatpush1.msra.mxu0 0.0
    %3789 = vmatprep.subr.mxu0 0.0
    %3790 = vmatpush1.msra.mxu0 0.0
    %3791 = vmatprep.subr.mxu0 0.0
    %3792 = vmatpush1.msra.mxu0 0.0
    %3793 = vmatprep.subr.mxu0 0.0
    %3794 = vmatpush1.msra.mxu0 0.0
    %3795 = vmatprep.subr.mxu0 0.0
    %3796 = vmatpush1.msra.mxu0 0.0
    %3797 = vmatprep.subr.mxu0 0.0
    %3798 = vmatpush1.msra.mxu0 0.0
    %3799 = vmatprep.subr.mxu0 0.0
    %3800 = vmatpush1.msra.mxu0 0.0
    %3801 = vmatprep.subr.mxu0 0.0
    %3802 = vmatpush1.msra.mxu0 0.0
    %3803 = vmatprep.subr.mxu0 0.0
    %3804 = vmatpush1.msra.mxu0 0.0
    %3805 = vmatprep.subr.mxu0 0.0
    %3806 = vmatpush1.msra.mxu0 0.0
    %3807 = vmatprep.subr.mxu0 0.0
    %3808 = vmatpush1.msra.mxu0 0.0
    %3809 = vmatprep.subr.mxu0 0.0
    %3810 = vmatpush1.msra.mxu0 0.0
    %3811 = vmatprep.subr.mxu0 0.0
    %3812 = vmatpush1.msra.mxu0 0.0
    %3813 = vmatprep.subr.mxu0 0.0
    %3814 = vmatpush1.msra.mxu0 0.0
    %3815 = vmatprep.subr.mxu0 0.0
    %3816 = vmatpush1.msra.mxu0 0.0
    %3817 = vmatprep.mubr.f32.mxu0 0.0
    %3818 = vmatmul.mubr.f32.gmra.mrb[0].mxu0 %v3725
    %v3819 = vpop.f32.mrb[0].mxu0
    %v3820 = vadd.f32 %v3751, %v3819
    %v3821 = vpop.f32.mrb[0].mxu0
    %3822 = vdwg.mxu0
    %3823 = vst [vmem:[%s8] sm:$0xff] %v3820
    // Predicated region
    $region42: #{forward.1} parent=1 // pred_check
      _
    $region43: #{forward.1} parent=1 // pred_check_branch
      %3825 = sbr.rel (0) target = $region45
    $region44: #{forward.1} parent=1 // pred_region
      _
    $region45: #{forward.1} parent=1 // pred_fallthru
      _
    // Predicated region
    $region46: #{forward.1} parent=1 // pred_check
      _
    $region47: #{forward.1} parent=1 // pred_check_branch
      %3827 = sbr.rel (0) target = $region49
    $region48: #{forward.1} parent=1 // pred_region
      _
    $region49: #{forward.1} parent=1 // pred_fallthru
      _
    // Predicated region
    $region50: #{forward.1} parent=1 // pred_check
      _
    $region51: #{forward.1} parent=1 // pred_check_branch
      %3829 = sbr.rel (0) target = $region53
    $region52: #{forward.1} parent=1 // pred_region
      _
    $region53: #{forward.1} parent=1 // pred_fallthru
      _
    // Predicated region
    $region54: #{forward.1} parent=1 // pred_check
      _
    $region55: #{forward.1} parent=1 // pred_check_branch
      %3831 = sbr.rel (0) target = $region57
    $region56: #{forward.1} parent=1 // pred_region
      _
    $region57: #{forward.1} parent=1 // pred_fallthru
      _
    // Predicated region
    $region58: #{forward.1} parent=1 // pred_check
      _
    $region59: #{forward.1} parent=1 // pred_check_branch
      %3833 = sbr.rel (0) target = $region61
    $region60: #{forward.1} parent=1 // pred_region
      _
    $region61: #{forward.1} parent=1 // pred_fallthru
      _
    // Predicated region
    $region62: #{forward.1} parent=1 // pred_check
      _
    $region63: #{forward.1} parent=1 // pred_check_branch
      %3835 = sbr.rel (0) target = $region65
    $region64: #{forward.1} parent=1 // pred_region
      _
    $region65: #{forward.1} parent=1 // pred_fallthru
      _
    %3836 = vsyncpa [#allocation5], 1
    %3837 = vsyncpa [#allocation7], 1

</llo_original>
